<compile_context>
chip_gen: v7x
topology: tpu7x:2x2x1
jax: 0.10.0
libtpu: 0.0.40
codegen_flags: <defaults>
</compile_context>

<pallas_src>
import functools

import jax
import jax.numpy as jnp
from jax import lax
from jax.experimental import pallas as pl
from jax.experimental.pallas import tpu as pltpu

LANE = 128          # TPU lane width: matmul-N / store width is padded to this
NEG_SLOPE = 0.2     # LeakyReLU slope used by the module


def _round_up(x, m):
    return (x + m - 1) // m * m


# --------------------------- Pallas kernels ---------------------------------

def _conv1_kernel(x_ref, w_ref, o_ref, *, offs, rows, wp, wo, neg_slope):
    """2x2/s1 conv (space-to-depth form of the 4x4/s2 conv) + fused LeakyReLU.

    x_ref : (1, R_in, 4*Cin)   flattened parity-stacked padded image (VMEM resident)
    w_ref : (4, 4*Cin, Cout_p) per-tap weights (resident)
    o_ref : (1, rows, Cout_p)  rows = Ho*Wp, laid out so it doubles as the interior
                               of conv2's zero-padded input image.
    """
    # One lossless upcast so the overlapping tap slices below stay on the
    # well-supported unpacked 32-bit relayout path; the casts ride free on the
    # VPU under the MXU-bound matmuls.  MXU still runs bf16 x bf16 -> f32.
    xv = x_ref[0].astype(jnp.float32)
    mxu_dtype = w_ref.dtype
    acc = None
    for t, off in enumerate(offs):                      # static, unrolled: 4 taps
        lhs = xv[off:off + rows, :].astype(mxu_dtype)
        d = jnp.dot(lhs, w_ref[t], preferred_element_type=jnp.float32)
        acc = d if acc is None else acc + d
    y = jnp.where(acc >= 0, acc, neg_slope * acc)       # f32 epilogue
    # Zero the wrap columns (flattened width Wp = Wo + 2) so this output is
    # exactly the interior of the zero-padded conv2 input: the only glue left
    # between the two kernels is a single jnp.pad.
    r = lax.broadcasted_iota(jnp.int32, y.shape, 0)
    y = jnp.where((r % wp) < wo, y, 0.0)
    o_ref[0] = y.astype(o_ref.dtype)                    # cast only at the store


def _conv2_fused_kernel(g_ref, y_ref, w_ref, s_ref, ws_ref, bs_ref, o_ref, *,
                        offs, rows, neg_slope):
    """Fused conv3x3/s1 + LeakyReLU residual, 1x1 projection(+bias) of the
    pre-pooled shortcut, and the final  shortcut + gamma * residual  combine.

    g_ref  : (1,) gamma in SMEM
    y_ref  : (1, R_in, C_p)   flattened zero-padded conv1 output (resident)
    w_ref  : (9, C_p, C_p)    per-tap conv2 weights (resident)
    s_ref  : (1, rows, Cin)   2x2 average-pooled input x (pool/1x1-conv commute)
    ws_ref : (Cin, C_p), bs_ref : (1, C_p)  shortcut projection weights / bias
    o_ref  : (1, rows, C_p)   f32 output
    """
    mxu_dtype = w_ref.dtype
    yv = y_ref[0].astype(jnp.float32)                   # see note in _conv1_kernel
    acc = None
    for t, off in enumerate(offs):                      # static, unrolled: 9 taps
        lhs = yv[off:off + rows, :].astype(mxu_dtype)
        d = jnp.dot(lhs, w_ref[t], preferred_element_type=jnp.float32)
        acc = d if acc is None else acc + d
    res = jnp.where(acc >= 0, acc, neg_slope * acc)     # f32 epilogue
    sc = jnp.dot(s_ref[0], ws_ref[...],
                 preferred_element_type=jnp.float32) + bs_ref[...]
    o_ref[0] = (sc + g_ref[0] * res).astype(o_ref.dtype)


# --------------------------- pallas_call wrappers ----------------------------

def conv1_leaky(s2d_flat, w_taps, *, rows, offs, wp, wo):
    n, r_in, k = s2d_flat.shape
    taps, _, cout_p = w_taps.shape
    # NOTE(perf): one grid step per image; for large H*W add a row-tile axis and
    # on v7x (64 MiB VMEM) tile K/N too; on v6e raise vmem_limit_bytes instead.
    return pl.pallas_call(
        functools.partial(_conv1_kernel, offs=offs, rows=rows, wp=wp, wo=wo,
                          neg_slope=NEG_SLOPE),
        out_shape=jax.ShapeDtypeStruct((n, rows, cout_p), s2d_flat.dtype),
        grid=(n,),
        in_specs=[pl.BlockSpec((1, r_in, k), lambda b: (b, 0, 0)),
                  pl.BlockSpec((taps, k, cout_p), lambda b: (0, 0, 0))],
        out_specs=pl.BlockSpec((1, rows, cout_p), lambda b: (b, 0, 0)),
        compiler_params=pltpu.CompilerParams(
            dimension_semantics=("parallel",)),
    )(s2d_flat, w_taps)


def conv2_shortcut_combine(gamma, y1pf, w_taps, s_pooled, w_s, b_s, *, rows, offs):
    n, r_in, cout_p = y1pf.shape
    taps = w_taps.shape[0]
    cin = s_pooled.shape[-1]
    return pl.pallas_call(
        functools.partial(_conv2_fused_kernel, offs=offs, rows=rows,
                          neg_slope=NEG_SLOPE),
        out_shape=jax.ShapeDtypeStruct((n, rows, cout_p), jnp.float32),
        grid=(n,),
        in_specs=[pl.BlockSpec(memory_space=pltpu.MemorySpace.SMEM),   # gamma (1,)
                  pl.BlockSpec((1, r_in, cout_p), lambda b: (b, 0, 0)),
                  pl.BlockSpec((taps, cout_p, cout_p), lambda b: (0, 0, 0)),
                  pl.BlockSpec((1, rows, cin), lambda b: (b, 0, 0)),
                  pl.BlockSpec((cin, cout_p), lambda b: (0, 0)),
                  pl.BlockSpec((1, cout_p), lambda b: (0, 0))],
        out_specs=pl.BlockSpec((1, rows, cout_p), lambda b: (b, 0, 0)),
        compiler_params=pltpu.CompilerParams(
            dimension_semantics=("parallel",)),
    )(gamma, y1pf, w_taps, s_pooled, w_s, b_s)


# --------------------------- JAX glue (data movement only) -------------------

def init_res_d(key, fin, fout):
    k1, k2, k3, k4 = jax.random.split(key, 4)
    scale = 0.1
    return dict(
        w1=jax.random.normal(k1, (4, 4, fin, fout), jnp.float32) * scale,   # conv_r[0], HWIO
        w2=jax.random.normal(k2, (3, 3, fout, fout), jnp.float32) * scale,  # conv_r[2], HWIO
        ws=jax.random.normal(k3, (1, 1, fin, fout), jnp.float32) * scale,   # conv_s,    HWIO
        bs=jax.random.normal(k4, (fout,), jnp.float32) * scale,             # conv_s bias
        # nn.Parameter(torch.zeros(1)) in the module; nonzero so the residual
        # path is actually exercised in the test.
        gamma=jnp.array([0.3], jnp.float32),
    )


def res_d_forward(params, x_nchw, *, compute_dtype=jnp.bfloat16, downsample=True):
    # TODO(synk): downsample=False mismatches shapes in the original module too;
    # only the valid downsample=True path is built.
    assert downsample, "only shape-checks with downsample=True"
    x = jnp.transpose(x_nchw, (0, 2, 3, 1)).astype(jnp.float32)   # NCHW -> NHWC
    n, h, w, fin = x.shape
    assert h % 2 == 0 and w % 2 == 0  # odd sizes also mismatch in the torch module
    fout = params["w1"].shape[-1]
    fout_p = _round_up(fout, LANE)    # lane-dense matmul-N / store width
    ho, wo = h // 2, w // 2
    wp = wo + 2                       # padded flattened width shared by both conv layouts

    # ---- conv1: 4x4/s2 conv == 2x2/s1 conv over a space-to-depth parity stack ----
    # (pure permutation of the zero-padded input: zero byte blowup, unlike im2col)
    xp = jnp.pad(x, ((0, 0), (1, 1), (1, 1), (0, 0)))             # (n, h+2, w+2, fin)
    gh, gw = (h + 2) // 2, (w + 2) // 2                           # parity grid
    s2d = xp.reshape(n, gh, 2, gw, 2, fin).transpose(0, 1, 3, 2, 4, 5)
    s2d = s2d.reshape(n, gh, gw, 4 * fin)
    s2d = jnp.pad(s2d, ((0, 0), (0, 0), (0, wp - gw), (0, 0)))    # width -> wp
    offs1 = (0, 1, wp, wp + 1)                                    # 2x2 taps, flat-row offsets
    rows1 = ho * wp
    r_in1 = _round_up(offs1[-1] + rows1, 8)
    sf = s2d.reshape(n, gh * wp, 4 * fin)
    sf = jnp.pad(sf, ((0, 0), (0, r_in1 - gh * wp), (0, 0))).astype(compute_dtype)

    w1t = params["w1"].reshape(2, 2, 2, 2, fin, fout)             # (a, p, b, q, cin, cout)
    w1t = w1t.transpose(0, 2, 1, 3, 4, 5).reshape(4, 4 * fin, fout)
    w1t = jnp.pad(w1t, ((0, 0), (0, 0), (0, fout_p - fout))).astype(compute_dtype)

    y1 = conv1_leaky(sf, w1t, rows=rows1, offs=offs1, wp=wp, wo=wo)  # (n, ho*wp, fout_p) bf16

    # ---- conv2 + shortcut projection + combine: one fused kernel ----
    offs2 = tuple(di * wp + dj for di in range(3) for dj in range(3))
    rows2 = ho * wp
    r_in2 = _round_up(offs2[-1] + rows2, 8)
    # conv1 already produced the zero-masked interior; one pad builds the full
    # flattened zero-padded (ho+2, wp) image plus tap-overflow rows.
    y1pf = jnp.pad(y1, ((0, 0), (wp + 1, r_in2 - rows1 - (wp + 1)), (0, 0)))

    w2t = params["w2"].reshape(9, fout, fout)
    w2t = jnp.pad(w2t, ((0, 0), (0, fout_p - fout), (0, fout_p - fout))).astype(compute_dtype)

    # shortcut: pool FIRST (avg-pool commutes with the 1x1 conv) -> 4x fewer rows;
    # the projection + bias ride inside the fused kernel's MXU.
    xpool = x.reshape(n, ho, 2, wo, 2, fin).mean(axis=(2, 4))     # f32 pooling
    spf = jnp.pad(xpool, ((0, 0), (0, 0), (0, wp - wo), (0, 0)))
    spf = spf.reshape(n, rows2, fin).astype(compute_dtype)

    if fin != fout:                      # learned_shortcut, as in the module
        w_s = params["ws"].reshape(fin, fout)
        b_s = params["bs"]
    else:                                # identity shortcut folded as identity projection
        w_s = jnp.eye(fin, dtype=jnp.float32)
        b_s = jnp.zeros((fout,), jnp.float32)
    w_s = jnp.pad(w_s, ((0, 0), (0, fout_p - fout))).astype(compute_dtype)
    b_s = jnp.pad(b_s, (0, fout_p - fout)).reshape(1, fout_p).astype(jnp.float32)
    gamma = params["gamma"].reshape(1).astype(jnp.float32)

    out = conv2_shortcut_combine(gamma, y1pf, w2t, spf, w_s, b_s,
                                 rows=rows2, offs=offs2)          # (n, rows2, fout_p) f32
    out = out.reshape(n, ho, wp, fout_p)[:, :, :wo, :fout]
    return jnp.transpose(out, (0, 3, 1, 2))                       # NHWC -> NCHW


# --------------------------- reference (pure JAX, f32) ------------------------

def ref_forward(params, x_nchw):
    dn = ("NHWC", "HWIO", "NHWC")
    x = jnp.transpose(x_nchw, (0, 2, 3, 1))
    fin = x.shape[-1]
    fout = params["w1"].shape[-1]
    y = lax.conv_general_dilated(x, params["w1"], (2, 2), ((1, 1), (1, 1)),
                                 dimension_numbers=dn)
    y = jnp.where(y >= 0, y, 0.2 * y)
    y = lax.conv_general_dilated(y, params["w2"], (1, 1), ((1, 1), (1, 1)),
                                 dimension_numbers=dn)
    y = jnp.where(y >= 0, y, 0.2 * y)
    if fin != fout:
        s = lax.conv_general_dilated(x, params["ws"], (1, 1), ((0, 0), (0, 0)),
                                     dimension_numbers=dn) + params["bs"]
    else:
        s = x
    nb, hh, ww, cc = s.shape
    s = s.reshape(nb, hh // 2, 2, ww // 2, 2, cc).mean(axis=(2, 4))
    out = s + params["gamma"][0] * y
    return jnp.transpose(out, (0, 3, 1, 2))


# --------------------------- main ---------------------------------------------

if __name__ == "__main__":
    key = jax.random.PRNGKey(0)
    kx, kp = jax.random.split(key)

    N, FIN, FOUT, H, W = 2, 4, 8, 16, 16
    x = jax.random.normal(kx, (N, FIN, H, W), jnp.float32)
    params = init_res_d(kp, FIN, FOUT)

    fwd_bf16 = jax.jit(functools.partial(res_d_forward, compute_dtype=jnp.bfloat16))
    fwd_f32 = jax.jit(functools.partial(res_d_forward, compute_dtype=jnp.float32))

    out = jax.block_until_ready(fwd_bf16(params, x))
    assert out.shape == (N, FOUT, H // 2, W // 2), out.shape

    ref = ref_forward(params, x)
    # bf16 operands / f32 accumulation: error budget is bf16 operand rounding.
    err_bf16 = float(jnp.max(jnp.abs(out - ref)))
    if err_bf16 > 2e-2:
        raise AssertionError(f"bf16 path mismatch vs reference: max abs err = {err_bf16}")

    # f32 compute path must match the XLA reference tightly (ordering noise only).
    out32 = jax.block_until_ready(fwd_f32(params, x))
    err_f32 = float(jnp.max(jnp.abs(out32 - ref)))
    if err_f32 > 1e-4:
        raise AssertionError(f"f32 path mismatch vs reference: max abs err = {err_f32}")

    print("KERNEL_OK")
</pallas_src>

<mosaic_0001>
module attributes {stable_mosaic.version = 11 : i64} {
  func.func @_conv1_kernel(%arg0: i32, %arg1: memref<1x96x16xbf16, #tpu.memory_space<vmem>>, %arg2: memref<4x16x128xbf16, #tpu.memory_space<vmem>>, %arg3: memref<1x80x128xbf16, #tpu.memory_space<vmem>>) attributes {dimension_semantics = [#tpu.dimension_semantics<parallel>], iteration_bounds = array<i64: 2>, scalar_prefetch = 0 : i64, scratch_operands = 0 : i64, tpu.core_type = #tpu.core_type<tc>, window_params = [{transform_indices = @transform_0, window_bounds = array<i64: 1, 96, 16>}, {pipeline_mode = #tpu.pipeline_mode<synchronous>, transform_indices = @transform_1, window_bounds = array<i64: 4, 16, 128>}, {transform_indices = @transform_2, window_bounds = array<i64: 1, 80, 128>}]} {
    %c0 = arith.constant 0 : index
    %c0_0 = arith.constant 0 : index
    %c0_1 = arith.constant 0 : index
    %0 = vector.load %arg1[%c0, %c0_0, %c0_1] : memref<1x96x16xbf16, #tpu.memory_space<vmem>>, vector<1x96x16xbf16>
    %1 = vector.shape_cast %0 : vector<1x96x16xbf16> to vector<96x16xbf16>
    %2 = arith.extf %1 : vector<96x16xbf16> to vector<96x16xf32>
    %3 = vector.extract_strided_slice %2 {offsets = [0, 0], sizes = [80, 16], strides = [1, 1]} : vector<96x16xf32> to vector<80x16xf32>
    %4 = arith.truncf %3 : vector<80x16xf32> to vector<80x16xbf16>
    %c0_2 = arith.constant 0 : index
    %c0_3 = arith.constant 0 : index
    %c0_4 = arith.constant 0 : index
    %5 = vector.load %arg2[%c0_2, %c0_3, %c0_4] : memref<4x16x128xbf16, #tpu.memory_space<vmem>>, vector<1x16x128xbf16>
    %6 = vector.shape_cast %5 : vector<1x16x128xbf16> to vector<16x128xbf16>
    %cst = arith.constant dense<0.000000e+00> : vector<80x128xf32>
    %7 = tpu.matmul %4, %6, %cst {dimension_numbers = #tpu.dot_dimension_numbers<[1], [0], [0], [1], [0, 0, 1, 1], [], []>} : vector<80x16xbf16>, vector<16x128xbf16>, vector<80x128xf32> -> vector<80x128xf32>
    %8 = vector.extract_strided_slice %2 {offsets = [1, 0], sizes = [80, 16], strides = [1, 1]} : vector<96x16xf32> to vector<80x16xf32>
    %9 = arith.truncf %8 : vector<80x16xf32> to vector<80x16xbf16>
    %c1 = arith.constant 1 : index
    %c0_5 = arith.constant 0 : index
    %c0_6 = arith.constant 0 : index
    %10 = vector.load %arg2[%c1, %c0_5, %c0_6] : memref<4x16x128xbf16, #tpu.memory_space<vmem>>, vector<1x16x128xbf16>
    %11 = vector.shape_cast %10 : vector<1x16x128xbf16> to vector<16x128xbf16>
    %cst_7 = arith.constant dense<0.000000e+00> : vector<80x128xf32>
    %12 = tpu.matmul %9, %11, %cst_7 {dimension_numbers = #tpu.dot_dimension_numbers<[1], [0], [0], [1], [0, 0, 1, 1], [], []>} : vector<80x16xbf16>, vector<16x128xbf16>, vector<80x128xf32> -> vector<80x128xf32>
    %13 = arith.addf %7, %12 : vector<80x128xf32>
    %14 = vector.extract_strided_slice %2 {offsets = [10, 0], sizes = [80, 16], strides = [1, 1]} : vector<96x16xf32> to vector<80x16xf32>
    %15 = arith.truncf %14 : vector<80x16xf32> to vector<80x16xbf16>
    %c2 = arith.constant 2 : index
    %c0_8 = arith.constant 0 : index
    %c0_9 = arith.constant 0 : index
    %16 = vector.load %arg2[%c2, %c0_8, %c0_9] : memref<4x16x128xbf16, #tpu.memory_space<vmem>>, vector<1x16x128xbf16>
    %17 = vector.shape_cast %16 : vector<1x16x128xbf16> to vector<16x128xbf16>
    %cst_10 = arith.constant dense<0.000000e+00> : vector<80x128xf32>
    %18 = tpu.matmul %15, %17, %cst_10 {dimension_numbers = #tpu.dot_dimension_numbers<[1], [0], [0], [1], [0, 0, 1, 1], [], []>} : vector<80x16xbf16>, vector<16x128xbf16>, vector<80x128xf32> -> vector<80x128xf32>
    %19 = arith.addf %13, %18 : vector<80x128xf32>
    %20 = vector.extract_strided_slice %2 {offsets = [11, 0], sizes = [80, 16], strides = [1, 1]} : vector<96x16xf32> to vector<80x16xf32>
    %21 = arith.truncf %20 : vector<80x16xf32> to vector<80x16xbf16>
    %c3 = arith.constant 3 : index
    %c0_11 = arith.constant 0 : index
    %c0_12 = arith.constant 0 : index
    %22 = vector.load %arg2[%c3, %c0_11, %c0_12] : memref<4x16x128xbf16, #tpu.memory_space<vmem>>, vector<1x16x128xbf16>
    %23 = vector.shape_cast %22 : vector<1x16x128xbf16> to vector<16x128xbf16>
    %cst_13 = arith.constant dense<0.000000e+00> : vector<80x128xf32>
    %24 = tpu.matmul %21, %23, %cst_13 {dimension_numbers = #tpu.dot_dimension_numbers<[1], [0], [0], [1], [0, 0, 1, 1], [], []>} : vector<80x16xbf16>, vector<16x128xbf16>, vector<80x128xf32> -> vector<80x128xf32>
    %25 = arith.addf %19, %24 : vector<80x128xf32>
    %cst_14 = arith.constant 0.000000e+00 : f32
    %26 = vector.broadcast %cst_14 : f32 to vector<80x128xf32>
    %27 = arith.cmpf oge, %25, %26 : vector<80x128xf32>
    %cst_15 = arith.constant 2.000000e-01 : f32
    %28 = vector.broadcast %cst_15 : f32 to vector<80x128xf32>
    %29 = arith.mulf %28, %25 : vector<80x128xf32>
    %30 = arith.select %27, %25, %29 : vector<80x128xi1>, vector<80x128xf32>
    %31 = tpu.iota {dimensions = array<i32: 0>} : vector<80x128xi32>
    %c10_i32 = arith.constant 10 : i32
    %c0_i32 = arith.constant 0 : i32
    %32 = arith.cmpi eq, %c10_i32, %c0_i32 : i32
    %c1_i32 = arith.constant 1 : i32
    %33 = arith.select %32, %c1_i32, %c10_i32 : i32
    %34 = vector.broadcast %33 : i32 to vector<80x128xi32>
    %35 = arith.remsi %31, %34 : vector<80x128xi32>
    %c0_i32_16 = arith.constant 0 : i32
    %36 = vector.broadcast %c0_i32_16 : i32 to vector<80x128xi32>
    %37 = arith.cmpi ne, %35, %36 : vector<80x128xi32>
    %c0_i32_17 = arith.constant 0 : i32
    %38 = vector.broadcast %c0_i32_17 : i32 to vector<80x128xi32>
    %39 = arith.cmpi slt, %35, %38 : vector<80x128xi32>
    %c0_i32_18 = arith.constant 0 : i32
    %40 = arith.cmpi slt, %33, %c0_i32_18 : i32
    %41 = vector.broadcast %40 : i1 to vector<80x128xi1>
    %42 = vector.broadcast %41 : vector<80x128xi1> to vector<80x128xi1>
    %43 = arith.xori %39, %42 : vector<80x128xi1>
    %44 = arith.andi %43, %37 : vector<80x128xi1>
    %45 = vector.broadcast %33 : i32 to vector<80x128xi32>
    %46 = arith.addi %35, %45 : vector<80x128xi32>
    %47 = arith.select %44, %46, %35 : vector<80x128xi1>, vector<80x128xi32>
    %c8_i32 = arith.constant 8 : i32
    %48 = vector.broadcast %c8_i32 : i32 to vector<80x128xi32>
    %49 = arith.cmpi slt, %47, %48 : vector<80x128xi32>
    %cst_19 = arith.constant 0.000000e+00 : f32
    %50 = vector.broadcast %cst_19 : f32 to vector<80x128xf32>
    %51 = arith.select %49, %30, %50 : vector<80x128xi1>, vector<80x128xf32>
    %52 = arith.truncf %51 : vector<80x128xf32> to vector<80x128xbf16>
    %c0_20 = arith.constant 0 : index
    %c0_21 = arith.constant 0 : index
    %c0_22 = arith.constant 0 : index
    %53 = vector.load %arg3[%c0_20, %c0_21, %c0_22] : memref<1x80x128xbf16, #tpu.memory_space<vmem>>, vector<1x80x128xbf16>
    %54 = vector.shape_cast %53 : vector<1x80x128xbf16> to vector<80x128xbf16>
    %55 = vector.shape_cast %52 : vector<80x128xbf16> to vector<1x80x128xbf16>
    tpu.vector_store %arg3[%c0_20, %c0_21, %c0_22], %55 {strides = array<i32>} : memref<1x80x128xbf16, #tpu.memory_space<vmem>>, vector<1x80x128xbf16>,
    return
  }
  func.func @transform_0(%arg0: i32) -> (i32, i32, i32) {
    %c0_i32 = arith.constant 0 : i32
    %c0_i32_0 = arith.constant 0 : i32
    %c0_i32_1 = arith.constant 0 : i32
    return %arg0, %c0_i32, %c0_i32_0 : i32, i32, i32
  }
  func.func @transform_1(%arg0: i32) -> (i32, i32, i32) {
    %c0_i32 = arith.constant 0 : i32
    %c0_i32_0 = arith.constant 0 : i32
    %c0_i32_1 = arith.constant 0 : i32
    %c0_i32_2 = arith.constant 0 : i32
    return %c0_i32, %c0_i32_0, %c0_i32_1 : i32, i32, i32
  }
  func.func @transform_2(%arg0: i32) -> (i32, i32, i32) {
    %c0_i32 = arith.constant 0 : i32
    %c0_i32_0 = arith.constant 0 : i32
    %c0_i32_1 = arith.constant 0 : i32
    return %arg0, %c0_i32, %c0_i32_0 : i32, i32, i32
  }
}

module attributes {stable_mosaic.version = 11 : i64} {
  func.func @_conv2_fused_kernel(%arg0: i32, %arg1: memref<1xf32, #tpu.memory_space<smem>>, %arg2: memref<1x104x128xbf16, #tpu.memory_space<vmem>>, %arg3: memref<9x128x128xbf16, #tpu.memory_space<vmem>>, %arg4: memref<1x80x4xbf16, #tpu.memory_space<vmem>>, %arg5: memref<4x128xbf16, #tpu.memory_space<vmem>>, %arg6: memref<1x128xf32, #tpu.memory_space<vmem>>, %arg7: memref<1x80x128xf32, #tpu.memory_space<vmem>>) attributes {dimension_semantics = [#tpu.dimension_semantics<parallel>], iteration_bounds = array<i64: 2>, scalar_prefetch = 0 : i64, scratch_operands = 0 : i64, tpu.core_type = #tpu.core_type<tc>, window_params = [{transform_indices = @transform_0, window_bounds = array<i64: 1>}, {transform_indices = @transform_1, window_bounds = array<i64: 1, 104, 128>}, {pipeline_mode = #tpu.pipeline_mode<synchronous>, transform_indices = @transform_2, window_bounds = array<i64: 9, 128, 128>}, {transform_indices = @transform_3, window_bounds = array<i64: 1, 80, 4>}, {pipeline_mode = #tpu.pipeline_mode<synchronous>, transform_indices = @transform_4, window_bounds = array<i64: 4, 128>}, {pipeline_mode = #tpu.pipeline_mode<synchronous>, transform_indices = @transform_5, window_bounds = array<i64: 1, 128>}, {transform_indices = @transform_6, window_bounds = array<i64: 1, 80, 128>}]} {
    %c0 = arith.constant 0 : index
    %c0_0 = arith.constant 0 : index
    %c0_1 = arith.constant 0 : index
    %0 = vector.load %arg2[%c0, %c0_0, %c0_1] : memref<1x104x128xbf16, #tpu.memory_space<vmem>>, vector<1x104x128xbf16>
    %1 = vector.shape_cast %0 : vector<1x104x128xbf16> to vector<104x128xbf16>
    %2 = arith.extf %1 : vector<104x128xbf16> to vector<104x128xf32>
    %3 = vector.extract_strided_slice %2 {offsets = [0, 0], sizes = [80, 128], strides = [1, 1]} : vector<104x128xf32> to vector<80x128xf32>
    %4 = arith.truncf %3 : vector<80x128xf32> to vector<80x128xbf16>
    %c0_2 = arith.constant 0 : index
    %c0_3 = arith.constant 0 : index
    %c0_4 = arith.constant 0 : index
    %5 = vector.load %arg3[%c0_2, %c0_3, %c0_4] : memref<9x128x128xbf16, #tpu.memory_space<vmem>>, vector<1x128x128xbf16>
    %6 = vector.shape_cast %5 : vector<1x128x128xbf16> to vector<128x128xbf16>
    %cst = arith.constant dense<0.000000e+00> : vector<80x128xf32>
    %7 = tpu.matmul %4, %6, %cst {dimension_numbers = #tpu.dot_dimension_numbers<[1], [0], [0], [1], [0, 0, 1, 1], [], []>} : vector<80x128xbf16>, vector<128x128xbf16>, vector<80x128xf32> -> vector<80x128xf32>
    %8 = vector.extract_strided_slice %2 {offsets = [1, 0], sizes = [80, 128], strides = [1, 1]} : vector<104x128xf32> to vector<80x128xf32>
    %9 = arith.truncf %8 : vector<80x128xf32> to vector<80x128xbf16>
    %c1 = arith.constant 1 : index
    %c0_5 = arith.constant 0 : index
    %c0_6 = arith.constant 0 : index
    %10 = vector.load %arg3[%c1, %c0_5, %c0_6] : memref<9x128x128xbf16, #tpu.memory_space<vmem>>, vector<1x128x128xbf16>
    %11 = vector.shape_cast %10 : vector<1x128x128xbf16> to vector<128x128xbf16>
    %cst_7 = arith.constant dense<0.000000e+00> : vector<80x128xf32>
    %12 = tpu.matmul %9, %11, %cst_7 {dimension_numbers = #tpu.dot_dimension_numbers<[1], [0], [0], [1], [0, 0, 1, 1], [], []>} : vector<80x128xbf16>, vector<128x128xbf16>, vector<80x128xf32> -> vector<80x128xf32>
    %13 = arith.addf %7, %12 : vector<80x128xf32>
    %14 = vector.extract_strided_slice %2 {offsets = [2, 0], sizes = [80, 128], strides = [1, 1]} : vector<104x128xf32> to vector<80x128xf32>
    %15 = arith.truncf %14 : vector<80x128xf32> to vector<80x128xbf16>
    %c2 = arith.constant 2 : index
    %c0_8 = arith.constant 0 : index
    %c0_9 = arith.constant 0 : index
    %16 = vector.load %arg3[%c2, %c0_8, %c0_9] : memref<9x128x128xbf16, #tpu.memory_space<vmem>>, vector<1x128x128xbf16>
    %17 = vector.shape_cast %16 : vector<1x128x128xbf16> to vector<128x128xbf16>
    %cst_10 = arith.constant dense<0.000000e+00> : vector<80x128xf32>
    %18 = tpu.matmul %15, %17, %cst_10 {dimension_numbers = #tpu.dot_dimension_numbers<[1], [0], [0], [1], [0, 0, 1, 1], [], []>} : vector<80x128xbf16>, vector<128x128xbf16>, vector<80x128xf32> -> vector<80x128xf32>
    %19 = arith.addf %13, %18 : vector<80x128xf32>
    %20 = vector.extract_strided_slice %2 {offsets = [10, 0], sizes = [80, 128], strides = [1, 1]} : vector<104x128xf32> to vector<80x128xf32>
    %21 = arith.truncf %20 : vector<80x128xf32> to vector<80x128xbf16>
    %c3 = arith.constant 3 : index
    %c0_11 = arith.constant 0 : index
    %c0_12 = arith.constant 0 : index
    %22 = vector.load %arg3[%c3, %c0_11, %c0_12] : memref<9x128x128xbf16, #tpu.memory_space<vmem>>, vector<1x128x128xbf16>
    %23 = vector.shape_cast %22 : vector<1x128x128xbf16> to vector<128x128xbf16>
    %cst_13 = arith.constant dense<0.000000e+00> : vector<80x128xf32>
    %24 = tpu.matmul %21, %23, %cst_13 {dimension_numbers = #tpu.dot_dimension_numbers<[1], [0], [0], [1], [0, 0, 1, 1], [], []>} : vector<80x128xbf16>, vector<128x128xbf16>, vector<80x128xf32> -> vector<80x128xf32>
    %25 = arith.addf %19, %24 : vector<80x128xf32>
    %26 = vector.extract_strided_slice %2 {offsets = [11, 0], sizes = [80, 128], strides = [1, 1]} : vector<104x128xf32> to vector<80x128xf32>
    %27 = arith.truncf %26 : vector<80x128xf32> to vector<80x128xbf16>
    %c4 = arith.constant 4 : index
    %c0_14 = arith.constant 0 : index
    %c0_15 = arith.constant 0 : index
    %28 = vector.load %arg3[%c4, %c0_14, %c0_15] : memref<9x128x128xbf16, #tpu.memory_space<vmem>>, vector<1x128x128xbf16>
    %29 = vector.shape_cast %28 : vector<1x128x128xbf16> to vector<128x128xbf16>
    %cst_16 = arith.constant dense<0.000000e+00> : vector<80x128xf32>
    %30 = tpu.matmul %27, %29, %cst_16 {dimension_numbers = #tpu.dot_dimension_numbers<[1], [0], [0], [1], [0, 0, 1, 1], [], []>} : vector<80x128xbf16>, vector<128x128xbf16>, vector<80x128xf32> -> vector<80x128xf32>
    %31 = arith.addf %25, %30 : vector<80x128xf32>
    %32 = vector.extract_strided_slice %2 {offsets = [12, 0], sizes = [80, 128], strides = [1, 1]} : vector<104x128xf32> to vector<80x128xf32>
    %33 = arith.truncf %32 : vector<80x128xf32> to vector<80x128xbf16>
    %c5 = arith.constant 5 : index
    %c0_17 = arith.constant 0 : index
    %c0_18 = arith.constant 0 : index
    %34 = vector.load %arg3[%c5, %c0_17, %c0_18] : memref<9x128x128xbf16, #tpu.memory_space<vmem>>, vector<1x128x128xbf16>
    %35 = vector.shape_cast %34 : vector<1x128x128xbf16> to vector<128x128xbf16>
    %cst_19 = arith.constant dense<0.000000e+00> : vector<80x128xf32>
    %36 = tpu.matmul %33, %35, %cst_19 {dimension_numbers = #tpu.dot_dimension_numbers<[1], [0], [0], [1], [0, 0, 1, 1], [], []>} : vector<80x128xbf16>, vector<128x128xbf16>, vector<80x128xf32> -> vector<80x128xf32>
    %37 = arith.addf %31, %36 : vector<80x128xf32>
    %38 = vector.extract_strided_slice %2 {offsets = [20, 0], sizes = [80, 128], strides = [1, 1]} : vector<104x128xf32> to vector<80x128xf32>
    %39 = arith.truncf %38 : vector<80x128xf32> to vector<80x128xbf16>
    %c6 = arith.constant 6 : index
    %c0_20 = arith.constant 0 : index
    %c0_21 = arith.constant 0 : index
    %40 = vector.load %arg3[%c6, %c0_20, %c0_21] : memref<9x128x128xbf16, #tpu.memory_space<vmem>>, vector<1x128x128xbf16>
    %41 = vector.shape_cast %40 : vector<1x128x128xbf16> to vector<128x128xbf16>
    %cst_22 = arith.constant dense<0.000000e+00> : vector<80x128xf32>
    %42 = tpu.matmul %39, %41, %cst_22 {dimension_numbers = #tpu.dot_dimension_numbers<[1], [0], [0], [1], [0, 0, 1, 1], [], []>} : vector<80x128xbf16>, vector<128x128xbf16>, vector<80x128xf32> -> vector<80x128xf32>
    %43 = arith.addf %37, %42 : vector<80x128xf32>
    %44 = vector.extract_strided_slice %2 {offsets = [21, 0], sizes = [80, 128], strides = [1, 1]} : vector<104x128xf32> to vector<80x128xf32>
    %45 = arith.truncf %44 : vector<80x128xf32> to vector<80x128xbf16>
    %c7 = arith.constant 7 : index
    %c0_23 = arith.constant 0 : index
    %c0_24 = arith.constant 0 : index
    %46 = vector.load %arg3[%c7, %c0_23, %c0_24] : memref<9x128x128xbf16, #tpu.memory_space<vmem>>, vector<1x128x128xbf16>
    %47 = vector.shape_cast %46 : vector<1x128x128xbf16> to vector<128x128xbf16>
    %cst_25 = arith.constant dense<0.000000e+00> : vector<80x128xf32>
    %48 = tpu.matmul %45, %47, %cst_25 {dimension_numbers = #tpu.dot_dimension_numbers<[1], [0], [0], [1], [0, 0, 1, 1], [], []>} : vector<80x128xbf16>, vector<128x128xbf16>, vector<80x128xf32> -> vector<80x128xf32>
    %49 = arith.addf %43, %48 : vector<80x128xf32>
    %50 = vector.extract_strided_slice %2 {offsets = [22, 0], sizes = [80, 128], strides = [1, 1]} : vector<104x128xf32> to vector<80x128xf32>
    %51 = arith.truncf %50 : vector<80x128xf32> to vector<80x128xbf16>
    %c8 = arith.constant 8 : index
    %c0_26 = arith.constant 0 : index
    %c0_27 = arith.constant 0 : index
    %52 = vector.load %arg3[%c8, %c0_26, %c0_27] : memref<9x128x128xbf16, #tpu.memory_space<vmem>>, vector<1x128x128xbf16>
    %53 = vector.shape_cast %52 : vector<1x128x128xbf16> to vector<128x128xbf16>
    %cst_28 = arith.constant dense<0.000000e+00> : vector<80x128xf32>
    %54 = tpu.matmul %51, %53, %cst_28 {dimension_numbers = #tpu.dot_dimension_numbers<[1], [0], [0], [1], [0, 0, 1, 1], [], []>} : vector<80x128xbf16>, vector<128x128xbf16>, vector<80x128xf32> -> vector<80x128xf32>
    %55 = arith.addf %49, %54 : vector<80x128xf32>
    %cst_29 = arith.constant 0.000000e+00 : f32
    %56 = vector.broadcast %cst_29 : f32 to vector<80x128xf32>
    %57 = arith.cmpf oge, %55, %56 : vector<80x128xf32>
    %cst_30 = arith.constant 2.000000e-01 : f32
    %58 = vector.broadcast %cst_30 : f32 to vector<80x128xf32>
    %59 = arith.mulf %58, %55 : vector<80x128xf32>
    %60 = arith.select %57, %55, %59 : vector<80x128xi1>, vector<80x128xf32>
    %c0_31 = arith.constant 0 : index
    %c0_32 = arith.constant 0 : index
    %c0_33 = arith.constant 0 : index
    %61 = vector.load %arg4[%c0_31, %c0_32, %c0_33] : memref<1x80x4xbf16, #tpu.memory_space<vmem>>, vector<1x80x4xbf16>
    %62 = vector.shape_cast %61 : vector<1x80x4xbf16> to vector<80x4xbf16>
    %c0_34 = arith.constant 0 : index
    %c0_35 = arith.constant 0 : index
    %63 = vector.load %arg5[%c0_34, %c0_35] : memref<4x128xbf16, #tpu.memory_space<vmem>>, vector<4x128xbf16>
    %cst_36 = arith.constant dense<0.000000e+00> : vector<80x128xf32>
    %64 = tpu.matmul %62, %63, %cst_36 {dimension_numbers = #tpu.dot_dimension_numbers<[1], [0], [0], [1], [0, 0, 1, 1], [], []>} : vector<80x4xbf16>, vector<4x128xbf16>, vector<80x128xf32> -> vector<80x128xf32>
    %c0_37 = arith.constant 0 : index
    %c0_38 = arith.constant 0 : index
    %65 = vector.load %arg6[%c0_37, %c0_38] : memref<1x128xf32, #tpu.memory_space<vmem>>, vector<1x128xf32>
    %66 = vector.broadcast %65 : vector<1x128xf32> to vector<80x128xf32>
    %67 = arith.addf %64, %66 : vector<80x128xf32>
    %c0_39 = arith.constant 0 : index
    %68 = memref.load %arg1[%c0_39] : memref<1xf32, #tpu.memory_space<smem>>
    %69 = vector.broadcast %68 : f32 to vector<80x128xf32>
    %70 = arith.mulf %69, %60 : vector<80x128xf32>
    %71 = arith.addf %67, %70 : vector<80x128xf32>
    %c0_40 = arith.constant 0 : index
    %c0_41 = arith.constant 0 : index
    %c0_42 = arith.constant 0 : index
    %72 = vector.load %arg7[%c0_40, %c0_41, %c0_42] : memref<1x80x128xf32, #tpu.memory_space<vmem>>, vector<1x80x128xf32>
    %73 = vector.shape_cast %72 : vector<1x80x128xf32> to vector<80x128xf32>
    %74 = vector.shape_cast %71 : vector<80x128xf32> to vector<1x80x128xf32>
    tpu.vector_store %arg7[%c0_40, %c0_41, %c0_42], %74 {strides = array<i32>} : memref<1x80x128xf32, #tpu.memory_space<vmem>>, vector<1x80x128xf32>,
    return
  }
  func.func @transform_0(%arg0: i32) -> i32 {
    %c0_i32 = arith.constant 0 : i32
    %c0_i32_0 = arith.constant 0 : i32
    return %c0_i32 : i32
  }
  func.func @transform_1(%arg0: i32) -> (i32, i32, i32) {
    %c0_i32 = arith.constant 0 : i32
    %c0_i32_0 = arith.constant 0 : i32
    %c0_i32_1 = arith.constant 0 : i32
    return %arg0, %c0_i32, %c0_i32_0 : i32, i32, i32
  }
  func.func @transform_2(%arg0: i32) -> (i32, i32, i32) {
    %c0_i32 = arith.constant 0 : i32
    %c0_i32_0 = arith.constant 0 : i32
    %c0_i32_1 = arith.constant 0 : i32
    %c0_i32_2 = arith.constant 0 : i32
    return %c0_i32, %c0_i32_0, %c0_i32_1 : i32, i32, i32
  }
  func.func @transform_3(%arg0: i32) -> (i32, i32, i32) {
    %c0_i32 = arith.constant 0 : i32
    %c0_i32_0 = arith.constant 0 : i32
    %c0_i32_1 = arith.constant 0 : i32
    return %arg0, %c0_i32, %c0_i32_0 : i32, i32, i32
  }
  func.func @transform_4(%arg0: i32) -> (i32, i32) {
    %c0_i32 = arith.constant 0 : i32
    %c0_i32_0 = arith.constant 0 : i32
    %c0_i32_1 = arith.constant 0 : i32
    return %c0_i32, %c0_i32_0 : i32, i32
  }
  func.func @transform_5(%arg0: i32) -> (i32, i32) {
    %c0_i32 = arith.constant 0 : i32
    %c0_i32_0 = arith.constant 0 : i32
    %c0_i32_1 = arith.constant 0 : i32
    return %c0_i32, %c0_i32_0 : i32, i32
  }
  func.func @transform_6(%arg0: i32) -> (i32, i32, i32) {
    %c0_i32 = arith.constant 0 : i32
    %c0_i32_0 = arith.constant 0 : i32
    %c0_i32_1 = arith.constant 0 : i32
    return %arg0, %c0_i32, %c0_i32_0 : i32, i32, i32
  }
}

</mosaic_0001>

<llo_original>
// kernel: res_d_forward.2
$region0: #{res_d_forward.2}
  #allocation0 [shape = 'u32[]', space=smem, size = 0x4, offset = 0x4, fixed_abs, tag = 'smem constant byte address 0x4 - core index']
  #allocation1 [shape = 'u32[144,128]{1,0:T(1,128)}', space=vmem, size = 0x12000, scoped, tag = 'internal scratch']
  %s0 = inlined_call_operand.vmem [shape: bf16[2,96,16], index: 0, kind: input, shape index: {}]
  %s1 = inlined_call_operand.vmem [shape: bf16[4,16,128], index: 1, kind: input, shape index: {}]
  %s2 = inlined_call_operand.vmem [shape: bf16[2,80,128], index: 2, kind: output, shape index: {}]
  %s3 = sld [smem:[#allocation0]]
  $region41: #{res_d_forward.2} parent=0
    _
  %s5 = ssub.s32 1, %s3
  %s6 = scalar_select 0, %s5, %s3
  loop: start=0, step=1, limit=4
  $region2: #{res_d_forward.2} parent=0 // loop_pre_header
    _
  $region3: #{res_d_forward.2} parent=0 // loop_header
    %s8 = sphi 0, %s12
    %p9 = scmp.ge.s32.totalorder %s8, 4
    %s18 = sphi 0, %s20
    %s21 = sphi 0, %s18
    %s22 = sphi 0, %s21
    %s38 = sphi 0, %s22
    %s42 = sphi 0, %s42
    %s44 = sphi 0, %s42
    %s45 = sphi 0, %s44
    %s59 = sphi 0, %s45
    %s65 = sphi 0, %s67
    %s68 = sphi 0, %s65
    %s69 = sphi 0, %s68
    %s85 = sphi 0, %s69
  $region4: #{res_d_forward.2} parent=0 // loop_header_branch
    %11 = sbr.rel (%p9) target = $region8
  $region5: #{res_d_forward.2} parent=0 // loop_body
    %s13 = ssub.s32 %s8, 1
    %s14 = ssub.s32 %s8, 2
    %s15 = sadd.s32 %s8, 1
    %s16 = ssub.s32 %s8, %s15
    %p17 = scmp.eq.s32.totalorder %s16, 0
    %s19 = sadd.s32 %s18, 1
    %s20 = scalar_select %p17, %s18, %s19
    %p23 = pneg %p17
    %p24 = scmp.eq.s32.totalorder %s8, 1
    %p25 = por %p23, %p24
    %p26 = scmp.ne.s32.totalorder %s18, %s21
    %p27 = scmp.eq.s32.totalorder %s8, 0
    %p28 = por %p26, %p27
    %p29 = scmp.ne.s32.totalorder %s18, %s21
    %p30 = scmp.eq.s32.totalorder %s13, 1
    %p31 = por %p29, %p30
    %p32 = scmp.ne.s32.totalorder %s21, %s22
    %p33 = scmp.eq.s32.totalorder %s13, 0
    %p34 = por %p32, %p33
    %p35 = scmp.ne.s32.totalorder %s21, %s22
    %p36 = scmp.eq.s32.totalorder %s14, 1
    %p37 = por %p35, %p36
    %p39 = scmp.ne.s32.totalorder %s22, %s38
    %p40 = scmp.eq.s32.totalorder %s14, 0
    %p41 = por %p39, %p40
    %s43 = sadd.s32 %s42, 1
    %p46 = scmp.eq.s32.totalorder %s8, 1
    %p47 = scmp.ne.s32.totalorder %s42, %s44
    %p48 = scmp.eq.s32.totalorder %s8, 0
    %p49 = por %p47, %p48
    %p50 = scmp.ne.s32.totalorder %s42, %s44
    %p51 = scmp.eq.s32.totalorder %s13, 1
    %p52 = por %p50, %p51
    %p53 = scmp.ne.s32.totalorder %s44, %s45
    %p54 = scmp.eq.s32.totalorder %s13, 0
    %p55 = por %p53, %p54
    %p56 = scmp.ne.s32.totalorder %s44, %s45
    %p57 = scmp.eq.s32.totalorder %s14, 1
    %p58 = por %p56, %p57
    %p60 = scmp.ne.s32.totalorder %s45, %s59
    %p61 = scmp.eq.s32.totalorder %s14, 0
    %p62 = por %p60, %p61
    %s63 = ssub.s32 %s8, %s15
    %p64 = scmp.eq.s32.totalorder %s63, 0
    %s66 = sadd.s32 %s65, 1
    %s67 = scalar_select %p64, %s65, %s66
    %p70 = pneg %p64
    %p71 = scmp.eq.s32.totalorder %s8, 1
    %p72 = por %p70, %p71
    %p73 = scmp.ne.s32.totalorder %s65, %s68
    %p74 = scmp.eq.s32.totalorder %s8, 0
    %p75 = por %p73, %p74
    %p76 = scmp.ne.s32.totalorder %s65, %s68
    %p77 = scmp.eq.s32.totalorder %s13, 1
    %p78 = por %p76, %p77
    %p79 = scmp.ne.s32.totalorder %s68, %s69
    %p80 = scmp.eq.s32.totalorder %s13, 0
    %p81 = por %p79, %p80
    %p82 = scmp.ne.s32.totalorder %s68, %s69
    %p83 = scmp.eq.s32.totalorder %s14, 1
    %p84 = por %p82, %p83
    %p86 = scmp.ne.s32.totalorder %s69, %s85
    %p87 = scmp.eq.s32.totalorder %s14, 0
    %p88 = por %p86, %p87
    %p89 = scmp.le.s32.totalorder 1, %s8
    %p90 = scmp.lt.s32.totalorder %s8, 3
    %p91 = pnand %p89, %p90
    %p92 = pneg %p91
    // Predicated region
    $region9: #{res_d_forward.2} parent=5 // pred_check
      _
    $region10: #{res_d_forward.2} parent=5 // pred_check_branch
      %94 = sbr.rel (%p91) target = $region12
    $region11: #{res_d_forward.2} parent=5 // pred_region
      %s95 = ssub.s32 %s8, 1
      // Predicated region
      $region13: #{res_d_forward.2} parent=11 // pred_check
        %p96 = pneg %p55
      $region14: #{res_d_forward.2} parent=11 // pred_check_branch
        %98 = sbr.rel (%p96) target = $region16
      $region15: #{res_d_forward.2} parent=11 // pred_region
        _
      $region16: #{res_d_forward.2} parent=11 // pred_fallthru
        _
    $region12: #{res_d_forward.2} parent=5 // pred_fallthru
      _
    %p99 = scmp.lt.s32.totalorder %s8, 2
    // Predicated region
    $region17: #{res_d_forward.2} parent=5 // pred_check
      %p100 = pneg %p99
    $region18: #{res_d_forward.2} parent=5 // pred_check_branch
      %102 = sbr.rel (%p100) target = $region20
    $region19: #{res_d_forward.2} parent=5 // pred_region
      // Predicated region
      $region21: #{res_d_forward.2} parent=19 // pred_check
        %p103 = pneg %p28
      $region22: #{res_d_forward.2} parent=19 // pred_check_branch
        %105 = sbr.rel (%p103) target = $region24
      $region23: #{res_d_forward.2} parent=19 // pred_region
        %p106 = scmp.lt.s32.totalorder %s8, 1
        %s107 = scalar_select %p106, %s8, 1
        %s108 = smul.addr %s107, 12
        %s109 = smul.addr %s108, 4
        %s110 = scalar_lea.vmem %s0, %s109
      $region24: #{res_d_forward.2} parent=19 // pred_fallthru
        _
    $region20: #{res_d_forward.2} parent=5 // pred_fallthru
      _
    %p111 = scmp.le.s32.totalorder 1, %s8
    %p112 = scmp.lt.s32.totalorder %s8, 3
    %p113 = pnand %p111, %p112
    %p114 = pneg %p113
    // Predicated region
    $region25: #{res_d_forward.2} parent=5 // pred_check
      _
    $region26: #{res_d_forward.2} parent=5 // pred_check_branch
      %116 = sbr.rel (%p113) target = $region28
    $region27: #{res_d_forward.2} parent=5 // pred_region
      %s117 = ssub.s32 %s8, 1
      %p118 = scmp.lt.s32.totalorder %s13, 1
      %s119 = scalar_select %p118, %s13, 1
      %s120 = smul.addr %s119, 12
      %s121 = smul.addr %s120, 4
      %s122 = scalar_lea.vmem %s0, %s121
      %p123 = pneg %p34
      %p124 = pneg %p31
      %p125 = pneg %p55
      %p126 = pneg %p52
      %p127 = pneg %p81
      %p128 = pneg %p78
      %p129 = scmp.lt.s32.totalorder %s13, 1
      %s130 = scalar_select %p129, %s13, 1
      %s131 = smul.addr %s130, 10
      %s132 = smul.addr %s131, 4
      %s133 = scalar_lea.vmem %s2, %s132
      %p134 = scmp.lt.s32.totalorder %s13, 1
      %s135 = scalar_select %p134, %s13, 1
      %s136 = smul.addr %s135, 12
      %s137 = smul.addr %s136, 4
      %s138 = scalar_lea.vmem %s0, %s137
      %p139 = scmp.lt.s32.totalorder %s13, 1
      %s140 = scalar_select %p139, %s13, 1
      %s141 = smul.addr %s140, 10
      %s142 = smul.addr %s141, 4
      %s143 = scalar_lea.vmem %s2, %s142
      %v145 = vld [vmem:[%s138] sm:$0xf]
      %v146 = vld [vmem:[%s138 + $0x4] sm:$0xf]
      %v147 = vld [vmem:[%s138 + $0x8] sm:$0xf]
      %v148 = vld [vmem:[%s138 + $0xc] sm:$0xf]
      %v149 = vld [vmem:[%s138 + $0x10] sm:$0xf]
      %v150 = vld [vmem:[%s138 + $0x14] sm:$0xf]
      %v151 = vld [vmem:[%s138 + $0x18] sm:$0xf]
      %v152 = vld [vmem:[%s138 + $0x1c] sm:$0xf]
      %v153 = vld [vmem:[%s138 + $0x20] sm:$0xf]
      %v154 = vld [vmem:[%s138 + $0x24] sm:$0xf]
      %v155 = vld [vmem:[%s138 + $0x28] sm:$0xf]
      %v156 = vld [vmem:[%s138 + $0x2c] sm:$0xf]
      %v157 = vunpack.c.l.bf16 %v145
      %v158 = vunpack.c.l.bf16 %v146
      %v159 = vunpack.c.l.bf16 %v147
      %v160 = vunpack.c.l.bf16 %v148
      %v161 = vunpack.c.l.bf16 %v149
      %v162 = vunpack.c.l.bf16 %v150
      %v163 = vunpack.c.l.bf16 %v151
      %v164 = vunpack.c.l.bf16 %v152
      %v165 = vunpack.c.l.bf16 %v153
      %v166 = vunpack.c.l.bf16 %v154
      %v167 = vunpack.c.l.bf16 %v155
      %v168 = vunpack.c.l.bf16 %v156
      %v169 = vpack.c.bf16 %v158, %v157
      %v170 = vpack.c.bf16 %v160, %v159
      %v171 = vpack.c.bf16 %v162, %v161
      %v172 = vpack.c.bf16 %v164, %v163
      %v173 = vpack.c.bf16 %v166, %v165
      %v174 = vld [vmem:[%s1] sm:$0xf]
      %v175 = vld [vmem:[%s1 + $0x4] sm:$0xf]
      %v176 = vpack.c.bf16 %v167, %v167
      %s177 = scalar_lea.vmem %s1, 8
      %v178 = vld [vmem:[%s177] sm:$0xf]
      %v179 = vld [vmem:[%s177 + $0x4] sm:$0xf]
      %vm180 = vsmask.f32 7424
      %v182 = vshrl.u32 %v169, 16
      %v184 = vshll.u32 %v169, 16
      %v186 = vrot.slane %v184, 1
      %v187 = vor.u32 %v182, %v186
      %v189 = vshll.u32 %v170, 16
      %v191 = vrot.slane %v189, 1
      %v192 = vsel %vm180, %v187, %v191
      %v193 = vshrl.u32 %v170, 16
      %v195 = vor.u32 %v193, %v191
      %v197 = vshll.u32 %v171, 16
      %v199 = vrot.slane %v197, 1
      %v200 = vsel %vm180, %v195, %v199
      %v201 = vshrl.u32 %v171, 16
      %v203 = vor.u32 %v201, %v199
      %v205 = vshll.u32 %v172, 16
      %v207 = vrot.slane %v205, 1
      %v208 = vsel %vm180, %v203, %v207
      %v209 = vshrl.u32 %v172, 16
      %v211 = vor.u32 %v209, %v207
      %v213 = vshll.u32 %v173, 16
      %v215 = vrot.slane %v213, 1
      %v216 = vsel %vm180, %v211, %v215
      %v217 = vshrl.u32 %v173, 16
      %v219 = vor.u32 %v217, %v215
      %v221 = vshll.u32 %v176, 16
      %v223 = vrot.slane %v221, 1
      %v224 = vsel %vm180, %v219, %v223
      %v227 = vunpack.c.l.b16 %v178
      %v228 = vunpack.c.l.b16 %v179
      %v229 = vpack.c.b16 %v228, %v227
      %vm231 = vcmask 130048
      %v233 = vsel %vm231, %v192, 0
      %v236 = vsel %vm231, %v200, 0
      %v239 = vsel %vm231, %v208, 0
      %v242 = vsel %vm231, %v216, 0
      %v245 = vsel %vm231, %v224, 0
      %247 = vmatprep.subr.bf16.mxu0 0
      %248 = vmatpush1.bf16.msra.mxu0 %v229
      %249 = vmatprep.subr.bf16.mxu0 0
      %250 = vmatpush1.bf16.msra.mxu0 0
      %251 = vmatprep.subr.bf16.mxu0 0
      %252 = vmatpush1.bf16.msra.mxu0 0
      %253 = vmatprep.subr.bf16.mxu0 0
      %254 = vmatpush1.bf16.msra.mxu0 0
      %255 = vmatprep.subr.bf16.mxu0 0
      %256 = vmatpush1.bf16.msra.mxu0 0
      %257 = vmatprep.subr.bf16.mxu0 0
      %258 = vmatpush1.bf16.msra.mxu0 0
      %259 = vmatprep.subr.bf16.mxu0 0
      %260 = vmatpush1.bf16.msra.mxu0 0
      %261 = vmatprep.subr.bf16.mxu0 0
      %262 = vmatpush1.bf16.msra.mxu0 0
      %263 = vmatprep.subr.bf16.mxu0 0
      %264 = vmatpush1.bf16.msra.mxu0 0
      %265 = vmatprep.subr.bf16.mxu0 0
      %266 = vmatpush1.bf16.msra.mxu0 0
      %267 = vmatprep.subr.bf16.mxu0 0
      %268 = vmatpush1.bf16.msra.mxu0 0
      %269 = vmatprep.subr.bf16.mxu0 0
      %270 = vmatpush1.bf16.msra.mxu0 0
      %271 = vmatprep.subr.bf16.mxu0 0
      %272 = vmatpush1.bf16.msra.mxu0 0
      %273 = vmatprep.subr.bf16.mxu0 0
      %274 = vmatpush1.bf16.msra.mxu0 0
      %275 = vmatprep.subr.bf16.mxu0 0
      %276 = vmatpush1.bf16.msra.mxu0 0
      %277 = vmatprep.subr.bf16.mxu0 0
      %278 = vmatpush1.bf16.msra.mxu0 0
      %279 = vmatprep.mubr.bf16.mxu0 0
      %280 = vmatmul.mubr.bf16.gmra.mrb[0].mxu0 %v233
      %v281 = vpop.f32.mrb[0].mxu0
      %v282 = vadd.f32 0.0, %v281
      %v283 = vpop.f32.mrb[0].mxu0
      %v284 = vpop.f32.mrb[0].mxu0
      %v285 = vadd.f32 0.0, %v284
      %v286 = vpop.f32.mrb[0].mxu0
      %287 = vmatprep.mubr.bf16.mxu0 0
      %288 = vmatmul.mubr.bf16.gmra.mrb[0].mxu0 %v236
      %v289 = vpop.f32.mrb[0].mxu0
      %v290 = vadd.f32 0.0, %v289
      %v291 = vpop.f32.mrb[0].mxu0
      %v292 = vpop.f32.mrb[0].mxu0
      %v293 = vadd.f32 0.0, %v292
      %v294 = vpop.f32.mrb[0].mxu0
      %295 = vmatprep.mubr.bf16.mxu0 0
      %296 = vmatmul.mubr.bf16.gmra.mrb[0].mxu0 %v239
      %v297 = vpop.f32.mrb[0].mxu0
      %v298 = vadd.f32 0.0, %v297
      %v299 = vpop.f32.mrb[0].mxu0
      %v300 = vpop.f32.mrb[0].mxu0
      %v301 = vadd.f32 0.0, %v300
      %v302 = vpop.f32.mrb[0].mxu0
      %303 = vmatprep.mubr.bf16.mxu0 0
      %304 = vmatmul.mubr.bf16.gmra.mrb[0].mxu0 %v242
      %v305 = vpop.f32.mrb[0].mxu0
      %v306 = vadd.f32 0.0, %v305
      %v307 = vpop.f32.mrb[0].mxu0
      %v308 = vpop.f32.mrb[0].mxu0
      %v309 = vadd.f32 0.0, %v308
      %v310 = vpop.f32.mrb[0].mxu0
      %311 = vmatprep.mubr.bf16.mxu0 0
      %312 = vmatmul.mubr.bf16.gmra.mrb[0].mxu0 %v245
      %v313 = vpop.f32.mrb[0].mxu0
      %v314 = vadd.f32 0.0, %v313
      %v315 = vpop.f32.mrb[0].mxu0
      %v316 = vpop.f32.mrb[0].mxu0
      %v317 = vadd.f32 0.0, %v316
      %v318 = vpop.f32.mrb[0].mxu0
      %319 = vdwg.mxu0
      %v322 = vunpack.c.l.b16 %v174
      %v323 = vunpack.c.l.b16 %v175
      %v324 = vpack.c.b16 %v323, %v322
      %v326 = vsel %vm231, %v169, 0
      %v328 = vsel %vm231, %v170, 0
      %v330 = vsel %vm231, %v171, 0
      %v332 = vsel %vm231, %v172, 0
      %v334 = vsel %vm231, %v173, 0
      %336 = vmatprep.subr.bf16.mxu0 0
      %337 = vmatpush1.bf16.msra.mxu0 %v324
      %338 = vmatprep.subr.bf16.mxu0 0
      %339 = vmatpush1.bf16.msra.mxu0 0
      %340 = vmatprep.subr.bf16.mxu0 0
      %341 = vmatpush1.bf16.msra.mxu0 0
      %342 = vmatprep.subr.bf16.mxu0 0
      %343 = vmatpush1.bf16.msra.mxu0 0
      %344 = vmatprep.subr.bf16.mxu0 0
      %345 = vmatpush1.bf16.msra.mxu0 0
      %346 = vmatprep.subr.bf16.mxu0 0
      %347 = vmatpush1.bf16.msra.mxu0 0
      %348 = vmatprep.subr.bf16.mxu0 0
      %349 = vmatpush1.bf16.msra.mxu0 0
      %350 = vmatprep.subr.bf16.mxu0 0
      %351 = vmatpush1.bf16.msra.mxu0 0
      %352 = vmatprep.subr.bf16.mxu0 0
      %353 = vmatpush1.bf16.msra.mxu0 0
      %354 = vmatprep.subr.bf16.mxu0 0
      %355 = vmatpush1.bf16.msra.mxu0 0
      %356 = vmatprep.subr.bf16.mxu0 0
      %357 = vmatpush1.bf16.msra.mxu0 0
      %358 = vmatprep.subr.bf16.mxu0 0
      %359 = vmatpush1.bf16.msra.mxu0 0
      %360 = vmatprep.subr.bf16.mxu0 0
      %361 = vmatpush1.bf16.msra.mxu0 0
      %362 = vmatprep.subr.bf16.mxu0 0
      %363 = vmatpush1.bf16.msra.mxu0 0
      %364 = vmatprep.subr.bf16.mxu0 0
      %365 = vmatpush1.bf16.msra.mxu0 0
      %366 = vmatprep.subr.bf16.mxu0 0
      %367 = vmatpush1.bf16.msra.mxu0 0
      %368 = vmatprep.mubr.bf16.mxu0 0
      %369 = vmatmul.mubr.bf16.gmra.mrb[0].mxu0 %v326
      %v370 = vpop.f32.mrb[0].mxu0
      %v371 = vadd.f32 %v282, %v370
      %v372 = vpop.f32.mrb[0].mxu0
      %v373 = vpop.f32.mrb[0].mxu0
      %v374 = vadd.f32 %v285, %v373
      %v375 = vpop.f32.mrb[0].mxu0
      %376 = vmatprep.mubr.bf16.mxu0 0
      %377 = vmatmul.mubr.bf16.gmra.mrb[0].mxu0 %v328
      %v378 = vpop.f32.mrb[0].mxu0
      %v379 = vadd.f32 %v290, %v378
      %v380 = vpop.f32.mrb[0].mxu0
      %v381 = vpop.f32.mrb[0].mxu0
      %v382 = vadd.f32 %v293, %v381
      %v383 = vpop.f32.mrb[0].mxu0
      %384 = vmatprep.mubr.bf16.mxu0 0
      %385 = vmatmul.mubr.bf16.gmra.mrb[0].mxu0 %v330
      %v386 = vpop.f32.mrb[0].mxu0
      %v387 = vadd.f32 %v298, %v386
      %v388 = vpop.f32.mrb[0].mxu0
      %v389 = vpop.f32.mrb[0].mxu0
      %v390 = vadd.f32 %v301, %v389
      %v391 = vpop.f32.mrb[0].mxu0
      %392 = vmatprep.mubr.bf16.mxu0 0
      %393 = vmatmul.mubr.bf16.gmra.mrb[0].mxu0 %v332
      %v394 = vpop.f32.mrb[0].mxu0
      %v395 = vadd.f32 %v306, %v394
      %v396 = vpop.f32.mrb[0].mxu0
      %v397 = vpop.f32.mrb[0].mxu0
      %v398 = vadd.f32 %v309, %v397
      %v399 = vpop.f32.mrb[0].mxu0
      %400 = vmatprep.mubr.bf16.mxu0 0
      %401 = vmatmul.mubr.bf16.gmra.mrb[0].mxu0 %v334
      %v402 = vpop.f32.mrb[0].mxu0
      %v403 = vadd.f32 %v314, %v402
      %v404 = vpop.f32.mrb[0].mxu0
      %v405 = vpop.f32.mrb[0].mxu0
      %v406 = vadd.f32 %v317, %v405
      %v407 = vpop.f32.mrb[0].mxu0
      %408 = vdwg.mxu0
      %v409 = vpack.c.bf16 %v159, %v158
      %v410 = vpack.c.bf16 %v161, %v160
      %v411 = vpack.c.bf16 %v163, %v162
      %v412 = vpack.c.bf16 %v165, %v164
      %v413 = vpack.c.bf16 %v167, %v166
      %v414 = vpack.c.bf16 %v168, %v168
      %s415 = scalar_lea.vmem %s1, 16
      %v416 = vld [vmem:[%s415] sm:$0xf]
      %v417 = vld [vmem:[%s415 + $0x4] sm:$0xf]
      %vm424 = vcmask 1046528
      %v425 = vrot.slane %v409, 1
      %v426 = vrot.slane %v410, 1
      %v427 = vsel %vm424, %v425, %v426
      %v428 = vrot.slane %v411, 1
      %v429 = vsel %vm424, %v426, %v428
      %v430 = vrot.slane %v412, 1
      %v431 = vsel %vm424, %v428, %v430
      %v432 = vrot.slane %v413, 1
      %v433 = vsel %vm424, %v430, %v432
      %v434 = vrot.slane %v414, 1
      %v435 = vsel %vm424, %v432, %v434
      %v438 = vunpack.c.l.b16 %v416
      %v439 = vunpack.c.l.b16 %v417
      %v440 = vpack.c.b16 %v439, %v438
      %v443 = vsel %vm231, %v427, 0
      %v446 = vsel %vm231, %v429, 0
      %v449 = vsel %vm231, %v431, 0
      %v452 = vsel %vm231, %v433, 0
      %v455 = vsel %vm231, %v435, 0
      %457 = vmatprep.subr.bf16.mxu0 0
      %458 = vmatpush1.bf16.msra.mxu0 %v440
      %459 = vmatprep.subr.bf16.mxu0 0
      %460 = vmatpush1.bf16.msra.mxu0 0
      %461 = vmatprep.subr.bf16.mxu0 0
      %462 = vmatpush1.bf16.msra.mxu0 0
      %463 = vmatprep.subr.bf16.mxu0 0
      %464 = vmatpush1.bf16.msra.mxu0 0
      %465 = vmatprep.subr.bf16.mxu0 0
      %466 = vmatpush1.bf16.msra.mxu0 0
      %467 = vmatprep.subr.bf16.mxu0 0
      %468 = vmatpush1.bf16.msra.mxu0 0
      %469 = vmatprep.subr.bf16.mxu0 0
      %470 = vmatpush1.bf16.msra.mxu0 0
      %471 = vmatprep.subr.bf16.mxu0 0
      %472 = vmatpush1.bf16.msra.mxu0 0
      %473 = vmatprep.subr.bf16.mxu0 0
      %474 = vmatpush1.bf16.msra.mxu0 0
      %475 = vmatprep.subr.bf16.mxu0 0
      %476 = vmatpush1.bf16.msra.mxu0 0
      %477 = vmatprep.subr.bf16.mxu0 0
      %478 = vmatpush1.bf16.msra.mxu0 0
      %479 = vmatprep.subr.bf16.mxu0 0
      %480 = vmatpush1.bf16.msra.mxu0 0
      %481 = vmatprep.subr.bf16.mxu0 0
      %482 = vmatpush1.bf16.msra.mxu0 0
      %483 = vmatprep.subr.bf16.mxu0 0
      %484 = vmatpush1.bf16.msra.mxu0 0
      %485 = vmatprep.subr.bf16.mxu0 0
      %486 = vmatpush1.bf16.msra.mxu0 0
      %487 = vmatprep.subr.bf16.mxu0 0
      %488 = vmatpush1.bf16.msra.mxu0 0
      %489 = vmatprep.mubr.bf16.mxu0 0
      %490 = vmatmul.mubr.bf16.gmra.mrb[0].mxu0 %v443
      %v491 = vpop.f32.mrb[0].mxu0
      %v492 = vadd.f32 0.0, %v491
      %v493 = vpop.f32.mrb[0].mxu0
      %v494 = vpop.f32.mrb[0].mxu0
      %v495 = vadd.f32 0.0, %v494
      %v496 = vpop.f32.mrb[0].mxu0
      %497 = vmatprep.mubr.bf16.mxu0 0
      %498 = vmatmul.mubr.bf16.gmra.mrb[0].mxu0 %v446
      %v499 = vpop.f32.mrb[0].mxu0
      %v500 = vadd.f32 0.0, %v499
      %v501 = vpop.f32.mrb[0].mxu0
      %v502 = vpop.f32.mrb[0].mxu0
      %v503 = vadd.f32 0.0, %v502
      %v504 = vpop.f32.mrb[0].mxu0
      %505 = vmatprep.mubr.bf16.mxu0 0
      %506 = vmatmul.mubr.bf16.gmra.mrb[0].mxu0 %v449
      %v507 = vpop.f32.mrb[0].mxu0
      %v508 = vadd.f32 0.0, %v507
      %v509 = vpop.f32.mrb[0].mxu0
      %v510 = vpop.f32.mrb[0].mxu0
      %v511 = vadd.f32 0.0, %v510
      %v512 = vpop.f32.mrb[0].mxu0
      %513 = vmatprep.mubr.bf16.mxu0 0
      %514 = vmatmul.mubr.bf16.gmra.mrb[0].mxu0 %v452
      %v515 = vpop.f32.mrb[0].mxu0
      %v516 = vadd.f32 0.0, %v515
      %v517 = vpop.f32.mrb[0].mxu0
      %v518 = vpop.f32.mrb[0].mxu0
      %v519 = vadd.f32 0.0, %v518
      %v520 = vpop.f32.mrb[0].mxu0
      %521 = vmatprep.mubr.bf16.mxu0 0
      %522 = vmatmul.mubr.bf16.gmra.mrb[0].mxu0 %v455
      %v523 = vpop.f32.mrb[0].mxu0
      %v524 = vadd.f32 0.0, %v523
      %v525 = vpop.f32.mrb[0].mxu0
      %v526 = vpop.f32.mrb[0].mxu0
      %v527 = vadd.f32 0.0, %v526
      %v528 = vpop.f32.mrb[0].mxu0
      %529 = vdwg.mxu0
      %v530 = vadd.f32 %v371, %v492
      %v531 = vadd.f32 %v374, %v495
      %v532 = vadd.f32 %v379, %v500
      %v533 = vadd.f32 %v382, %v503
      %v534 = vadd.f32 %v387, %v508
      %v535 = vadd.f32 %v390, %v511
      %v536 = vadd.f32 %v395, %v516
      %v537 = vadd.f32 %v398, %v519
      %v538 = vadd.f32 %v403, %v524
      %v539 = vadd.f32 %v406, %v527
      %s540 = scalar_lea.vmem %s1, 24
      %v541 = vld [vmem:[%s540] sm:$0xf]
      %v542 = vld [vmem:[%s540 + $0x4] sm:$0xf]
      %vm543 = vsmask.f32 6400
      %v545 = vshrl.u32 %v409, 16
      %v547 = vrot.slane %v545, 1
      %v548 = vshll.u32 %v409, 16
      %v550 = vrot.slane %v548, 2
      %v551 = vor.u32 %v547, %v550
      %v553 = vshrl.u32 %v410, 16
      %v555 = vrot.slane %v553, 1
      %v556 = vshll.u32 %v410, 16
      %v558 = vrot.slane %v556, 2
      %v559 = vor.u32 %v555, %v558
      %v560 = vsel %vm543, %v551, %v559
      %v562 = vshrl.u32 %v411, 16
      %v564 = vrot.slane %v562, 1
      %v565 = vshll.u32 %v411, 16
      %v567 = vrot.slane %v565, 2
      %v568 = vor.u32 %v564, %v567
      %v569 = vsel %vm543, %v559, %v568
      %v571 = vshrl.u32 %v412, 16
      %v573 = vrot.slane %v571, 1
      %v574 = vshll.u32 %v412, 16
      %v576 = vrot.slane %v574, 2
      %v577 = vor.u32 %v573, %v576
      %v578 = vsel %vm543, %v568, %v577
      %v580 = vshrl.u32 %v413, 16
      %v582 = vrot.slane %v580, 1
      %v583 = vshll.u32 %v413, 16
      %v585 = vrot.slane %v583, 2
      %v586 = vor.u32 %v582, %v585
      %v587 = vsel %vm543, %v577, %v586
      %v589 = vshrl.u32 %v414, 16
      %v591 = vrot.slane %v589, 1
      %v592 = vshll.u32 %v414, 16
      %v594 = vrot.slane %v592, 2
      %v595 = vor.u32 %v591, %v594
      %v596 = vsel %vm543, %v586, %v595
      %v599 = vunpack.c.l.b16 %v541
      %v600 = vunpack.c.l.b16 %v542
      %v601 = vpack.c.b16 %v600, %v599
      %v604 = vsel %vm231, %v560, 0
      %v607 = vsel %vm231, %v569, 0
      %v610 = vsel %vm231, %v578, 0
      %v613 = vsel %vm231, %v587, 0
      %v616 = vsel %vm231, %v596, 0
      %618 = vmatprep.subr.bf16.mxu0 0
      %619 = vmatpush1.bf16.msra.mxu0 %v601
      %620 = vmatprep.subr.bf16.mxu0 0
      %621 = vmatpush1.bf16.msra.mxu0 0
      %622 = vmatprep.subr.bf16.mxu0 0
      %623 = vmatpush1.bf16.msra.mxu0 0
      %624 = vmatprep.subr.bf16.mxu0 0
      %625 = vmatpush1.bf16.msra.mxu0 0
      %626 = vmatprep.subr.bf16.mxu0 0
      %627 = vmatpush1.bf16.msra.mxu0 0
      %628 = vmatprep.subr.bf16.mxu0 0
      %629 = vmatpush1.bf16.msra.mxu0 0
      %630 = vmatprep.subr.bf16.mxu0 0
      %631 = vmatpush1.bf16.msra.mxu0 0
      %632 = vmatprep.subr.bf16.mxu0 0
      %633 = vmatpush1.bf16.msra.mxu0 0
      %634 = vmatprep.subr.bf16.mxu0 0
      %635 = vmatpush1.bf16.msra.mxu0 0
      %636 = vmatprep.subr.bf16.mxu0 0
      %637 = vmatpush1.bf16.msra.mxu0 0
      %638 = vmatprep.subr.bf16.mxu0 0
      %639 = vmatpush1.bf16.msra.mxu0 0
      %640 = vmatprep.subr.bf16.mxu0 0
      %641 = vmatpush1.bf16.msra.mxu0 0
      %642 = vmatprep.subr.bf16.mxu0 0
      %643 = vmatpush1.bf16.msra.mxu0 0
      %644 = vmatprep.subr.bf16.mxu0 0
      %645 = vmatpush1.bf16.msra.mxu0 0
      %646 = vmatprep.subr.bf16.mxu0 0
      %647 = vmatpush1.bf16.msra.mxu0 0
      %648 = vmatprep.subr.bf16.mxu0 0
      %649 = vmatpush1.bf16.msra.mxu0 0
      %650 = vmatprep.mubr.bf16.mxu0 0
      %651 = vmatmul.mubr.bf16.gmra.mrb[0].mxu0 %v604
      %v652 = vpop.f32.mrb[0].mxu0
      %v653 = vadd.f32 0.0, %v652
      %v654 = vpop.f32.mrb[0].mxu0
      %v655 = vpop.f32.mrb[0].mxu0
      %v656 = vadd.f32 0.0, %v655
      %v657 = vpop.f32.mrb[0].mxu0
      %658 = vmatprep.mubr.bf16.mxu0 0
      %659 = vmatmul.mubr.bf16.gmra.mrb[0].mxu0 %v607
      %v660 = vpop.f32.mrb[0].mxu0
      %v661 = vadd.f32 0.0, %v660
      %v662 = vpop.f32.mrb[0].mxu0
      %v663 = vpop.f32.mrb[0].mxu0
      %v664 = vadd.f32 0.0, %v663
      %v665 = vpop.f32.mrb[0].mxu0
      %666 = vmatprep.mubr.bf16.mxu0 0
      %667 = vmatmul.mubr.bf16.gmra.mrb[0].mxu0 %v610
      %v668 = vpop.f32.mrb[0].mxu0
      %v669 = vadd.f32 0.0, %v668
      %v670 = vpop.f32.mrb[0].mxu0
      %v671 = vpop.f32.mrb[0].mxu0
      %v672 = vadd.f32 0.0, %v671
      %v673 = vpop.f32.mrb[0].mxu0
      %674 = vmatprep.mubr.bf16.mxu0 0
      %675 = vmatmul.mubr.bf16.gmra.mrb[0].mxu0 %v613
      %v676 = vpop.f32.mrb[0].mxu0
      %v677 = vadd.f32 0.0, %v676
      %v678 = vpop.f32.mrb[0].mxu0
      %v679 = vpop.f32.mrb[0].mxu0
      %v680 = vadd.f32 0.0, %v679
      %v681 = vpop.f32.mrb[0].mxu0
      %682 = vmatprep.mubr.bf16.mxu0 0
      %683 = vmatmul.mubr.bf16.gmra.mrb[0].mxu0 %v616
      %v684 = vpop.f32.mrb[0].mxu0
      %v685 = vadd.f32 0.0, %v684
      %v686 = vpop.f32.mrb[0].mxu0
      %v687 = vpop.f32.mrb[0].mxu0
      %v688 = vadd.f32 0.0, %v687
      %v689 = vpop.f32.mrb[0].mxu0
      %690 = vdwg.mxu0
      %v691 = vadd.f32 %v530, %v653
      %v692 = vadd.f32 %v531, %v656
      %v693 = vadd.f32 %v532, %v661
      %v694 = vadd.f32 %v533, %v664
      %v695 = vadd.f32 %v534, %v669
      %v696 = vadd.f32 %v535, %v672
      %v697 = vadd.f32 %v536, %v677
      %v698 = vadd.f32 %v537, %v680
      %v699 = vadd.f32 %v538, %v685
      %v700 = vadd.f32 %v539, %v688
      %vm701 = vcmp.ge.f32.partialorder %v691, 0.0
      %vm702 = vcmp.ge.f32.partialorder %v692, 0.0
      %vm703 = vcmp.ge.f32.partialorder %v693, 0.0
      %vm704 = vcmp.ge.f32.partialorder %v694, 0.0
      %vm705 = vcmp.ge.f32.partialorder %v695, 0.0
      %vm706 = vcmp.ge.f32.partialorder %v696, 0.0
      %vm707 = vcmp.ge.f32.partialorder %v697, 0.0
      %vm708 = vcmp.ge.f32.partialorder %v698, 0.0
      %vm709 = vcmp.ge.f32.partialorder %v699, 0.0
      %vm710 = vcmp.ge.f32.partialorder %v700, 0.0
      %v711 = vmul.f32 %v691, 0.2
      %v712 = vmul.f32 %v692, 0.2
      %v713 = vmul.f32 %v693, 0.2
      %v714 = vmul.f32 %v694, 0.2
      %v715 = vmul.f32 %v695, 0.2
      %v716 = vmul.f32 %v696, 0.2
      %v717 = vmul.f32 %v697, 0.2
      %v718 = vmul.f32 %v698, 0.2
      %v719 = vmul.f32 %v699, 0.2
      %v720 = vmul.f32 %v700, 0.2
      %v721 = vsel %vm701, %v691, %v711
      %v722 = vsel %vm702, %v692, %v712
      %v723 = vsel %vm703, %v693, %v713
      %v724 = vsel %vm704, %v694, %v714
      %v725 = vsel %vm705, %v695, %v715
      %v726 = vsel %vm706, %v696, %v716
      %v727 = vsel %vm707, %v697, %v717
      %v728 = vsel %vm708, %v698, %v718
      %v729 = vsel %vm709, %v699, %v719
      %v730 = vsel %vm710, %v700, %v720
      %v731 = vlaneseq
      %v732 = vshrl.u32 %v731, 7
      %v733 = vadd.s32 %v732, 8
      %v734 = vadd.s32 %v732, 16
      %v735 = vadd.s32 %v732, 24
      %v736 = vadd.s32 %v732, 32
      %v737 = vadd.s32 %v732, 40
      %v738 = vadd.s32 %v732, 48
      %v739 = vadd.s32 %v732, 56
      %v740 = vadd.s32 %v732, 64
      %v741 = vadd.s32 %v732, 72
      %vm742 = vcmp.lt.s32.totalorder %v732, 0
      %v743 = vsub.s32 0, %v732
      %v744 = vsel %vm742, %v743, %v732
      %v745 = vmul.u32.u64.compose %v744, 3435973837
      %v746 = vextract.low.u32 %v745
      %v747 = vextract.high.u32 %v745
      %v748 = vshrl.u32 %v747, 3
      %v749 = vmul.u32 %v748, 10
      %v750 = vsub.s32 %v744, %v749
      %v751 = vsub.s32 0, %v750
      %v752 = vsel %vm742, %v751, %v750
      %vm753 = vcmp.lt.s32.totalorder %v733, 0
      %v754 = vsub.s32 0, %v733
      %v755 = vsel %vm753, %v754, %v733
      %v756 = vmul.u32.u64.compose %v755, 3435973837
      %v757 = vextract.low.u32 %v756
      %v758 = vextract.high.u32 %v756
      %v759 = vshrl.u32 %v758, 3
      %v760 = vmul.u32 %v759, 10
      %v761 = vsub.s32 %v755, %v760
      %v762 = vsub.s32 0, %v761
      %v763 = vsel %vm753, %v762, %v761
      %vm764 = vcmp.lt.s32.totalorder %v734, 0
      %v765 = vsub.s32 0, %v734
      %v766 = vsel %vm764, %v765, %v734
      %v767 = vmul.u32.u64.compose %v766, 3435973837
      %v768 = vextract.low.u32 %v767
      %v769 = vextract.high.u32 %v767
      %v770 = vshrl.u32 %v769, 3
      %v771 = vmul.u32 %v770, 10
      %v772 = vsub.s32 %v766, %v771
      %v773 = vsub.s32 0, %v772
      %v774 = vsel %vm764, %v773, %v772
      %vm775 = vcmp.lt.s32.totalorder %v735, 0
      %v776 = vsub.s32 0, %v735
      %v777 = vsel %vm775, %v776, %v735
      %v778 = vmul.u32.u64.compose %v777, 3435973837
      %v779 = vextract.low.u32 %v778
      %v780 = vextract.high.u32 %v778
      %v781 = vshrl.u32 %v780, 3
      %v782 = vmul.u32 %v781, 10
      %v783 = vsub.s32 %v777, %v782
      %v784 = vsub.s32 0, %v783
      %v785 = vsel %vm775, %v784, %v783
      %vm786 = vcmp.lt.s32.totalorder %v736, 0
      %v787 = vsub.s32 0, %v736
      %v788 = vsel %vm786, %v787, %v736
      %v789 = vmul.u32.u64.compose %v788, 3435973837
      %v790 = vextract.low.u32 %v789
      %v791 = vextract.high.u32 %v789
      %v792 = vshrl.u32 %v791, 3
      %v793 = vmul.u32 %v792, 10
      %v794 = vsub.s32 %v788, %v793
      %v795 = vsub.s32 0, %v794
      %v796 = vsel %vm786, %v795, %v794
      %vm797 = vcmp.lt.s32.totalorder %v737, 0
      %v798 = vsub.s32 0, %v737
      %v799 = vsel %vm797, %v798, %v737
      %v800 = vmul.u32.u64.compose %v799, 3435973837
      %v801 = vextract.low.u32 %v800
      %v802 = vextract.high.u32 %v800
      %v803 = vshrl.u32 %v802, 3
      %v804 = vmul.u32 %v803, 10
      %v805 = vsub.s32 %v799, %v804
      %v806 = vsub.s32 0, %v805
      %v807 = vsel %vm797, %v806, %v805
      %vm808 = vcmp.lt.s32.totalorder %v738, 0
      %v809 = vsub.s32 0, %v738
      %v810 = vsel %vm808, %v809, %v738
      %v811 = vmul.u32.u64.compose %v810, 3435973837
      %v812 = vextract.low.u32 %v811
      %v813 = vextract.high.u32 %v811
      %v814 = vshrl.u32 %v813, 3
      %v815 = vmul.u32 %v814, 10
      %v816 = vsub.s32 %v810, %v815
      %v817 = vsub.s32 0, %v816
      %v818 = vsel %vm808, %v817, %v816
      %vm819 = vcmp.lt.s32.totalorder %v739, 0
      %v820 = vsub.s32 0, %v739
      %v821 = vsel %vm819, %v820, %v739
      %v822 = vmul.u32.u64.compose %v821, 3435973837
      %v823 = vextract.low.u32 %v822
      %v824 = vextract.high.u32 %v822
      %v825 = vshrl.u32 %v824, 3
      %v826 = vmul.u32 %v825, 10
      %v827 = vsub.s32 %v821, %v826
      %v828 = vsub.s32 0, %v827
      %v829 = vsel %vm819, %v828, %v827
      %vm830 = vcmp.lt.s32.totalorder %v740, 0
      %v831 = vsub.s32 0, %v740
      %v832 = vsel %vm830, %v831, %v740
      %v833 = vmul.u32.u64.compose %v832, 3435973837
      %v834 = vextract.low.u32 %v833
      %v835 = vextract.high.u32 %v833
      %v836 = vshrl.u32 %v835, 3
      %v837 = vmul.u32 %v836, 10
      %v838 = vsub.s32 %v832, %v837
      %v839 = vsub.s32 0, %v838
      %v840 = vsel %vm830, %v839, %v838
      %vm841 = vcmp.lt.s32.totalorder %v741, 0
      %v842 = vsub.s32 0, %v741
      %v843 = vsel %vm841, %v842, %v741
      %v844 = vmul.u32.u64.compose %v843, 3435973837
      %v845 = vextract.low.u32 %v844
      %v846 = vextract.high.u32 %v844
      %v847 = vshrl.u32 %v846, 3
      %v848 = vmul.u32 %v847, 10
      %v849 = vsub.s32 %v843, %v848
      %v850 = vsub.s32 0, %v849
      %v851 = vsel %vm841, %v850, %v849
      %vm852 = vcmp.ne.s32.totalorder %v752, 0
      %vm853 = vcmp.ne.s32.totalorder %v763, 0
      %vm854 = vcmp.ne.s32.totalorder %v774, 0
      %vm855 = vcmp.ne.s32.totalorder %v785, 0
      %vm856 = vcmp.ne.s32.totalorder %v796, 0
      %vm857 = vcmp.ne.s32.totalorder %v807, 0
      %vm858 = vcmp.ne.s32.totalorder %v818, 0
      %vm859 = vcmp.ne.s32.totalorder %v829, 0
      %vm860 = vcmp.ne.s32.totalorder %v840, 0
      %vm861 = vcmp.ne.s32.totalorder %v851, 0
      %vm862 = vcmp.lt.s32.totalorder %v752, 0
      %vm863 = vcmp.lt.s32.totalorder %v763, 0
      %vm864 = vcmp.lt.s32.totalorder %v774, 0
      %vm865 = vcmp.lt.s32.totalorder %v785, 0
      %vm866 = vcmp.lt.s32.totalorder %v796, 0
      %vm867 = vcmp.lt.s32.totalorder %v807, 0
      %vm868 = vcmp.lt.s32.totalorder %v818, 0
      %vm869 = vcmp.lt.s32.totalorder %v829, 0
      %vm870 = vcmp.lt.s32.totalorder %v840, 0
      %vm871 = vcmp.lt.s32.totalorder %v851, 0
      %vm872 = vmand %vm862, %vm852
      %vm873 = vmand %vm863, %vm853
      %vm874 = vmand %vm864, %vm854
      %vm875 = vmand %vm865, %vm855
      %vm876 = vmand %vm866, %vm856
      %vm877 = vmand %vm867, %vm857
      %vm878 = vmand %vm868, %vm858
      %vm879 = vmand %vm869, %vm859
      %vm880 = vmand %vm870, %vm860
      %vm881 = vmand %vm871, %vm861
      %v882 = vadd.s32 %v752, 10
      %v883 = vadd.s32 %v763, 10
      %v884 = vadd.s32 %v774, 10
      %v885 = vadd.s32 %v785, 10
      %v886 = vadd.s32 %v796, 10
      %v887 = vadd.s32 %v807, 10
      %v888 = vadd.s32 %v818, 10
      %v889 = vadd.s32 %v829, 10
      %v890 = vadd.s32 %v840, 10
      %v891 = vadd.s32 %v851, 10
      %v892 = vsel %vm872, %v882, %v752
      %v893 = vsel %vm873, %v883, %v763
      %v894 = vsel %vm874, %v884, %v774
      %v895 = vsel %vm875, %v885, %v785
      %v896 = vsel %vm876, %v886, %v796
      %v897 = vsel %vm877, %v887, %v807
      %v898 = vsel %vm878, %v888, %v818
      %v899 = vsel %vm879, %v889, %v829
      %v900 = vsel %vm880, %v890, %v840
      %v901 = vsel %vm881, %v891, %v851
      %vm902 = vcmp.lt.s32.totalorder %v892, 8
      %vm903 = vcmp.lt.s32.totalorder %v893, 8
      %vm904 = vcmp.lt.s32.totalorder %v894, 8
      %vm905 = vcmp.lt.s32.totalorder %v895, 8
      %vm906 = vcmp.lt.s32.totalorder %v896, 8
      %vm907 = vcmp.lt.s32.totalorder %v897, 8
      %vm908 = vcmp.lt.s32.totalorder %v898, 8
      %vm909 = vcmp.lt.s32.totalorder %v899, 8
      %vm910 = vcmp.lt.s32.totalorder %v900, 8
      %vm911 = vcmp.lt.s32.totalorder %v901, 8
      %v912 = vsel %vm902, %v721, 0.0
      %v913 = vsel %vm903, %v722, 0.0
      %v914 = vsel %vm904, %v723, 0.0
      %v915 = vsel %vm905, %v724, 0.0
      %v916 = vsel %vm906, %v725, 0.0
      %v917 = vsel %vm907, %v726, 0.0
      %v918 = vsel %vm908, %v727, 0.0
      %v919 = vsel %vm909, %v728, 0.0
      %v920 = vsel %vm910, %v729, 0.0
      %v921 = vsel %vm911, %v730, 0.0
      %v922 = vpack.c.bf16 %v913, %v912
      %v923 = vpack.c.bf16 %v915, %v914
      %v924 = vpack.c.bf16 %v917, %v916
      %v925 = vpack.c.bf16 %v919, %v918
      %v926 = vpack.c.bf16 %v921, %v920
      %v932 = vunpack.c.l.b16 %v922
      %v933 = vunpack.c.h.b16 %v922
      %v934 = vunpack.c.l.b16 %v923
      %v935 = vunpack.c.h.b16 %v923
      %v936 = vunpack.c.l.b16 %v924
      %v937 = vunpack.c.h.b16 %v924
      %v938 = vunpack.c.l.b16 %v925
      %v939 = vunpack.c.h.b16 %v925
      %v940 = vunpack.c.l.b16 %v926
      %v941 = vunpack.c.h.b16 %v926
      %v942 = vpack.c.b16 %v932, %v932
      %v943 = vpack.c.b16 %v933, %v933
      %v944 = vpack.c.b16 %v934, %v934
      %v945 = vpack.c.b16 %v935, %v935
      %v946 = vpack.c.b16 %v936, %v936
      %v947 = vpack.c.b16 %v937, %v937
      %v948 = vpack.c.b16 %v938, %v938
      %v949 = vpack.c.b16 %v939, %v939
      %v950 = vpack.c.b16 %v940, %v940
      %v951 = vpack.c.b16 %v941, %v941
      %962 = vst [vmem:[%s143] sm:$0xf] %v942
      %963 = vst [vmem:[%s143 + $0x4] sm:$0xf] %v943
      %964 = vst [vmem:[%s143 + $0x8] sm:$0xf] %v944
      %965 = vst [vmem:[%s143 + $0xc] sm:$0xf] %v945
      %966 = vst [vmem:[%s143 + $0x10] sm:$0xf] %v946
      %967 = vst [vmem:[%s143 + $0x14] sm:$0xf] %v947
      %968 = vst [vmem:[%s143 + $0x18] sm:$0xf] %v948
      %969 = vst [vmem:[%s143 + $0x1c] sm:$0xf] %v949
      %970 = vst [vmem:[%s143 + $0x20] sm:$0xf] %v950
      %971 = vst [vmem:[%s143 + $0x24] sm:$0xf] %v951
      %p972 = scmp.lt.s32.totalorder %s13, 1
      %s973 = scalar_select %p972, %s13, 1
      %s974 = smul.addr %s973, 10
      %s975 = smul.addr %s974, 4
      %s976 = scalar_lea.vmem %s2, %s975
      // Predicated region
      $region29: #{res_d_forward.2} parent=27 // pred_check
        %p977 = pneg %p78
      $region30: #{res_d_forward.2} parent=27 // pred_check_branch
        %979 = sbr.rel (%p977) target = $region32
      $region31: #{res_d_forward.2} parent=27 // pred_region
        _
      $region32: #{res_d_forward.2} parent=27 // pred_fallthru
        _
    $region28: #{res_d_forward.2} parent=5 // pred_fallthru
      _
    %p980 = scmp.le.s32.totalorder 2, %s8
    // Predicated region
    $region33: #{res_d_forward.2} parent=5 // pred_check
      %p981 = pneg %p980
    $region34: #{res_d_forward.2} parent=5 // pred_check_branch
      %983 = sbr.rel (%p981) target = $region36
    $region35: #{res_d_forward.2} parent=5 // pred_region
      %s984 = ssub.s32 %s8, 2
      // Predicated region
      $region37: #{res_d_forward.2} parent=35 // pred_check
        %p985 = pneg %p84
      $region38: #{res_d_forward.2} parent=35 // pred_check_branch
        %987 = sbr.rel (%p985) target = $region40
      $region39: #{res_d_forward.2} parent=35 // pred_region
        %p988 = scmp.lt.s32.totalorder %s14, 1
        %s989 = scalar_select %p988, %s14, 1
        %s990 = smul.addr %s989, 10
        %s991 = smul.addr %s990, 4
        %s992 = scalar_lea.vmem %s2, %s991
      $region40: #{res_d_forward.2} parent=35 // pred_fallthru
        _
    $region36: #{res_d_forward.2} parent=5 // pred_fallthru
      _
  $region6: #{res_d_forward.2} parent=0 // loop_footer
    %s12 = sadd.s32 1, %s8
  $region7: #{res_d_forward.2} parent=0 // loop_footer_branch
    %7 = sbr.rel target = $region3
  $region8: #{res_d_forward.2} parent=0 // loop_exit
    _

// kernel: res_d_forward.3
$region0: #{res_d_forward.3}
  #allocation0 [shape = 'u32[]', space=smem, size = 0x4, offset = 0x4, fixed_abs, tag = 'smem constant byte address 0x4 - core index']
  #allocation1 [shape = 'u32[144,128]{1,0:T(1,128)}', space=vmem, size = 0x12000, scoped, tag = 'internal scratch']
  #allocation2 [shape = 'f32[1]{0:T(128)S(6)}', space=smem, size = 0x200, scoped, tag = 'scoped memory for res_d_forward.3']
  %s0 = inlined_call_operand.<no memory space> [shape: f32[1], index: 0, kind: input, shape index: {}]
  %s1 = inlined_call_operand.vmem [shape: bf16[2,104,128], index: 1, kind: input, shape index: {}]
  %s2 = inlined_call_operand.vmem [shape: bf16[9,128,128], index: 2, kind: input, shape index: {}]
  %s3 = inlined_call_operand.vmem [shape: bf16[2,80,4], index: 3, kind: input, shape index: {}]
  %s4 = inlined_call_operand.vmem [shape: bf16[4,128], index: 4, kind: input, shape index: {}]
  %s5 = inlined_call_operand.vmem [shape: f32[1,128], index: 5, kind: input, shape index: {}]
  %s6 = inlined_call_operand.vmem [shape: f32[2,80,128], index: 6, kind: output, shape index: {}]
  %s7 = sld [smem:[#allocation0]]
  $region57: #{res_d_forward.3} parent=0
    _
  %s9 = ssub.s32 1, %s7
  %s10 = scalar_select 0, %s9, %s7
  %11 = sst [smem:[#allocation2]] %s0
  loop: start=0, step=1, limit=4
  $region2: #{res_d_forward.3} parent=0 // loop_pre_header
    _
  $region3: #{res_d_forward.3} parent=0 // loop_header
    %s13 = sphi 0, %s17
    %p14 = scmp.ge.s32.totalorder %s13, 4
    %s21 = sphi 0, %s21
    %s23 = sphi 0, %s21
    %s24 = sphi 0, %s23
    %s38 = sphi 0, %s24
    %s44 = sphi 0, %s46
    %s47 = sphi 0, %s44
    %s48 = sphi 0, %s47
    %s64 = sphi 0, %s48
    %s68 = sphi 0, %s68
    %s70 = sphi 0, %s68
    %s71 = sphi 0, %s70
    %s85 = sphi 0, %s71
    %s91 = sphi 0, %s93
    %s94 = sphi 0, %s91
    %s95 = sphi 0, %s94
    %s111 = sphi 0, %s95
    %s115 = sphi 0, %s115
    %s117 = sphi 0, %s115
    %s118 = sphi 0, %s117
    %s132 = sphi 0, %s118
    %s136 = sphi 0, %s136
    %s138 = sphi 0, %s136
    %s139 = sphi 0, %s138
    %s153 = sphi 0, %s139
    %s159 = sphi 0, %s161
    %s162 = sphi 0, %s159
    %s163 = sphi 0, %s162
    %s179 = sphi 0, %s163
  $region4: #{res_d_forward.3} parent=0 // loop_header_branch
    %16 = sbr.rel (%p14) target = $region8
  $region5: #{res_d_forward.3} parent=0 // loop_body
    %s18 = ssub.s32 %s13, 1
    %s19 = ssub.s32 %s13, 2
    %s20 = sadd.s32 %s13, 1
    %s22 = sadd.s32 %s21, 1
    %p25 = scmp.eq.s32.totalorder %s13, 1
    %p26 = scmp.ne.s32.totalorder %s21, %s23
    %p27 = scmp.eq.s32.totalorder %s13, 0
    %p28 = por %p26, %p27
    %p29 = scmp.ne.s32.totalorder %s21, %s23
    %p30 = scmp.eq.s32.totalorder %s18, 1
    %p31 = por %p29, %p30
    %p32 = scmp.ne.s32.totalorder %s23, %s24
    %p33 = scmp.eq.s32.totalorder %s18, 0
    %p34 = por %p32, %p33
    %p35 = scmp.ne.s32.totalorder %s23, %s24
    %p36 = scmp.eq.s32.totalorder %s19, 1
    %p37 = por %p35, %p36
    %p39 = scmp.ne.s32.totalorder %s24, %s38
    %p40 = scmp.eq.s32.totalorder %s19, 0
    %p41 = por %p39, %p40
    %s42 = ssub.s32 %s13, %s20
    %p43 = scmp.eq.s32.totalorder %s42, 0
    %s45 = sadd.s32 %s44, 1
    %s46 = scalar_select %p43, %s44, %s45
    %p49 = pneg %p43
    %p50 = scmp.eq.s32.totalorder %s13, 1
    %p51 = por %p49, %p50
    %p52 = scmp.ne.s32.totalorder %s44, %s47
    %p53 = scmp.eq.s32.totalorder %s13, 0
    %p54 = por %p52, %p53
    %p55 = scmp.ne.s32.totalorder %s44, %s47
    %p56 = scmp.eq.s32.totalorder %s18, 1
    %p57 = por %p55, %p56
    %p58 = scmp.ne.s32.totalorder %s47, %s48
    %p59 = scmp.eq.s32.totalorder %s18, 0
    %p60 = por %p58, %p59
    %p61 = scmp.ne.s32.totalorder %s47, %s48
    %p62 = scmp.eq.s32.totalorder %s19, 1
    %p63 = por %p61, %p62
    %p65 = scmp.ne.s32.totalorder %s48, %s64
    %p66 = scmp.eq.s32.totalorder %s19, 0
    %p67 = por %p65, %p66
    %s69 = sadd.s32 %s68, 1
    %p72 = scmp.eq.s32.totalorder %s13, 1
    %p73 = scmp.ne.s32.totalorder %s68, %s70
    %p74 = scmp.eq.s32.totalorder %s13, 0
    %p75 = por %p73, %p74
    %p76 = scmp.ne.s32.totalorder %s68, %s70
    %p77 = scmp.eq.s32.totalorder %s18, 1
    %p78 = por %p76, %p77
    %p79 = scmp.ne.s32.totalorder %s70, %s71
    %p80 = scmp.eq.s32.totalorder %s18, 0
    %p81 = por %p79, %p80
    %p82 = scmp.ne.s32.totalorder %s70, %s71
    %p83 = scmp.eq.s32.totalorder %s19, 1
    %p84 = por %p82, %p83
    %p86 = scmp.ne.s32.totalorder %s71, %s85
    %p87 = scmp.eq.s32.totalorder %s19, 0
    %p88 = por %p86, %p87
    %s89 = ssub.s32 %s13, %s20
    %p90 = scmp.eq.s32.totalorder %s89, 0
    %s92 = sadd.s32 %s91, 1
    %s93 = scalar_select %p90, %s91, %s92
    %p96 = pneg %p90
    %p97 = scmp.eq.s32.totalorder %s13, 1
    %p98 = por %p96, %p97
    %p99 = scmp.ne.s32.totalorder %s91, %s94
    %p100 = scmp.eq.s32.totalorder %s13, 0
    %p101 = por %p99, %p100
    %p102 = scmp.ne.s32.totalorder %s91, %s94
    %p103 = scmp.eq.s32.totalorder %s18, 1
    %p104 = por %p102, %p103
    %p105 = scmp.ne.s32.totalorder %s94, %s95
    %p106 = scmp.eq.s32.totalorder %s18, 0
    %p107 = por %p105, %p106
    %p108 = scmp.ne.s32.totalorder %s94, %s95
    %p109 = scmp.eq.s32.totalorder %s19, 1
    %p110 = por %p108, %p109
    %p112 = scmp.ne.s32.totalorder %s95, %s111
    %p113 = scmp.eq.s32.totalorder %s19, 0
    %p114 = por %p112, %p113
    %s116 = sadd.s32 %s115, 1
    %p119 = scmp.eq.s32.totalorder %s13, 1
    %p120 = scmp.ne.s32.totalorder %s115, %s117
    %p121 = scmp.eq.s32.totalorder %s13, 0
    %p122 = por %p120, %p121
    %p123 = scmp.ne.s32.totalorder %s115, %s117
    %p124 = scmp.eq.s32.totalorder %s18, 1
    %p125 = por %p123, %p124
    %p126 = scmp.ne.s32.totalorder %s117, %s118
    %p127 = scmp.eq.s32.totalorder %s18, 0
    %p128 = por %p126, %p127
    %p129 = scmp.ne.s32.totalorder %s117, %s118
    %p130 = scmp.eq.s32.totalorder %s19, 1
    %p131 = por %p129, %p130
    %p133 = scmp.ne.s32.totalorder %s118, %s132
    %p134 = scmp.eq.s32.totalorder %s19, 0
    %p135 = por %p133, %p134
    %s137 = sadd.s32 %s136, 1
    %p140 = scmp.eq.s32.totalorder %s13, 1
    %p141 = scmp.ne.s32.totalorder %s136, %s138
    %p142 = scmp.eq.s32.totalorder %s13, 0
    %p143 = por %p141, %p142
    %p144 = scmp.ne.s32.totalorder %s136, %s138
    %p145 = scmp.eq.s32.totalorder %s18, 1
    %p146 = por %p144, %p145
    %p147 = scmp.ne.s32.totalorder %s138, %s139
    %p148 = scmp.eq.s32.totalorder %s18, 0
    %p149 = por %p147, %p148
    %p150 = scmp.ne.s32.totalorder %s138, %s139
    %p151 = scmp.eq.s32.totalorder %s19, 1
    %p152 = por %p150, %p151
    %p154 = scmp.ne.s32.totalorder %s139, %s153
    %p155 = scmp.eq.s32.totalorder %s19, 0
    %p156 = por %p154, %p155
    %s157 = ssub.s32 %s13, %s20
    %p158 = scmp.eq.s32.totalorder %s157, 0
    %s160 = sadd.s32 %s159, 1
    %s161 = scalar_select %p158, %s159, %s160
    %p164 = pneg %p158
    %p165 = scmp.eq.s32.totalorder %s13, 1
    %p166 = por %p164, %p165
    %p167 = scmp.ne.s32.totalorder %s159, %s162
    %p168 = scmp.eq.s32.totalorder %s13, 0
    %p169 = por %p167, %p168
    %p170 = scmp.ne.s32.totalorder %s159, %s162
    %p171 = scmp.eq.s32.totalorder %s18, 1
    %p172 = por %p170, %p171
    %p173 = scmp.ne.s32.totalorder %s162, %s163
    %p174 = scmp.eq.s32.totalorder %s18, 0
    %p175 = por %p173, %p174
    %p176 = scmp.ne.s32.totalorder %s162, %s163
    %p177 = scmp.eq.s32.totalorder %s19, 1
    %p178 = por %p176, %p177
    %p180 = scmp.ne.s32.totalorder %s163, %s179
    %p181 = scmp.eq.s32.totalorder %s19, 0
    %p182 = por %p180, %p181
    %p183 = scmp.le.s32.totalorder 1, %s13
    %p184 = scmp.lt.s32.totalorder %s13, 3
    %p185 = pnand %p183, %p184
    %p186 = pneg %p185
    // Predicated region
    $region9: #{res_d_forward.3} parent=5 // pred_check
      _
    $region10: #{res_d_forward.3} parent=5 // pred_check_branch
      %188 = sbr.rel (%p185) target = $region12
    $region11: #{res_d_forward.3} parent=5 // pred_region
      %s189 = ssub.s32 %s13, 1
      // Predicated region
      $region13: #{res_d_forward.3} parent=11 // pred_check
        %p190 = pneg %p34
      $region14: #{res_d_forward.3} parent=11 // pred_check_branch
        %192 = sbr.rel (%p190) target = $region16
      $region15: #{res_d_forward.3} parent=11 // pred_region
        _
      $region16: #{res_d_forward.3} parent=11 // pred_fallthru
        _
      // Predicated region
      $region17: #{res_d_forward.3} parent=11 // pred_check
        %p193 = pneg %p81
      $region18: #{res_d_forward.3} parent=11 // pred_check_branch
        %195 = sbr.rel (%p193) target = $region20
      $region19: #{res_d_forward.3} parent=11 // pred_region
        _
      $region20: #{res_d_forward.3} parent=11 // pred_fallthru
        _
      // Predicated region
      $region21: #{res_d_forward.3} parent=11 // pred_check
        %p196 = pneg %p128
      $region22: #{res_d_forward.3} parent=11 // pred_check_branch
        %198 = sbr.rel (%p196) target = $region24
      $region23: #{res_d_forward.3} parent=11 // pred_region
        _
      $region24: #{res_d_forward.3} parent=11 // pred_fallthru
        _
      // Predicated region
      $region25: #{res_d_forward.3} parent=11 // pred_check
        %p199 = pneg %p149
      $region26: #{res_d_forward.3} parent=11 // pred_check_branch
        %201 = sbr.rel (%p199) target = $region28
      $region27: #{res_d_forward.3} parent=11 // pred_region
        _
      $region28: #{res_d_forward.3} parent=11 // pred_fallthru
        _
    $region12: #{res_d_forward.3} parent=5 // pred_fallthru
      _
    %p202 = scmp.lt.s32.totalorder %s13, 2
    // Predicated region
    $region29: #{res_d_forward.3} parent=5 // pred_check
      %p203 = pneg %p202
    $region30: #{res_d_forward.3} parent=5 // pred_check_branch
      %205 = sbr.rel (%p203) target = $region32
    $region31: #{res_d_forward.3} parent=5 // pred_region
      // Predicated region
      $region33: #{res_d_forward.3} parent=31 // pred_check
        %p206 = pneg %p54
      $region34: #{res_d_forward.3} parent=31 // pred_check_branch
        %208 = sbr.rel (%p206) target = $region36
      $region35: #{res_d_forward.3} parent=31 // pred_region
        %p209 = scmp.lt.s32.totalorder %s13, 1
        %s210 = scalar_select %p209, %s13, 1
        %s211 = smul.addr %s210, 13
        %s212 = smul.addr %s211, 4
        %s213 = scalar_lea.vmem %s1, %s212
      $region36: #{res_d_forward.3} parent=31 // pred_fallthru
        _
      // Predicated region
      $region37: #{res_d_forward.3} parent=31 // pred_check
        %p214 = pneg %p101
      $region38: #{res_d_forward.3} parent=31 // pred_check_branch
        %216 = sbr.rel (%p214) target = $region40
      $region39: #{res_d_forward.3} parent=31 // pred_region
        %p217 = scmp.lt.s32.totalorder %s13, 1
        %s218 = scalar_select %p217, %s13, 1
        %s219 = smul.addr %s218, 10
        %s220 = smul.addr %s219, 4
        %s221 = scalar_lea.vmem %s3, %s220
      $region40: #{res_d_forward.3} parent=31 // pred_fallthru
        _
    $region32: #{res_d_forward.3} parent=5 // pred_fallthru
      _
    %p222 = scmp.le.s32.totalorder 1, %s13
    %p223 = scmp.lt.s32.totalorder %s13, 3
    %p224 = pnand %p222, %p223
    %p225 = pneg %p224
    // Predicated region
    $region41: #{res_d_forward.3} parent=5 // pred_check
      _
    $region42: #{res_d_forward.3} parent=5 // pred_check_branch
      %227 = sbr.rel (%p224) target = $region44
    $region43: #{res_d_forward.3} parent=5 // pred_region
      %s228 = ssub.s32 %s13, 1
      %p229 = pneg %p34
      %p230 = pneg %p31
      %p231 = scmp.lt.s32.totalorder %s18, 1
      %s232 = scalar_select %p231, %s18, 1
      %s233 = smul.addr %s232, 13
      %s234 = smul.addr %s233, 4
      %s235 = scalar_lea.vmem %s1, %s234
      %p236 = pneg %p60
      %p237 = pneg %p57
      %p238 = pneg %p81
      %p239 = pneg %p78
      %p240 = scmp.lt.s32.totalorder %s18, 1
      %s241 = scalar_select %p240, %s18, 1
      %s242 = smul.addr %s241, 10
      %s243 = smul.addr %s242, 4
      %s244 = scalar_lea.vmem %s3, %s243
      %p245 = pneg %p107
      %p246 = pneg %p104
      %p247 = pneg %p128
      %p248 = pneg %p125
      %p249 = pneg %p149
      %p250 = pneg %p146
      %p251 = pneg %p175
      %p252 = pneg %p172
      %p253 = scmp.lt.s32.totalorder %s18, 1
      %s254 = scalar_select %p253, %s18, 1
      %s255 = smul.addr %s254, 10
      %s256 = smul.addr %s255, 8
      %s257 = scalar_lea.vmem %s6, %s256
      %p258 = scmp.lt.s32.totalorder %s18, 1
      %s259 = scalar_select %p258, %s18, 1
      %s260 = smul.addr %s259, 13
      %s261 = smul.addr %s260, 4
      %s262 = scalar_lea.vmem %s1, %s261
      %p263 = scmp.lt.s32.totalorder %s18, 1
      %s264 = scalar_select %p263, %s18, 1
      %s265 = smul.addr %s264, 10
      %s266 = smul.addr %s265, 4
      %s267 = scalar_lea.vmem %s3, %s266
      %p268 = scmp.lt.s32.totalorder %s18, 1
      %s269 = scalar_select %p268, %s18, 1
      %s270 = smul.addr %s269, 10
      %s271 = smul.addr %s270, 8
      %s272 = scalar_lea.vmem %s6, %s271
      %v274 = vld [vmem:[%s262] sm:$0xf]
      %v275 = vld [vmem:[%s262 + $0x4] sm:$0xf]
      %v276 = vld [vmem:[%s262 + $0x8] sm:$0xf]
      %v277 = vld [vmem:[%s262 + $0xc] sm:$0xf]
      %v278 = vld [vmem:[%s262 + $0x10] sm:$0xf]
      %v279 = vld [vmem:[%s262 + $0x14] sm:$0xf]
      %v280 = vld [vmem:[%s262 + $0x18] sm:$0xf]
      %v281 = vld [vmem:[%s262 + $0x1c] sm:$0xf]
      %v282 = vld [vmem:[%s262 + $0x20] sm:$0xf]
      %v283 = vld [vmem:[%s262 + $0x24] sm:$0xf]
      %v284 = vld [vmem:[%s262 + $0x28] sm:$0xf]
      %v285 = vld [vmem:[%s262 + $0x2c] sm:$0xf]
      %v286 = vld [vmem:[%s262 + $0x30] sm:$0xf]
      %v287 = vunpack.c.l.bf16 %v274
      %v288 = vunpack.c.l.bf16 %v275
      %v289 = vunpack.c.l.bf16 %v276
      %v290 = vunpack.c.l.bf16 %v277
      %v291 = vunpack.c.l.bf16 %v278
      %v292 = vunpack.c.l.bf16 %v279
      %v293 = vunpack.c.l.bf16 %v280
      %v294 = vunpack.c.l.bf16 %v281
      %v295 = vunpack.c.l.bf16 %v282
      %v296 = vunpack.c.l.bf16 %v283
      %v297 = vunpack.c.l.bf16 %v284
      %v298 = vunpack.c.l.bf16 %v285
      %v299 = vunpack.c.l.bf16 %v286
      %v300 = vpack.c.bf16 %v288, %v287
      %v301 = vpack.c.bf16 %v290, %v289
      %v302 = vpack.c.bf16 %v292, %v291
      %v303 = vpack.c.bf16 %v294, %v293
      %v304 = vpack.c.bf16 %v296, %v295
      %v305 = vld [vmem:[%s2] sm:$0xf]
      %v306 = vld [vmem:[%s2 + $0x4] sm:$0xf]
      %v307 = vld [vmem:[%s2 + $0x8] sm:$0xf]
      %v308 = vld [vmem:[%s2 + $0xc] sm:$0xf]
      %v309 = vld [vmem:[%s2 + $0x10] sm:$0xf]
      %v310 = vld [vmem:[%s2 + $0x14] sm:$0xf]
      %v311 = vld [vmem:[%s2 + $0x18] sm:$0xf]
      %v312 = vld [vmem:[%s2 + $0x1c] sm:$0xf]
      %v313 = vld [vmem:[%s2 + $0x20] sm:$0xf]
      %v314 = vld [vmem:[%s2 + $0x24] sm:$0xf]
      %v315 = vld [vmem:[%s2 + $0x28] sm:$0xf]
      %v316 = vld [vmem:[%s2 + $0x2c] sm:$0xf]
      %v317 = vld [vmem:[%s2 + $0x30] sm:$0xf]
      %v318 = vld [vmem:[%s2 + $0x34] sm:$0xf]
      %v319 = vld [vmem:[%s2 + $0x38] sm:$0xf]
      %v320 = vld [vmem:[%s2 + $0x3c] sm:$0xf]
      %v321 = vpack.c.bf16 %v297, %v297
      %s322 = scalar_lea.vmem %s2, 64
      %v323 = vld [vmem:[%s322] sm:$0xf]
      %v324 = vld [vmem:[%s322 + $0x4] sm:$0xf]
      %v325 = vld [vmem:[%s322 + $0x8] sm:$0xf]
      %v326 = vld [vmem:[%s322 + $0xc] sm:$0xf]
      %v327 = vld [vmem:[%s322 + $0x10] sm:$0xf]
      %v328 = vld [vmem:[%s322 + $0x14] sm:$0xf]
      %v329 = vld [vmem:[%s322 + $0x18] sm:$0xf]
      %v330 = vld [vmem:[%s322 + $0x1c] sm:$0xf]
      %v331 = vld [vmem:[%s322 + $0x20] sm:$0xf]
      %v332 = vld [vmem:[%s322 + $0x24] sm:$0xf]
      %v333 = vld [vmem:[%s322 + $0x28] sm:$0xf]
      %v334 = vld [vmem:[%s322 + $0x2c] sm:$0xf]
      %v335 = vld [vmem:[%s322 + $0x30] sm:$0xf]
      %v336 = vld [vmem:[%s322 + $0x34] sm:$0xf]
      %v337 = vld [vmem:[%s322 + $0x38] sm:$0xf]
      %v338 = vld [vmem:[%s322 + $0x3c] sm:$0xf]
      %vm339 = vsmask.f32 7424
      %v341 = vshrl.u32 %v300, 16
      %v343 = vshll.u32 %v300, 16
      %v345 = vrot.slane %v343, 1
      %v346 = vor.u32 %v341, %v345
      %v348 = vshll.u32 %v301, 16
      %v350 = vrot.slane %v348, 1
      %v351 = vsel %vm339, %v346, %v350
      %v352 = vshrl.u32 %v301, 16
      %v354 = vor.u32 %v352, %v350
      %v356 = vshll.u32 %v302, 16
      %v358 = vrot.slane %v356, 1
      %v359 = vsel %vm339, %v354, %v358
      %v360 = vshrl.u32 %v302, 16
      %v362 = vor.u32 %v360, %v358
      %v364 = vshll.u32 %v303, 16
      %v366 = vrot.slane %v364, 1
      %v367 = vsel %vm339, %v362, %v366
      %v368 = vshrl.u32 %v303, 16
      %v370 = vor.u32 %v368, %v366
      %v372 = vshll.u32 %v304, 16
      %v374 = vrot.slane %v372, 1
      %v375 = vsel %vm339, %v370, %v374
      %v376 = vshrl.u32 %v304, 16
      %v378 = vor.u32 %v376, %v374
      %v380 = vshll.u32 %v321, 16
      %v382 = vrot.slane %v380, 1
      %v383 = vsel %vm339, %v378, %v382
      %v405 = vunpack.c.l.b16 %v323
      %v406 = vunpack.c.l.b16 %v324
      %v407 = vunpack.c.l.b16 %v325
      %v408 = vunpack.c.l.b16 %v326
      %v409 = vunpack.c.l.b16 %v327
      %v410 = vunpack.c.l.b16 %v328
      %v411 = vunpack.c.l.b16 %v329
      %v412 = vunpack.c.l.b16 %v330
      %v413 = vunpack.c.l.b16 %v331
      %v414 = vunpack.c.l.b16 %v332
      %v415 = vunpack.c.l.b16 %v333
      %v416 = vunpack.c.l.b16 %v334
      %v417 = vunpack.c.l.b16 %v335
      %v418 = vunpack.c.l.b16 %v336
      %v419 = vunpack.c.l.b16 %v337
      %v420 = vunpack.c.l.b16 %v338
      %v421 = vpack.c.b16 %v406, %v405
      %v422 = vpack.c.b16 %v408, %v407
      %v423 = vpack.c.b16 %v410, %v409
      %v424 = vpack.c.b16 %v412, %v411
      %v425 = vpack.c.b16 %v414, %v413
      %v426 = vpack.c.b16 %v416, %v415
      %v427 = vpack.c.b16 %v418, %v417
      %v428 = vpack.c.b16 %v420, %v419
      %437 = vmatprep.subr.bf16.mxu0 0
      %438 = vmatpush1.bf16.msra.mxu0 %v421
      %439 = vmatprep.subr.bf16.mxu0 0
      %440 = vmatpush1.bf16.msra.mxu0 %v422
      %441 = vmatprep.subr.bf16.mxu0 0
      %442 = vmatpush1.bf16.msra.mxu0 %v423
      %443 = vmatprep.subr.bf16.mxu0 0
      %444 = vmatpush1.bf16.msra.mxu0 %v424
      %445 = vmatprep.subr.bf16.mxu0 0
      %446 = vmatpush1.bf16.msra.mxu0 %v425
      %447 = vmatprep.subr.bf16.mxu0 0
      %448 = vmatpush1.bf16.msra.mxu0 %v426
      %449 = vmatprep.subr.bf16.mxu0 0
      %450 = vmatpush1.bf16.msra.mxu0 %v427
      %451 = vmatprep.subr.bf16.mxu0 0
      %452 = vmatpush1.bf16.msra.mxu0 %v428
      %453 = vmatprep.subr.bf16.mxu0 0
      %454 = vmatpush1.bf16.msra.mxu0 0
      %455 = vmatprep.subr.bf16.mxu0 0
      %456 = vmatpush1.bf16.msra.mxu0 0
      %457 = vmatprep.subr.bf16.mxu0 0
      %458 = vmatpush1.bf16.msra.mxu0 0
      %459 = vmatprep.subr.bf16.mxu0 0
      %460 = vmatpush1.bf16.msra.mxu0 0
      %461 = vmatprep.subr.bf16.mxu0 0
      %462 = vmatpush1.bf16.msra.mxu0 0
      %463 = vmatprep.subr.bf16.mxu0 0
      %464 = vmatpush1.bf16.msra.mxu0 0
      %465 = vmatprep.subr.bf16.mxu0 0
      %466 = vmatpush1.bf16.msra.mxu0 0
      %467 = vmatprep.subr.bf16.mxu0 0
      %468 = vmatpush1.bf16.msra.mxu0 0
      %469 = vmatprep.mubr.bf16.mxu0 0
      %470 = vmatmul.mubr.bf16.gmra.mrb[0].mxu0 %v351
      %v471 = vpop.f32.mrb[0].mxu0
      %v472 = vadd.f32 0.0, %v471
      %v473 = vpop.f32.mrb[0].mxu0
      %v474 = vpop.f32.mrb[0].mxu0
      %v475 = vadd.f32 0.0, %v474
      %v476 = vpop.f32.mrb[0].mxu0
      %477 = vmatprep.mubr.bf16.mxu0 0
      %478 = vmatmul.mubr.bf16.gmra.mrb[0].mxu0 %v359
      %v479 = vpop.f32.mrb[0].mxu0
      %v480 = vadd.f32 0.0, %v479
      %v481 = vpop.f32.mrb[0].mxu0
      %v482 = vpop.f32.mrb[0].mxu0
      %v483 = vadd.f32 0.0, %v482
      %v484 = vpop.f32.mrb[0].mxu0
      %485 = vmatprep.mubr.bf16.mxu0 0
      %486 = vmatmul.mubr.bf16.gmra.mrb[0].mxu0 %v367
      %v487 = vpop.f32.mrb[0].mxu0
      %v488 = vadd.f32 0.0, %v487
      %v489 = vpop.f32.mrb[0].mxu0
      %v490 = vpop.f32.mrb[0].mxu0
      %v491 = vadd.f32 0.0, %v490
      %v492 = vpop.f32.mrb[0].mxu0
      %493 = vmatprep.mubr.bf16.mxu0 0
      %494 = vmatmul.mubr.bf16.gmra.mrb[0].mxu0 %v375
      %v495 = vpop.f32.mrb[0].mxu0
      %v496 = vadd.f32 0.0, %v495
      %v497 = vpop.f32.mrb[0].mxu0
      %v498 = vpop.f32.mrb[0].mxu0
      %v499 = vadd.f32 0.0, %v498
      %v500 = vpop.f32.mrb[0].mxu0
      %501 = vmatprep.mubr.bf16.mxu0 0
      %502 = vmatmul.mubr.bf16.gmra.mrb[0].mxu0 %v383
      %v503 = vpop.f32.mrb[0].mxu0
      %v504 = vadd.f32 0.0, %v503
      %v505 = vpop.f32.mrb[0].mxu0
      %v506 = vpop.f32.mrb[0].mxu0
      %v507 = vadd.f32 0.0, %v506
      %v508 = vpop.f32.mrb[0].mxu0
      %509 = vdwg.mxu0
      %v526 = vunpack.c.l.b16 %v305
      %v527 = vunpack.c.l.b16 %v306
      %v528 = vunpack.c.l.b16 %v307
      %v529 = vunpack.c.l.b16 %v308
      %v530 = vunpack.c.l.b16 %v309
      %v531 = vunpack.c.l.b16 %v310
      %v532 = vunpack.c.l.b16 %v311
      %v533 = vunpack.c.l.b16 %v312
      %v534 = vunpack.c.l.b16 %v313
      %v535 = vunpack.c.l.b16 %v314
      %v536 = vunpack.c.l.b16 %v315
      %v537 = vunpack.c.l.b16 %v316
      %v538 = vunpack.c.l.b16 %v317
      %v539 = vunpack.c.l.b16 %v318
      %v540 = vunpack.c.l.b16 %v319
      %v541 = vunpack.c.l.b16 %v320
      %v542 = vpack.c.b16 %v527, %v526
      %v543 = vpack.c.b16 %v529, %v528
      %v544 = vpack.c.b16 %v531, %v530
      %v545 = vpack.c.b16 %v533, %v532
      %v546 = vpack.c.b16 %v535, %v534
      %v547 = vpack.c.b16 %v537, %v536
      %v548 = vpack.c.b16 %v539, %v538
      %v549 = vpack.c.b16 %v541, %v540
      %558 = vmatprep.subr.bf16.mxu0 0
      %559 = vmatpush1.bf16.msra.mxu0 %v542
      %560 = vmatprep.subr.bf16.mxu0 0
      %561 = vmatpush1.bf16.msra.mxu0 %v543
      %562 = vmatprep.subr.bf16.mxu0 0
      %563 = vmatpush1.bf16.msra.mxu0 %v544
      %564 = vmatprep.subr.bf16.mxu0 0
      %565 = vmatpush1.bf16.msra.mxu0 %v545
      %566 = vmatprep.subr.bf16.mxu0 0
      %567 = vmatpush1.bf16.msra.mxu0 %v546
      %568 = vmatprep.subr.bf16.mxu0 0
      %569 = vmatpush1.bf16.msra.mxu0 %v547
      %570 = vmatprep.subr.bf16.mxu0 0
      %571 = vmatpush1.bf16.msra.mxu0 %v548
      %572 = vmatprep.subr.bf16.mxu0 0
      %573 = vmatpush1.bf16.msra.mxu0 %v549
      %574 = vmatprep.subr.bf16.mxu0 0
      %575 = vmatpush1.bf16.msra.mxu0 0
      %576 = vmatprep.subr.bf16.mxu0 0
      %577 = vmatpush1.bf16.msra.mxu0 0
      %578 = vmatprep.subr.bf16.mxu0 0
      %579 = vmatpush1.bf16.msra.mxu0 0
      %580 = vmatprep.subr.bf16.mxu0 0
      %581 = vmatpush1.bf16.msra.mxu0 0
      %582 = vmatprep.subr.bf16.mxu0 0
      %583 = vmatpush1.bf16.msra.mxu0 0
      %584 = vmatprep.subr.bf16.mxu0 0
      %585 = vmatpush1.bf16.msra.mxu0 0
      %586 = vmatprep.subr.bf16.mxu0 0
      %587 = vmatpush1.bf16.msra.mxu0 0
      %588 = vmatprep.subr.bf16.mxu0 0
      %589 = vmatpush1.bf16.msra.mxu0 0
      %590 = vmatprep.mubr.bf16.mxu0 0
      %591 = vmatmul.mubr.bf16.gmra.mrb[0].mxu0 %v300
      %v592 = vpop.f32.mrb[0].mxu0
      %v593 = vadd.f32 %v472, %v592
      %v594 = vpop.f32.mrb[0].mxu0
      %v595 = vpop.f32.mrb[0].mxu0
      %v596 = vadd.f32 %v475, %v595
      %v597 = vpop.f32.mrb[0].mxu0
      %598 = vmatprep.mubr.bf16.mxu0 0
      %599 = vmatmul.mubr.bf16.gmra.mrb[0].mxu0 %v301
      %v600 = vpop.f32.mrb[0].mxu0
      %v601 = vadd.f32 %v480, %v600
      %v602 = vpop.f32.mrb[0].mxu0
      %v603 = vpop.f32.mrb[0].mxu0
      %v604 = vadd.f32 %v483, %v603
      %v605 = vpop.f32.mrb[0].mxu0
      %606 = vmatprep.mubr.bf16.mxu0 0
      %607 = vmatmul.mubr.bf16.gmra.mrb[0].mxu0 %v302
      %v608 = vpop.f32.mrb[0].mxu0
      %v609 = vadd.f32 %v488, %v608
      %v610 = vpop.f32.mrb[0].mxu0
      %v611 = vpop.f32.mrb[0].mxu0
      %v612 = vadd.f32 %v491, %v611
      %v613 = vpop.f32.mrb[0].mxu0
      %614 = vmatprep.mubr.bf16.mxu0 0
      %615 = vmatmul.mubr.bf16.gmra.mrb[0].mxu0 %v303
      %v616 = vpop.f32.mrb[0].mxu0
      %v617 = vadd.f32 %v496, %v616
      %v618 = vpop.f32.mrb[0].mxu0
      %v619 = vpop.f32.mrb[0].mxu0
      %v620 = vadd.f32 %v499, %v619
      %v621 = vpop.f32.mrb[0].mxu0
      %622 = vmatprep.mubr.bf16.mxu0 0
      %623 = vmatmul.mubr.bf16.gmra.mrb[0].mxu0 %v304
      %v624 = vpop.f32.mrb[0].mxu0
      %v625 = vadd.f32 %v504, %v624
      %v626 = vpop.f32.mrb[0].mxu0
      %v627 = vpop.f32.mrb[0].mxu0
      %v628 = vadd.f32 %v507, %v627
      %v629 = vpop.f32.mrb[0].mxu0
      %630 = vdwg.mxu0
      %s631 = scalar_lea.vmem %s2, 128
      %v632 = vld [vmem:[%s631] sm:$0xf]
      %v633 = vld [vmem:[%s631 + $0x4] sm:$0xf]
      %v634 = vld [vmem:[%s631 + $0x8] sm:$0xf]
      %v635 = vld [vmem:[%s631 + $0xc] sm:$0xf]
      %v636 = vld [vmem:[%s631 + $0x10] sm:$0xf]
      %v637 = vld [vmem:[%s631 + $0x14] sm:$0xf]
      %v638 = vld [vmem:[%s631 + $0x18] sm:$0xf]
      %v639 = vld [vmem:[%s631 + $0x1c] sm:$0xf]
      %v640 = vld [vmem:[%s631 + $0x20] sm:$0xf]
      %v641 = vld [vmem:[%s631 + $0x24] sm:$0xf]
      %v642 = vld [vmem:[%s631 + $0x28] sm:$0xf]
      %v643 = vld [vmem:[%s631 + $0x2c] sm:$0xf]
      %v644 = vld [vmem:[%s631 + $0x30] sm:$0xf]
      %v645 = vld [vmem:[%s631 + $0x34] sm:$0xf]
      %v646 = vld [vmem:[%s631 + $0x38] sm:$0xf]
      %v647 = vld [vmem:[%s631 + $0x3c] sm:$0xf]
      %vm654 = vcmask 1046528
      %v655 = vrot.slane %v300, 1
      %v656 = vrot.slane %v301, 1
      %v657 = vsel %vm654, %v655, %v656
      %v658 = vrot.slane %v302, 1
      %v659 = vsel %vm654, %v656, %v658
      %v660 = vrot.slane %v303, 1
      %v661 = vsel %vm654, %v658, %v660
      %v662 = vrot.slane %v304, 1
      %v663 = vsel %vm654, %v660, %v662
      %v664 = vrot.slane %v321, 1
      %v665 = vsel %vm654, %v662, %v664
      %v687 = vunpack.c.l.b16 %v632
      %v688 = vunpack.c.l.b16 %v633
      %v689 = vunpack.c.l.b16 %v634
      %v690 = vunpack.c.l.b16 %v635
      %v691 = vunpack.c.l.b16 %v636
      %v692 = vunpack.c.l.b16 %v637
      %v693 = vunpack.c.l.b16 %v638
      %v694 = vunpack.c.l.b16 %v639
      %v695 = vunpack.c.l.b16 %v640
      %v696 = vunpack.c.l.b16 %v641
      %v697 = vunpack.c.l.b16 %v642
      %v698 = vunpack.c.l.b16 %v643
      %v699 = vunpack.c.l.b16 %v644
      %v700 = vunpack.c.l.b16 %v645
      %v701 = vunpack.c.l.b16 %v646
      %v702 = vunpack.c.l.b16 %v647
      %v703 = vpack.c.b16 %v688, %v687
      %v704 = vpack.c.b16 %v690, %v689
      %v705 = vpack.c.b16 %v692, %v691
      %v706 = vpack.c.b16 %v694, %v693
      %v707 = vpack.c.b16 %v696, %v695
      %v708 = vpack.c.b16 %v698, %v697
      %v709 = vpack.c.b16 %v700, %v699
      %v710 = vpack.c.b16 %v702, %v701
      %719 = vmatprep.subr.bf16.mxu0 0
      %720 = vmatpush1.bf16.msra.mxu0 %v703
      %721 = vmatprep.subr.bf16.mxu0 0
      %722 = vmatpush1.bf16.msra.mxu0 %v704
      %723 = vmatprep.subr.bf16.mxu0 0
      %724 = vmatpush1.bf16.msra.mxu0 %v705
      %725 = vmatprep.subr.bf16.mxu0 0
      %726 = vmatpush1.bf16.msra.mxu0 %v706
      %727 = vmatprep.subr.bf16.mxu0 0
      %728 = vmatpush1.bf16.msra.mxu0 %v707
      %729 = vmatprep.subr.bf16.mxu0 0
      %730 = vmatpush1.bf16.msra.mxu0 %v708
      %731 = vmatprep.subr.bf16.mxu0 0
      %732 = vmatpush1.bf16.msra.mxu0 %v709
      %733 = vmatprep.subr.bf16.mxu0 0
      %734 = vmatpush1.bf16.msra.mxu0 %v710
      %735 = vmatprep.subr.bf16.mxu0 0
      %736 = vmatpush1.bf16.msra.mxu0 0
      %737 = vmatprep.subr.bf16.mxu0 0
      %738 = vmatpush1.bf16.msra.mxu0 0
      %739 = vmatprep.subr.bf16.mxu0 0
      %740 = vmatpush1.bf16.msra.mxu0 0
      %741 = vmatprep.subr.bf16.mxu0 0
      %742 = vmatpush1.bf16.msra.mxu0 0
      %743 = vmatprep.subr.bf16.mxu0 0
      %744 = vmatpush1.bf16.msra.mxu0 0
      %745 = vmatprep.subr.bf16.mxu0 0
      %746 = vmatpush1.bf16.msra.mxu0 0
      %747 = vmatprep.subr.bf16.mxu0 0
      %748 = vmatpush1.bf16.msra.mxu0 0
      %749 = vmatprep.subr.bf16.mxu0 0
      %750 = vmatpush1.bf16.msra.mxu0 0
      %751 = vmatprep.mubr.bf16.mxu0 0
      %752 = vmatmul.mubr.bf16.gmra.mrb[0].mxu0 %v657
      %v753 = vpop.f32.mrb[0].mxu0
      %v754 = vadd.f32 0.0, %v753
      %v755 = vpop.f32.mrb[0].mxu0
      %v756 = vpop.f32.mrb[0].mxu0
      %v757 = vadd.f32 0.0, %v756
      %v758 = vpop.f32.mrb[0].mxu0
      %759 = vmatprep.mubr.bf16.mxu0 0
      %760 = vmatmul.mubr.bf16.gmra.mrb[0].mxu0 %v659
      %v761 = vpop.f32.mrb[0].mxu0
      %v762 = vadd.f32 0.0, %v761
      %v763 = vpop.f32.mrb[0].mxu0
      %v764 = vpop.f32.mrb[0].mxu0
      %v765 = vadd.f32 0.0, %v764
      %v766 = vpop.f32.mrb[0].mxu0
      %767 = vmatprep.mubr.bf16.mxu0 0
      %768 = vmatmul.mubr.bf16.gmra.mrb[0].mxu0 %v661
      %v769 = vpop.f32.mrb[0].mxu0
      %v770 = vadd.f32 0.0, %v769
      %v771 = vpop.f32.mrb[0].mxu0
      %v772 = vpop.f32.mrb[0].mxu0
      %v773 = vadd.f32 0.0, %v772
      %v774 = vpop.f32.mrb[0].mxu0
      %775 = vmatprep.mubr.bf16.mxu0 0
      %776 = vmatmul.mubr.bf16.gmra.mrb[0].mxu0 %v663
      %v777 = vpop.f32.mrb[0].mxu0
      %v778 = vadd.f32 0.0, %v777
      %v779 = vpop.f32.mrb[0].mxu0
      %v780 = vpop.f32.mrb[0].mxu0
      %v781 = vadd.f32 0.0, %v780
      %v782 = vpop.f32.mrb[0].mxu0
      %783 = vmatprep.mubr.bf16.mxu0 0
      %784 = vmatmul.mubr.bf16.gmra.mrb[0].mxu0 %v665
      %v785 = vpop.f32.mrb[0].mxu0
      %v786 = vadd.f32 0.0, %v785
      %v787 = vpop.f32.mrb[0].mxu0
      %v788 = vpop.f32.mrb[0].mxu0
      %v789 = vadd.f32 0.0, %v788
      %v790 = vpop.f32.mrb[0].mxu0
      %791 = vdwg.mxu0
      %v792 = vadd.f32 %v593, %v754
      %v793 = vadd.f32 %v596, %v757
      %v794 = vadd.f32 %v601, %v762
      %v795 = vadd.f32 %v604, %v765
      %v796 = vadd.f32 %v609, %v770
      %v797 = vadd.f32 %v612, %v773
      %v798 = vadd.f32 %v617, %v778
      %v799 = vadd.f32 %v620, %v781
      %v800 = vadd.f32 %v625, %v786
      %v801 = vadd.f32 %v628, %v789
      %v802 = vpack.c.bf16 %v289, %v288
      %v803 = vpack.c.bf16 %v291, %v290
      %v804 = vpack.c.bf16 %v293, %v292
      %v805 = vpack.c.bf16 %v295, %v294
      %v806 = vpack.c.bf16 %v297, %v296
      %v807 = vpack.c.bf16 %v298, %v298
      %s808 = scalar_lea.vmem %s2, 192
      %v809 = vld [vmem:[%s808] sm:$0xf]
      %v810 = vld [vmem:[%s808 + $0x4] sm:$0xf]
      %v811 = vld [vmem:[%s808 + $0x8] sm:$0xf]
      %v812 = vld [vmem:[%s808 + $0xc] sm:$0xf]
      %v813 = vld [vmem:[%s808 + $0x10] sm:$0xf]
      %v814 = vld [vmem:[%s808 + $0x14] sm:$0xf]
      %v815 = vld [vmem:[%s808 + $0x18] sm:$0xf]
      %v816 = vld [vmem:[%s808 + $0x1c] sm:$0xf]
      %v817 = vld [vmem:[%s808 + $0x20] sm:$0xf]
      %v818 = vld [vmem:[%s808 + $0x24] sm:$0xf]
      %v819 = vld [vmem:[%s808 + $0x28] sm:$0xf]
      %v820 = vld [vmem:[%s808 + $0x2c] sm:$0xf]
      %v821 = vld [vmem:[%s808 + $0x30] sm:$0xf]
      %v822 = vld [vmem:[%s808 + $0x34] sm:$0xf]
      %v823 = vld [vmem:[%s808 + $0x38] sm:$0xf]
      %v824 = vld [vmem:[%s808 + $0x3c] sm:$0xf]
      %v831 = vrot.slane %v802, 1
      %v832 = vrot.slane %v803, 1
      %v833 = vsel %vm654, %v831, %v832
      %v834 = vrot.slane %v804, 1
      %v835 = vsel %vm654, %v832, %v834
      %v836 = vrot.slane %v805, 1
      %v837 = vsel %vm654, %v834, %v836
      %v838 = vrot.slane %v806, 1
      %v839 = vsel %vm654, %v836, %v838
      %v840 = vrot.slane %v807, 1
      %v841 = vsel %vm654, %v838, %v840
      %v863 = vunpack.c.l.b16 %v809
      %v864 = vunpack.c.l.b16 %v810
      %v865 = vunpack.c.l.b16 %v811
      %v866 = vunpack.c.l.b16 %v812
      %v867 = vunpack.c.l.b16 %v813
      %v868 = vunpack.c.l.b16 %v814
      %v869 = vunpack.c.l.b16 %v815
      %v870 = vunpack.c.l.b16 %v816
      %v871 = vunpack.c.l.b16 %v817
      %v872 = vunpack.c.l.b16 %v818
      %v873 = vunpack.c.l.b16 %v819
      %v874 = vunpack.c.l.b16 %v820
      %v875 = vunpack.c.l.b16 %v821
      %v876 = vunpack.c.l.b16 %v822
      %v877 = vunpack.c.l.b16 %v823
      %v878 = vunpack.c.l.b16 %v824
      %v879 = vpack.c.b16 %v864, %v863
      %v880 = vpack.c.b16 %v866, %v865
      %v881 = vpack.c.b16 %v868, %v867
      %v882 = vpack.c.b16 %v870, %v869
      %v883 = vpack.c.b16 %v872, %v871
      %v884 = vpack.c.b16 %v874, %v873
      %v885 = vpack.c.b16 %v876, %v875
      %v886 = vpack.c.b16 %v878, %v877
      %895 = vmatprep.subr.bf16.mxu0 0
      %896 = vmatpush1.bf16.msra.mxu0 %v879
      %897 = vmatprep.subr.bf16.mxu0 0
      %898 = vmatpush1.bf16.msra.mxu0 %v880
      %899 = vmatprep.subr.bf16.mxu0 0
      %900 = vmatpush1.bf16.msra.mxu0 %v881
      %901 = vmatprep.subr.bf16.mxu0 0
      %902 = vmatpush1.bf16.msra.mxu0 %v882
      %903 = vmatprep.subr.bf16.mxu0 0
      %904 = vmatpush1.bf16.msra.mxu0 %v883
      %905 = vmatprep.subr.bf16.mxu0 0
      %906 = vmatpush1.bf16.msra.mxu0 %v884
      %907 = vmatprep.subr.bf16.mxu0 0
      %908 = vmatpush1.bf16.msra.mxu0 %v885
      %909 = vmatprep.subr.bf16.mxu0 0
      %910 = vmatpush1.bf16.msra.mxu0 %v886
      %911 = vmatprep.subr.bf16.mxu0 0
      %912 = vmatpush1.bf16.msra.mxu0 0
      %913 = vmatprep.subr.bf16.mxu0 0
      %914 = vmatpush1.bf16.msra.mxu0 0
      %915 = vmatprep.subr.bf16.mxu0 0
      %916 = vmatpush1.bf16.msra.mxu0 0
      %917 = vmatprep.subr.bf16.mxu0 0
      %918 = vmatpush1.bf16.msra.mxu0 0
      %919 = vmatprep.subr.bf16.mxu0 0
      %920 = vmatpush1.bf16.msra.mxu0 0
      %921 = vmatprep.subr.bf16.mxu0 0
      %922 = vmatpush1.bf16.msra.mxu0 0
      %923 = vmatprep.subr.bf16.mxu0 0
      %924 = vmatpush1.bf16.msra.mxu0 0
      %925 = vmatprep.subr.bf16.mxu0 0
      %926 = vmatpush1.bf16.msra.mxu0 0
      %927 = vmatprep.mubr.bf16.mxu0 0
      %928 = vmatmul.mubr.bf16.gmra.mrb[0].mxu0 %v833
      %v929 = vpop.f32.mrb[0].mxu0
      %v930 = vadd.f32 0.0, %v929
      %v931 = vpop.f32.mrb[0].mxu0
      %v932 = vpop.f32.mrb[0].mxu0
      %v933 = vadd.f32 0.0, %v932
      %v934 = vpop.f32.mrb[0].mxu0
      %935 = vmatprep.mubr.bf16.mxu0 0
      %936 = vmatmul.mubr.bf16.gmra.mrb[0].mxu0 %v835
      %v937 = vpop.f32.mrb[0].mxu0
      %v938 = vadd.f32 0.0, %v937
      %v939 = vpop.f32.mrb[0].mxu0
      %v940 = vpop.f32.mrb[0].mxu0
      %v941 = vadd.f32 0.0, %v940
      %v942 = vpop.f32.mrb[0].mxu0
      %943 = vmatprep.mubr.bf16.mxu0 0
      %944 = vmatmul.mubr.bf16.gmra.mrb[0].mxu0 %v837
      %v945 = vpop.f32.mrb[0].mxu0
      %v946 = vadd.f32 0.0, %v945
      %v947 = vpop.f32.mrb[0].mxu0
      %v948 = vpop.f32.mrb[0].mxu0
      %v949 = vadd.f32 0.0, %v948
      %v950 = vpop.f32.mrb[0].mxu0
      %951 = vmatprep.mubr.bf16.mxu0 0
      %952 = vmatmul.mubr.bf16.gmra.mrb[0].mxu0 %v839
      %v953 = vpop.f32.mrb[0].mxu0
      %v954 = vadd.f32 0.0, %v953
      %v955 = vpop.f32.mrb[0].mxu0
      %v956 = vpop.f32.mrb[0].mxu0
      %v957 = vadd.f32 0.0, %v956
      %v958 = vpop.f32.mrb[0].mxu0
      %959 = vmatprep.mubr.bf16.mxu0 0
      %960 = vmatmul.mubr.bf16.gmra.mrb[0].mxu0 %v841
      %v961 = vpop.f32.mrb[0].mxu0
      %v962 = vadd.f32 0.0, %v961
      %v963 = vpop.f32.mrb[0].mxu0
      %v964 = vpop.f32.mrb[0].mxu0
      %v965 = vadd.f32 0.0, %v964
      %v966 = vpop.f32.mrb[0].mxu0
      %967 = vdwg.mxu0
      %v968 = vadd.f32 %v792, %v930
      %v969 = vadd.f32 %v793, %v933
      %v970 = vadd.f32 %v794, %v938
      %v971 = vadd.f32 %v795, %v941
      %v972 = vadd.f32 %v796, %v946
      %v973 = vadd.f32 %v797, %v949
      %v974 = vadd.f32 %v798, %v954
      %v975 = vadd.f32 %v799, %v957
      %v976 = vadd.f32 %v800, %v962
      %v977 = vadd.f32 %v801, %v965
      %s978 = scalar_lea.vmem %s2, 256
      %v979 = vld [vmem:[%s978] sm:$0xf]
      %v980 = vld [vmem:[%s978 + $0x4] sm:$0xf]
      %v981 = vld [vmem:[%s978 + $0x8] sm:$0xf]
      %v982 = vld [vmem:[%s978 + $0xc] sm:$0xf]
      %v983 = vld [vmem:[%s978 + $0x10] sm:$0xf]
      %v984 = vld [vmem:[%s978 + $0x14] sm:$0xf]
      %v985 = vld [vmem:[%s978 + $0x18] sm:$0xf]
      %v986 = vld [vmem:[%s978 + $0x1c] sm:$0xf]
      %v987 = vld [vmem:[%s978 + $0x20] sm:$0xf]
      %v988 = vld [vmem:[%s978 + $0x24] sm:$0xf]
      %v989 = vld [vmem:[%s978 + $0x28] sm:$0xf]
      %v990 = vld [vmem:[%s978 + $0x2c] sm:$0xf]
      %v991 = vld [vmem:[%s978 + $0x30] sm:$0xf]
      %v992 = vld [vmem:[%s978 + $0x34] sm:$0xf]
      %v993 = vld [vmem:[%s978 + $0x38] sm:$0xf]
      %v994 = vld [vmem:[%s978 + $0x3c] sm:$0xf]
      %vm995 = vsmask.f32 6400
      %v997 = vshrl.u32 %v802, 16
      %v999 = vrot.slane %v997, 1
      %v1000 = vshll.u32 %v802, 16
      %v1002 = vrot.slane %v1000, 2
      %v1003 = vor.u32 %v999, %v1002
      %v1005 = vshrl.u32 %v803, 16
      %v1007 = vrot.slane %v1005, 1
      %v1008 = vshll.u32 %v803, 16
      %v1010 = vrot.slane %v1008, 2
      %v1011 = vor.u32 %v1007, %v1010
      %v1012 = vsel %vm995, %v1003, %v1011
      %v1014 = vshrl.u32 %v804, 16
      %v1016 = vrot.slane %v1014, 1
      %v1017 = vshll.u32 %v804, 16
      %v1019 = vrot.slane %v1017, 2
      %v1020 = vor.u32 %v1016, %v1019
      %v1021 = vsel %vm995, %v1011, %v1020
      %v1023 = vshrl.u32 %v805, 16
      %v1025 = vrot.slane %v1023, 1
      %v1026 = vshll.u32 %v805, 16
      %v1028 = vrot.slane %v1026, 2
      %v1029 = vor.u32 %v1025, %v1028
      %v1030 = vsel %vm995, %v1020, %v1029
      %v1032 = vshrl.u32 %v806, 16
      %v1034 = vrot.slane %v1032, 1
      %v1035 = vshll.u32 %v806, 16
      %v1037 = vrot.slane %v1035, 2
      %v1038 = vor.u32 %v1034, %v1037
      %v1039 = vsel %vm995, %v1029, %v1038
      %v1041 = vshrl.u32 %v807, 16
      %v1043 = vrot.slane %v1041, 1
      %v1044 = vshll.u32 %v807, 16
      %v1046 = vrot.slane %v1044, 2
      %v1047 = vor.u32 %v1043, %v1046
      %v1048 = vsel %vm995, %v1038, %v1047
      %v1070 = vunpack.c.l.b16 %v979
      %v1071 = vunpack.c.l.b16 %v980
      %v1072 = vunpack.c.l.b16 %v981
      %v1073 = vunpack.c.l.b16 %v982
      %v1074 = vunpack.c.l.b16 %v983
      %v1075 = vunpack.c.l.b16 %v984
      %v1076 = vunpack.c.l.b16 %v985
      %v1077 = vunpack.c.l.b16 %v986
      %v1078 = vunpack.c.l.b16 %v987
      %v1079 = vunpack.c.l.b16 %v988
      %v1080 = vunpack.c.l.b16 %v989
      %v1081 = vunpack.c.l.b16 %v990
      %v1082 = vunpack.c.l.b16 %v991
      %v1083 = vunpack.c.l.b16 %v992
      %v1084 = vunpack.c.l.b16 %v993
      %v1085 = vunpack.c.l.b16 %v994
      %v1086 = vpack.c.b16 %v1071, %v1070
      %v1087 = vpack.c.b16 %v1073, %v1072
      %v1088 = vpack.c.b16 %v1075, %v1074
      %v1089 = vpack.c.b16 %v1077, %v1076
      %v1090 = vpack.c.b16 %v1079, %v1078
      %v1091 = vpack.c.b16 %v1081, %v1080
      %v1092 = vpack.c.b16 %v1083, %v1082
      %v1093 = vpack.c.b16 %v1085, %v1084
      %1102 = vmatprep.subr.bf16.mxu0 0
      %1103 = vmatpush1.bf16.msra.mxu0 %v1086
      %1104 = vmatprep.subr.bf16.mxu0 0
      %1105 = vmatpush1.bf16.msra.mxu0 %v1087
      %1106 = vmatprep.subr.bf16.mxu0 0
      %1107 = vmatpush1.bf16.msra.mxu0 %v1088
      %1108 = vmatprep.subr.bf16.mxu0 0
      %1109 = vmatpush1.bf16.msra.mxu0 %v1089
      %1110 = vmatprep.subr.bf16.mxu0 0
      %1111 = vmatpush1.bf16.msra.mxu0 %v1090
      %1112 = vmatprep.subr.bf16.mxu0 0
      %1113 = vmatpush1.bf16.msra.mxu0 %v1091
      %1114 = vmatprep.subr.bf16.mxu0 0
      %1115 = vmatpush1.bf16.msra.mxu0 %v1092
      %1116 = vmatprep.subr.bf16.mxu0 0
      %1117 = vmatpush1.bf16.msra.mxu0 %v1093
      %1118 = vmatprep.subr.bf16.mxu0 0
      %1119 = vmatpush1.bf16.msra.mxu0 0
      %1120 = vmatprep.subr.bf16.mxu0 0
      %1121 = vmatpush1.bf16.msra.mxu0 0
      %1122 = vmatprep.subr.bf16.mxu0 0
      %1123 = vmatpush1.bf16.msra.mxu0 0
      %1124 = vmatprep.subr.bf16.mxu0 0
      %1125 = vmatpush1.bf16.msra.mxu0 0
      %1126 = vmatprep.subr.bf16.mxu0 0
      %1127 = vmatpush1.bf16.msra.mxu0 0
      %1128 = vmatprep.subr.bf16.mxu0 0
      %1129 = vmatpush1.bf16.msra.mxu0 0
      %1130 = vmatprep.subr.bf16.mxu0 0
      %1131 = vmatpush1.bf16.msra.mxu0 0
      %1132 = vmatprep.subr.bf16.mxu0 0
      %1133 = vmatpush1.bf16.msra.mxu0 0
      %1134 = vmatprep.mubr.bf16.mxu0 0
      %1135 = vmatmul.mubr.bf16.gmra.mrb[0].mxu0 %v1012
      %v1136 = vpop.f32.mrb[0].mxu0
      %v1137 = vadd.f32 0.0, %v1136
      %v1138 = vpop.f32.mrb[0].mxu0
      %v1139 = vpop.f32.mrb[0].mxu0
      %v1140 = vadd.f32 0.0, %v1139
      %v1141 = vpop.f32.mrb[0].mxu0
      %1142 = vmatprep.mubr.bf16.mxu0 0
      %1143 = vmatmul.mubr.bf16.gmra.mrb[0].mxu0 %v1021
      %v1144 = vpop.f32.mrb[0].mxu0
      %v1145 = vadd.f32 0.0, %v1144
      %v1146 = vpop.f32.mrb[0].mxu0
      %v1147 = vpop.f32.mrb[0].mxu0
      %v1148 = vadd.f32 0.0, %v1147
      %v1149 = vpop.f32.mrb[0].mxu0
      %1150 = vmatprep.mubr.bf16.mxu0 0
      %1151 = vmatmul.mubr.bf16.gmra.mrb[0].mxu0 %v1030
      %v1152 = vpop.f32.mrb[0].mxu0
      %v1153 = vadd.f32 0.0, %v1152
      %v1154 = vpop.f32.mrb[0].mxu0
      %v1155 = vpop.f32.mrb[0].mxu0
      %v1156 = vadd.f32 0.0, %v1155
      %v1157 = vpop.f32.mrb[0].mxu0
      %1158 = vmatprep.mubr.bf16.mxu0 0
      %1159 = vmatmul.mubr.bf16.gmra.mrb[0].mxu0 %v1039
      %v1160 = vpop.f32.mrb[0].mxu0
      %v1161 = vadd.f32 0.0, %v1160
      %v1162 = vpop.f32.mrb[0].mxu0
      %v1163 = vpop.f32.mrb[0].mxu0
      %v1164 = vadd.f32 0.0, %v1163
      %v1165 = vpop.f32.mrb[0].mxu0
      %1166 = vmatprep.mubr.bf16.mxu0 0
      %1167 = vmatmul.mubr.bf16.gmra.mrb[0].mxu0 %v1048
      %v1168 = vpop.f32.mrb[0].mxu0
      %v1169 = vadd.f32 0.0, %v1168
      %v1170 = vpop.f32.mrb[0].mxu0
      %v1171 = vpop.f32.mrb[0].mxu0
      %v1172 = vadd.f32 0.0, %v1171
      %v1173 = vpop.f32.mrb[0].mxu0
      %1174 = vdwg.mxu0
      %v1175 = vadd.f32 %v968, %v1137
      %v1176 = vadd.f32 %v969, %v1140
      %v1177 = vadd.f32 %v970, %v1145
      %v1178 = vadd.f32 %v971, %v1148
      %v1179 = vadd.f32 %v972, %v1153
      %v1180 = vadd.f32 %v973, %v1156
      %v1181 = vadd.f32 %v974, %v1161
      %v1182 = vadd.f32 %v975, %v1164
      %v1183 = vadd.f32 %v976, %v1169
      %v1184 = vadd.f32 %v977, %v1172
      %s1185 = scalar_lea.vmem %s2, 320
      %v1186 = vld [vmem:[%s1185] sm:$0xf]
      %v1187 = vld [vmem:[%s1185 + $0x4] sm:$0xf]
      %v1188 = vld [vmem:[%s1185 + $0x8] sm:$0xf]
      %v1189 = vld [vmem:[%s1185 + $0xc] sm:$0xf]
      %v1190 = vld [vmem:[%s1185 + $0x10] sm:$0xf]
      %v1191 = vld [vmem:[%s1185 + $0x14] sm:$0xf]
      %v1192 = vld [vmem:[%s1185 + $0x18] sm:$0xf]
      %v1193 = vld [vmem:[%s1185 + $0x1c] sm:$0xf]
      %v1194 = vld [vmem:[%s1185 + $0x20] sm:$0xf]
      %v1195 = vld [vmem:[%s1185 + $0x24] sm:$0xf]
      %v1196 = vld [vmem:[%s1185 + $0x28] sm:$0xf]
      %v1197 = vld [vmem:[%s1185 + $0x2c] sm:$0xf]
      %v1198 = vld [vmem:[%s1185 + $0x30] sm:$0xf]
      %v1199 = vld [vmem:[%s1185 + $0x34] sm:$0xf]
      %v1200 = vld [vmem:[%s1185 + $0x38] sm:$0xf]
      %v1201 = vld [vmem:[%s1185 + $0x3c] sm:$0xf]
      %vm1202 = vcmask 1045504
      %v1203 = vrot.slane %v802, 2
      %v1204 = vrot.slane %v803, 2
      %v1205 = vsel %vm1202, %v1203, %v1204
      %v1206 = vrot.slane %v804, 2
      %v1207 = vsel %vm1202, %v1204, %v1206
      %v1208 = vrot.slane %v805, 2
      %v1209 = vsel %vm1202, %v1206, %v1208
      %v1210 = vrot.slane %v806, 2
      %v1211 = vsel %vm1202, %v1208, %v1210
      %v1212 = vrot.slane %v807, 2
      %v1213 = vsel %vm1202, %v1210, %v1212
      %v1235 = vunpack.c.l.b16 %v1186
      %v1236 = vunpack.c.l.b16 %v1187
      %v1237 = vunpack.c.l.b16 %v1188
      %v1238 = vunpack.c.l.b16 %v1189
      %v1239 = vunpack.c.l.b16 %v1190
      %v1240 = vunpack.c.l.b16 %v1191
      %v1241 = vunpack.c.l.b16 %v1192
      %v1242 = vunpack.c.l.b16 %v1193
      %v1243 = vunpack.c.l.b16 %v1194
      %v1244 = vunpack.c.l.b16 %v1195
      %v1245 = vunpack.c.l.b16 %v1196
      %v1246 = vunpack.c.l.b16 %v1197
      %v1247 = vunpack.c.l.b16 %v1198
      %v1248 = vunpack.c.l.b16 %v1199
      %v1249 = vunpack.c.l.b16 %v1200
      %v1250 = vunpack.c.l.b16 %v1201
      %v1251 = vpack.c.b16 %v1236, %v1235
      %v1252 = vpack.c.b16 %v1238, %v1237
      %v1253 = vpack.c.b16 %v1240, %v1239
      %v1254 = vpack.c.b16 %v1242, %v1241
      %v1255 = vpack.c.b16 %v1244, %v1243
      %v1256 = vpack.c.b16 %v1246, %v1245
      %v1257 = vpack.c.b16 %v1248, %v1247
      %v1258 = vpack.c.b16 %v1250, %v1249
      %1267 = vmatprep.subr.bf16.mxu0 0
      %1268 = vmatpush1.bf16.msra.mxu0 %v1251
      %1269 = vmatprep.subr.bf16.mxu0 0
      %1270 = vmatpush1.bf16.msra.mxu0 %v1252
      %1271 = vmatprep.subr.bf16.mxu0 0
      %1272 = vmatpush1.bf16.msra.mxu0 %v1253
      %1273 = vmatprep.subr.bf16.mxu0 0
      %1274 = vmatpush1.bf16.msra.mxu0 %v1254
      %1275 = vmatprep.subr.bf16.mxu0 0
      %1276 = vmatpush1.bf16.msra.mxu0 %v1255
      %1277 = vmatprep.subr.bf16.mxu0 0
      %1278 = vmatpush1.bf16.msra.mxu0 %v1256
      %1279 = vmatprep.subr.bf16.mxu0 0
      %1280 = vmatpush1.bf16.msra.mxu0 %v1257
      %1281 = vmatprep.subr.bf16.mxu0 0
      %1282 = vmatpush1.bf16.msra.mxu0 %v1258
      %1283 = vmatprep.subr.bf16.mxu0 0
      %1284 = vmatpush1.bf16.msra.mxu0 0
      %1285 = vmatprep.subr.bf16.mxu0 0
      %1286 = vmatpush1.bf16.msra.mxu0 0
      %1287 = vmatprep.subr.bf16.mxu0 0
      %1288 = vmatpush1.bf16.msra.mxu0 0
      %1289 = vmatprep.subr.bf16.mxu0 0
      %1290 = vmatpush1.bf16.msra.mxu0 0
      %1291 = vmatprep.subr.bf16.mxu0 0
      %1292 = vmatpush1.bf16.msra.mxu0 0
      %1293 = vmatprep.subr.bf16.mxu0 0
      %1294 = vmatpush1.bf16.msra.mxu0 0
      %1295 = vmatprep.subr.bf16.mxu0 0
      %1296 = vmatpush1.bf16.msra.mxu0 0
      %1297 = vmatprep.subr.bf16.mxu0 0
      %1298 = vmatpush1.bf16.msra.mxu0 0
      %1299 = vmatprep.mubr.bf16.mxu0 0
      %1300 = vmatmul.mubr.bf16.gmra.mrb[0].mxu0 %v1205
      %v1301 = vpop.f32.mrb[0].mxu0
      %v1302 = vadd.f32 0.0, %v1301
      %v1303 = vpop.f32.mrb[0].mxu0
      %v1304 = vpop.f32.mrb[0].mxu0
      %v1305 = vadd.f32 0.0, %v1304
      %v1306 = vpop.f32.mrb[0].mxu0
      %1307 = vmatprep.mubr.bf16.mxu0 0
      %1308 = vmatmul.mubr.bf16.gmra.mrb[0].mxu0 %v1207
      %v1309 = vpop.f32.mrb[0].mxu0
      %v1310 = vadd.f32 0.0, %v1309
      %v1311 = vpop.f32.mrb[0].mxu0
      %v1312 = vpop.f32.mrb[0].mxu0
      %v1313 = vadd.f32 0.0, %v1312
      %v1314 = vpop.f32.mrb[0].mxu0
      %1315 = vmatprep.mubr.bf16.mxu0 0
      %1316 = vmatmul.mubr.bf16.gmra.mrb[0].mxu0 %v1209
      %v1317 = vpop.f32.mrb[0].mxu0
      %v1318 = vadd.f32 0.0, %v1317
      %v1319 = vpop.f32.mrb[0].mxu0
      %v1320 = vpop.f32.mrb[0].mxu0
      %v1321 = vadd.f32 0.0, %v1320
      %v1322 = vpop.f32.mrb[0].mxu0
      %1323 = vmatprep.mubr.bf16.mxu0 0
      %1324 = vmatmul.mubr.bf16.gmra.mrb[0].mxu0 %v1211
      %v1325 = vpop.f32.mrb[0].mxu0
      %v1326 = vadd.f32 0.0, %v1325
      %v1327 = vpop.f32.mrb[0].mxu0
      %v1328 = vpop.f32.mrb[0].mxu0
      %v1329 = vadd.f32 0.0, %v1328
      %v1330 = vpop.f32.mrb[0].mxu0
      %1331 = vmatprep.mubr.bf16.mxu0 0
      %1332 = vmatmul.mubr.bf16.gmra.mrb[0].mxu0 %v1213
      %v1333 = vpop.f32.mrb[0].mxu0
      %v1334 = vadd.f32 0.0, %v1333
      %v1335 = vpop.f32.mrb[0].mxu0
      %v1336 = vpop.f32.mrb[0].mxu0
      %v1337 = vadd.f32 0.0, %v1336
      %v1338 = vpop.f32.mrb[0].mxu0
      %1339 = vdwg.mxu0
      %v1340 = vadd.f32 %v1175, %v1302
      %v1341 = vadd.f32 %v1176, %v1305
      %v1342 = vadd.f32 %v1177, %v1310
      %v1343 = vadd.f32 %v1178, %v1313
      %v1344 = vadd.f32 %v1179, %v1318
      %v1345 = vadd.f32 %v1180, %v1321
      %v1346 = vadd.f32 %v1181, %v1326
      %v1347 = vadd.f32 %v1182, %v1329
      %v1348 = vadd.f32 %v1183, %v1334
      %v1349 = vadd.f32 %v1184, %v1337
      %v1350 = vpack.c.bf16 %v298, %v297
      %v1351 = vpack.c.bf16 %v299, %v299
      %s1352 = scalar_lea.vmem %s2, 384
      %v1353 = vld [vmem:[%s1352] sm:$0xf]
      %v1354 = vld [vmem:[%s1352 + $0x4] sm:$0xf]
      %v1355 = vld [vmem:[%s1352 + $0x8] sm:$0xf]
      %v1356 = vld [vmem:[%s1352 + $0xc] sm:$0xf]
      %v1357 = vld [vmem:[%s1352 + $0x10] sm:$0xf]
      %v1358 = vld [vmem:[%s1352 + $0x14] sm:$0xf]
      %v1359 = vld [vmem:[%s1352 + $0x18] sm:$0xf]
      %v1360 = vld [vmem:[%s1352 + $0x1c] sm:$0xf]
      %v1361 = vld [vmem:[%s1352 + $0x20] sm:$0xf]
      %v1362 = vld [vmem:[%s1352 + $0x24] sm:$0xf]
      %v1363 = vld [vmem:[%s1352 + $0x28] sm:$0xf]
      %v1364 = vld [vmem:[%s1352 + $0x2c] sm:$0xf]
      %v1365 = vld [vmem:[%s1352 + $0x30] sm:$0xf]
      %v1366 = vld [vmem:[%s1352 + $0x34] sm:$0xf]
      %v1367 = vld [vmem:[%s1352 + $0x38] sm:$0xf]
      %v1368 = vld [vmem:[%s1352 + $0x3c] sm:$0xf]
      %v1371 = vrot.slane %v301, 2
      %v1372 = vrot.slane %v302, 2
      %v1373 = vsel %vm1202, %v1371, %v1372
      %v1374 = vrot.slane %v303, 2
      %v1375 = vsel %vm1202, %v1372, %v1374
      %v1376 = vrot.slane %v304, 2
      %v1377 = vsel %vm1202, %v1374, %v1376
      %v1378 = vrot.slane %v1350, 2
      %v1379 = vsel %vm1202, %v1376, %v1378
      %v1380 = vrot.slane %v1351, 2
      %v1381 = vsel %vm1202, %v1378, %v1380
      %v1403 = vunpack.c.l.b16 %v1353
      %v1404 = vunpack.c.l.b16 %v1354
      %v1405 = vunpack.c.l.b16 %v1355
      %v1406 = vunpack.c.l.b16 %v1356
      %v1407 = vunpack.c.l.b16 %v1357
      %v1408 = vunpack.c.l.b16 %v1358
      %v1409 = vunpack.c.l.b16 %v1359
      %v1410 = vunpack.c.l.b16 %v1360
      %v1411 = vunpack.c.l.b16 %v1361
      %v1412 = vunpack.c.l.b16 %v1362
      %v1413 = vunpack.c.l.b16 %v1363
      %v1414 = vunpack.c.l.b16 %v1364
      %v1415 = vunpack.c.l.b16 %v1365
      %v1416 = vunpack.c.l.b16 %v1366
      %v1417 = vunpack.c.l.b16 %v1367
      %v1418 = vunpack.c.l.b16 %v1368
      %v1419 = vpack.c.b16 %v1404, %v1403
      %v1420 = vpack.c.b16 %v1406, %v1405
      %v1421 = vpack.c.b16 %v1408, %v1407
      %v1422 = vpack.c.b16 %v1410, %v1409
      %v1423 = vpack.c.b16 %v1412, %v1411
      %v1424 = vpack.c.b16 %v1414, %v1413
      %v1425 = vpack.c.b16 %v1416, %v1415
      %v1426 = vpack.c.b16 %v1418, %v1417
      %1435 = vmatprep.subr.bf16.mxu0 0
      %1436 = vmatpush1.bf16.msra.mxu0 %v1419
      %1437 = vmatprep.subr.bf16.mxu0 0
      %1438 = vmatpush1.bf16.msra.mxu0 %v1420
      %1439 = vmatprep.subr.bf16.mxu0 0
      %1440 = vmatpush1.bf16.msra.mxu0 %v1421
      %1441 = vmatprep.subr.bf16.mxu0 0
      %1442 = vmatpush1.bf16.msra.mxu0 %v1422
      %1443 = vmatprep.subr.bf16.mxu0 0
      %1444 = vmatpush1.bf16.msra.mxu0 %v1423
      %1445 = vmatprep.subr.bf16.mxu0 0
      %1446 = vmatpush1.bf16.msra.mxu0 %v1424
      %1447 = vmatprep.subr.bf16.mxu0 0
      %1448 = vmatpush1.bf16.msra.mxu0 %v1425
      %1449 = vmatprep.subr.bf16.mxu0 0
      %1450 = vmatpush1.bf16.msra.mxu0 %v1426
      %1451 = vmatprep.subr.bf16.mxu0 0
      %1452 = vmatpush1.bf16.msra.mxu0 0
      %1453 = vmatprep.subr.bf16.mxu0 0
      %1454 = vmatpush1.bf16.msra.mxu0 0
      %1455 = vmatprep.subr.bf16.mxu0 0
      %1456 = vmatpush1.bf16.msra.mxu0 0
      %1457 = vmatprep.subr.bf16.mxu0 0
      %1458 = vmatpush1.bf16.msra.mxu0 0
      %1459 = vmatprep.subr.bf16.mxu0 0
      %1460 = vmatpush1.bf16.msra.mxu0 0
      %1461 = vmatprep.subr.bf16.mxu0 0
      %1462 = vmatpush1.bf16.msra.mxu0 0
      %1463 = vmatprep.subr.bf16.mxu0 0
      %1464 = vmatpush1.bf16.msra.mxu0 0
      %1465 = vmatprep.subr.bf16.mxu0 0
      %1466 = vmatpush1.bf16.msra.mxu0 0
      %1467 = vmatprep.mubr.bf16.mxu0 0
      %1468 = vmatmul.mubr.bf16.gmra.mrb[0].mxu0 %v1373
      %v1469 = vpop.f32.mrb[0].mxu0
      %v1470 = vadd.f32 0.0, %v1469
      %v1471 = vpop.f32.mrb[0].mxu0
      %v1472 = vpop.f32.mrb[0].mxu0
      %v1473 = vadd.f32 0.0, %v1472
      %v1474 = vpop.f32.mrb[0].mxu0
      %1475 = vmatprep.mubr.bf16.mxu0 0
      %1476 = vmatmul.mubr.bf16.gmra.mrb[0].mxu0 %v1375
      %v1477 = vpop.f32.mrb[0].mxu0
      %v1478 = vadd.f32 0.0, %v1477
      %v1479 = vpop.f32.mrb[0].mxu0
      %v1480 = vpop.f32.mrb[0].mxu0
      %v1481 = vadd.f32 0.0, %v1480
      %v1482 = vpop.f32.mrb[0].mxu0
      %1483 = vmatprep.mubr.bf16.mxu0 0
      %1484 = vmatmul.mubr.bf16.gmra.mrb[0].mxu0 %v1377
      %v1485 = vpop.f32.mrb[0].mxu0
      %v1486 = vadd.f32 0.0, %v1485
      %v1487 = vpop.f32.mrb[0].mxu0
      %v1488 = vpop.f32.mrb[0].mxu0
      %v1489 = vadd.f32 0.0, %v1488
      %v1490 = vpop.f32.mrb[0].mxu0
      %1491 = vmatprep.mubr.bf16.mxu0 0
      %1492 = vmatmul.mubr.bf16.gmra.mrb[0].mxu0 %v1379
      %v1493 = vpop.f32.mrb[0].mxu0
      %v1494 = vadd.f32 0.0, %v1493
      %v1495 = vpop.f32.mrb[0].mxu0
      %v1496 = vpop.f32.mrb[0].mxu0
      %v1497 = vadd.f32 0.0, %v1496
      %v1498 = vpop.f32.mrb[0].mxu0
      %1499 = vmatprep.mubr.bf16.mxu0 0
      %1500 = vmatmul.mubr.bf16.gmra.mrb[0].mxu0 %v1381
      %v1501 = vpop.f32.mrb[0].mxu0
      %v1502 = vadd.f32 0.0, %v1501
      %v1503 = vpop.f32.mrb[0].mxu0
      %v1504 = vpop.f32.mrb[0].mxu0
      %v1505 = vadd.f32 0.0, %v1504
      %v1506 = vpop.f32.mrb[0].mxu0
      %1507 = vdwg.mxu0
      %v1508 = vadd.f32 %v1340, %v1470
      %v1509 = vadd.f32 %v1341, %v1473
      %v1510 = vadd.f32 %v1342, %v1478
      %v1511 = vadd.f32 %v1343, %v1481
      %v1512 = vadd.f32 %v1344, %v1486
      %v1513 = vadd.f32 %v1345, %v1489
      %v1514 = vadd.f32 %v1346, %v1494
      %v1515 = vadd.f32 %v1347, %v1497
      %v1516 = vadd.f32 %v1348, %v1502
      %v1517 = vadd.f32 %v1349, %v1505
      %s1518 = scalar_lea.vmem %s2, 448
      %v1519 = vld [vmem:[%s1518] sm:$0xf]
      %v1520 = vld [vmem:[%s1518 + $0x4] sm:$0xf]
      %v1521 = vld [vmem:[%s1518 + $0x8] sm:$0xf]
      %v1522 = vld [vmem:[%s1518 + $0xc] sm:$0xf]
      %v1523 = vld [vmem:[%s1518 + $0x10] sm:$0xf]
      %v1524 = vld [vmem:[%s1518 + $0x14] sm:$0xf]
      %v1525 = vld [vmem:[%s1518 + $0x18] sm:$0xf]
      %v1526 = vld [vmem:[%s1518 + $0x1c] sm:$0xf]
      %v1527 = vld [vmem:[%s1518 + $0x20] sm:$0xf]
      %v1528 = vld [vmem:[%s1518 + $0x24] sm:$0xf]
      %v1529 = vld [vmem:[%s1518 + $0x28] sm:$0xf]
      %v1530 = vld [vmem:[%s1518 + $0x2c] sm:$0xf]
      %v1531 = vld [vmem:[%s1518 + $0x30] sm:$0xf]
      %v1532 = vld [vmem:[%s1518 + $0x34] sm:$0xf]
      %v1533 = vld [vmem:[%s1518 + $0x38] sm:$0xf]
      %v1534 = vld [vmem:[%s1518 + $0x3c] sm:$0xf]
      %vm1535 = vsmask.f32 5376
      %v1536 = vrot.slane %v352, 2
      %v1537 = vrot.slane %v348, 3
      %v1538 = vor.u32 %v1536, %v1537
      %v1539 = vrot.slane %v360, 2
      %v1540 = vrot.slane %v356, 3
      %v1541 = vor.u32 %v1539, %v1540
      %v1542 = vsel %vm1535, %v1538, %v1541
      %v1543 = vrot.slane %v368, 2
      %v1544 = vrot.slane %v364, 3
      %v1545 = vor.u32 %v1543, %v1544
      %v1546 = vsel %vm1535, %v1541, %v1545
      %v1547 = vrot.slane %v376, 2
      %v1548 = vrot.slane %v372, 3
      %v1549 = vor.u32 %v1547, %v1548
      %v1550 = vsel %vm1535, %v1545, %v1549
      %v1552 = vshrl.u32 %v1350, 16
      %v1554 = vrot.slane %v1552, 2
      %v1555 = vshll.u32 %v1350, 16
      %v1557 = vrot.slane %v1555, 3
      %v1558 = vor.u32 %v1554, %v1557
      %v1559 = vsel %vm1535, %v1549, %v1558
      %v1561 = vshrl.u32 %v1351, 16
      %v1563 = vrot.slane %v1561, 2
      %v1564 = vshll.u32 %v1351, 16
      %v1566 = vrot.slane %v1564, 3
      %v1567 = vor.u32 %v1563, %v1566
      %v1568 = vsel %vm1535, %v1558, %v1567
      %v1590 = vunpack.c.l.b16 %v1519
      %v1591 = vunpack.c.l.b16 %v1520
      %v1592 = vunpack.c.l.b16 %v1521
      %v1593 = vunpack.c.l.b16 %v1522
      %v1594 = vunpack.c.l.b16 %v1523
      %v1595 = vunpack.c.l.b16 %v1524
      %v1596 = vunpack.c.l.b16 %v1525
      %v1597 = vunpack.c.l.b16 %v1526
      %v1598 = vunpack.c.l.b16 %v1527
      %v1599 = vunpack.c.l.b16 %v1528
      %v1600 = vunpack.c.l.b16 %v1529
      %v1601 = vunpack.c.l.b16 %v1530
      %v1602 = vunpack.c.l.b16 %v1531
      %v1603 = vunpack.c.l.b16 %v1532
      %v1604 = vunpack.c.l.b16 %v1533
      %v1605 = vunpack.c.l.b16 %v1534
      %v1606 = vpack.c.b16 %v1591, %v1590
      %v1607 = vpack.c.b16 %v1593, %v1592
      %v1608 = vpack.c.b16 %v1595, %v1594
      %v1609 = vpack.c.b16 %v1597, %v1596
      %v1610 = vpack.c.b16 %v1599, %v1598
      %v1611 = vpack.c.b16 %v1601, %v1600
      %v1612 = vpack.c.b16 %v1603, %v1602
      %v1613 = vpack.c.b16 %v1605, %v1604
      %1622 = vmatprep.subr.bf16.mxu0 0
      %1623 = vmatpush1.bf16.msra.mxu0 %v1606
      %1624 = vmatprep.subr.bf16.mxu0 0
      %1625 = vmatpush1.bf16.msra.mxu0 %v1607
      %1626 = vmatprep.subr.bf16.mxu0 0
      %1627 = vmatpush1.bf16.msra.mxu0 %v1608
      %1628 = vmatprep.subr.bf16.mxu0 0
      %1629 = vmatpush1.bf16.msra.mxu0 %v1609
      %1630 = vmatprep.subr.bf16.mxu0 0
      %1631 = vmatpush1.bf16.msra.mxu0 %v1610
      %1632 = vmatprep.subr.bf16.mxu0 0
      %1633 = vmatpush1.bf16.msra.mxu0 %v1611
      %1634 = vmatprep.subr.bf16.mxu0 0
      %1635 = vmatpush1.bf16.msra.mxu0 %v1612
      %1636 = vmatprep.subr.bf16.mxu0 0
      %1637 = vmatpush1.bf16.msra.mxu0 %v1613
      %1638 = vmatprep.subr.bf16.mxu0 0
      %1639 = vmatpush1.bf16.msra.mxu0 0
      %1640 = vmatprep.subr.bf16.mxu0 0
      %1641 = vmatpush1.bf16.msra.mxu0 0
      %1642 = vmatprep.subr.bf16.mxu0 0
      %1643 = vmatpush1.bf16.msra.mxu0 0
      %1644 = vmatprep.subr.bf16.mxu0 0
      %1645 = vmatpush1.bf16.msra.mxu0 0
      %1646 = vmatprep.subr.bf16.mxu0 0
      %1647 = vmatpush1.bf16.msra.mxu0 0
      %1648 = vmatprep.subr.bf16.mxu0 0
      %1649 = vmatpush1.bf16.msra.mxu0 0
      %1650 = vmatprep.subr.bf16.mxu0 0
      %1651 = vmatpush1.bf16.msra.mxu0 0
      %1652 = vmatprep.subr.bf16.mxu0 0
      %1653 = vmatpush1.bf16.msra.mxu0 0
      %1654 = vmatprep.mubr.bf16.mxu0 0
      %1655 = vmatmul.mubr.bf16.gmra.mrb[0].mxu0 %v1542
      %v1656 = vpop.f32.mrb[0].mxu0
      %v1657 = vadd.f32 0.0, %v1656
      %v1658 = vpop.f32.mrb[0].mxu0
      %v1659 = vpop.f32.mrb[0].mxu0
      %v1660 = vadd.f32 0.0, %v1659
      %v1661 = vpop.f32.mrb[0].mxu0
      %1662 = vmatprep.mubr.bf16.mxu0 0
      %1663 = vmatmul.mubr.bf16.gmra.mrb[0].mxu0 %v1546
      %v1664 = vpop.f32.mrb[0].mxu0
      %v1665 = vadd.f32 0.0, %v1664
      %v1666 = vpop.f32.mrb[0].mxu0
      %v1667 = vpop.f32.mrb[0].mxu0
      %v1668 = vadd.f32 0.0, %v1667
      %v1669 = vpop.f32.mrb[0].mxu0
      %1670 = vmatprep.mubr.bf16.mxu0 0
      %1671 = vmatmul.mubr.bf16.gmra.mrb[0].mxu0 %v1550
      %v1672 = vpop.f32.mrb[0].mxu0
      %v1673 = vadd.f32 0.0, %v1672
      %v1674 = vpop.f32.mrb[0].mxu0
      %v1675 = vpop.f32.mrb[0].mxu0
      %v1676 = vadd.f32 0.0, %v1675
      %v1677 = vpop.f32.mrb[0].mxu0
      %1678 = vmatprep.mubr.bf16.mxu0 0
      %1679 = vmatmul.mubr.bf16.gmra.mrb[0].mxu0 %v1559
      %v1680 = vpop.f32.mrb[0].mxu0
      %v1681 = vadd.f32 0.0, %v1680
      %v1682 = vpop.f32.mrb[0].mxu0
      %v1683 = vpop.f32.mrb[0].mxu0
      %v1684 = vadd.f32 0.0, %v1683
      %v1685 = vpop.f32.mrb[0].mxu0
      %1686 = vmatprep.mubr.bf16.mxu0 0
      %1687 = vmatmul.mubr.bf16.gmra.mrb[0].mxu0 %v1568
      %v1688 = vpop.f32.mrb[0].mxu0
      %v1689 = vadd.f32 0.0, %v1688
      %v1690 = vpop.f32.mrb[0].mxu0
      %v1691 = vpop.f32.mrb[0].mxu0
      %v1692 = vadd.f32 0.0, %v1691
      %v1693 = vpop.f32.mrb[0].mxu0
      %1694 = vdwg.mxu0
      %v1695 = vadd.f32 %v1508, %v1657
      %v1696 = vadd.f32 %v1509, %v1660
      %v1697 = vadd.f32 %v1510, %v1665
      %v1698 = vadd.f32 %v1511, %v1668
      %v1699 = vadd.f32 %v1512, %v1673
      %v1700 = vadd.f32 %v1513, %v1676
      %v1701 = vadd.f32 %v1514, %v1681
      %v1702 = vadd.f32 %v1515, %v1684
      %v1703 = vadd.f32 %v1516, %v1689
      %v1704 = vadd.f32 %v1517, %v1692
      %s1705 = scalar_lea.vmem %s2, 512
      %v1706 = vld [vmem:[%s1705] sm:$0xf]
      %v1707 = vld [vmem:[%s1705 + $0x4] sm:$0xf]
      %v1708 = vld [vmem:[%s1705 + $0x8] sm:$0xf]
      %v1709 = vld [vmem:[%s1705 + $0xc] sm:$0xf]
      %v1710 = vld [vmem:[%s1705 + $0x10] sm:$0xf]
      %v1711 = vld [vmem:[%s1705 + $0x14] sm:$0xf]
      %v1712 = vld [vmem:[%s1705 + $0x18] sm:$0xf]
      %v1713 = vld [vmem:[%s1705 + $0x1c] sm:$0xf]
      %v1714 = vld [vmem:[%s1705 + $0x20] sm:$0xf]
      %v1715 = vld [vmem:[%s1705 + $0x24] sm:$0xf]
      %v1716 = vld [vmem:[%s1705 + $0x28] sm:$0xf]
      %v1717 = vld [vmem:[%s1705 + $0x2c] sm:$0xf]
      %v1718 = vld [vmem:[%s1705 + $0x30] sm:$0xf]
      %v1719 = vld [vmem:[%s1705 + $0x34] sm:$0xf]
      %v1720 = vld [vmem:[%s1705 + $0x38] sm:$0xf]
      %v1721 = vld [vmem:[%s1705 + $0x3c] sm:$0xf]
      %vm1722 = vcmask 1044480
      %v1723 = vrot.slane %v301, 3
      %v1724 = vrot.slane %v302, 3
      %v1725 = vsel %vm1722, %v1723, %v1724
      %v1726 = vrot.slane %v303, 3
      %v1727 = vsel %vm1722, %v1724, %v1726
      %v1728 = vrot.slane %v304, 3
      %v1729 = vsel %vm1722, %v1726, %v1728
      %v1730 = vrot.slane %v1350, 3
      %v1731 = vsel %vm1722, %v1728, %v1730
      %v1732 = vrot.slane %v1351, 3
      %v1733 = vsel %vm1722, %v1730, %v1732
      %v1755 = vunpack.c.l.b16 %v1706
      %v1756 = vunpack.c.l.b16 %v1707
      %v1757 = vunpack.c.l.b16 %v1708
      %v1758 = vunpack.c.l.b16 %v1709
      %v1759 = vunpack.c.l.b16 %v1710
      %v1760 = vunpack.c.l.b16 %v1711
      %v1761 = vunpack.c.l.b16 %v1712
      %v1762 = vunpack.c.l.b16 %v1713
      %v1763 = vunpack.c.l.b16 %v1714
      %v1764 = vunpack.c.l.b16 %v1715
      %v1765 = vunpack.c.l.b16 %v1716
      %v1766 = vunpack.c.l.b16 %v1717
      %v1767 = vunpack.c.l.b16 %v1718
      %v1768 = vunpack.c.l.b16 %v1719
      %v1769 = vunpack.c.l.b16 %v1720
      %v1770 = vunpack.c.l.b16 %v1721
      %v1771 = vpack.c.b16 %v1756, %v1755
      %v1772 = vpack.c.b16 %v1758, %v1757
      %v1773 = vpack.c.b16 %v1760, %v1759
      %v1774 = vpack.c.b16 %v1762, %v1761
      %v1775 = vpack.c.b16 %v1764, %v1763
      %v1776 = vpack.c.b16 %v1766, %v1765
      %v1777 = vpack.c.b16 %v1768, %v1767
      %v1778 = vpack.c.b16 %v1770, %v1769
      %1787 = vmatprep.subr.bf16.mxu0 0
      %1788 = vmatpush1.bf16.msra.mxu0 %v1771
      %1789 = vmatprep.subr.bf16.mxu0 0
      %1790 = vmatpush1.bf16.msra.mxu0 %v1772
      %1791 = vmatprep.subr.bf16.mxu0 0
      %1792 = vmatpush1.bf16.msra.mxu0 %v1773
      %1793 = vmatprep.subr.bf16.mxu0 0
      %1794 = vmatpush1.bf16.msra.mxu0 %v1774
      %1795 = vmatprep.subr.bf16.mxu0 0
      %1796 = vmatpush1.bf16.msra.mxu0 %v1775
      %1797 = vmatprep.subr.bf16.mxu0 0
      %1798 = vmatpush1.bf16.msra.mxu0 %v1776
      %1799 = vmatprep.subr.bf16.mxu0 0
      %1800 = vmatpush1.bf16.msra.mxu0 %v1777
      %1801 = vmatprep.subr.bf16.mxu0 0
      %1802 = vmatpush1.bf16.msra.mxu0 %v1778
      %1803 = vmatprep.subr.bf16.mxu0 0
      %1804 = vmatpush1.bf16.msra.mxu0 0
      %1805 = vmatprep.subr.bf16.mxu0 0
      %1806 = vmatpush1.bf16.msra.mxu0 0
      %1807 = vmatprep.subr.bf16.mxu0 0
      %1808 = vmatpush1.bf16.msra.mxu0 0
      %1809 = vmatprep.subr.bf16.mxu0 0
      %1810 = vmatpush1.bf16.msra.mxu0 0
      %1811 = vmatprep.subr.bf16.mxu0 0
      %1812 = vmatpush1.bf16.msra.mxu0 0
      %1813 = vmatprep.subr.bf16.mxu0 0
      %1814 = vmatpush1.bf16.msra.mxu0 0
      %1815 = vmatprep.subr.bf16.mxu0 0
      %1816 = vmatpush1.bf16.msra.mxu0 0
      %1817 = vmatprep.subr.bf16.mxu0 0
      %1818 = vmatpush1.bf16.msra.mxu0 0
      %1819 = vmatprep.mubr.bf16.mxu0 0
      %1820 = vmatmul.mubr.bf16.gmra.mrb[0].mxu0 %v1725
      %v1821 = vpop.f32.mrb[0].mxu0
      %v1822 = vadd.f32 0.0, %v1821
      %v1823 = vpop.f32.mrb[0].mxu0
      %v1824 = vpop.f32.mrb[0].mxu0
      %v1825 = vadd.f32 0.0, %v1824
      %v1826 = vpop.f32.mrb[0].mxu0
      %1827 = vmatprep.mubr.bf16.mxu0 0
      %1828 = vmatmul.mubr.bf16.gmra.mrb[0].mxu0 %v1727
      %v1829 = vpop.f32.mrb[0].mxu0
      %v1830 = vadd.f32 0.0, %v1829
      %v1831 = vpop.f32.mrb[0].mxu0
      %v1832 = vpop.f32.mrb[0].mxu0
      %v1833 = vadd.f32 0.0, %v1832
      %v1834 = vpop.f32.mrb[0].mxu0
      %1835 = vmatprep.mubr.bf16.mxu0 0
      %1836 = vmatmul.mubr.bf16.gmra.mrb[0].mxu0 %v1729
      %v1837 = vpop.f32.mrb[0].mxu0
      %v1838 = vadd.f32 0.0, %v1837
      %v1839 = vpop.f32.mrb[0].mxu0
      %v1840 = vpop.f32.mrb[0].mxu0
      %v1841 = vadd.f32 0.0, %v1840
      %v1842 = vpop.f32.mrb[0].mxu0
      %1843 = vmatprep.mubr.bf16.mxu0 0
      %1844 = vmatmul.mubr.bf16.gmra.mrb[0].mxu0 %v1731
      %v1845 = vpop.f32.mrb[0].mxu0
      %v1846 = vadd.f32 0.0, %v1845
      %v1847 = vpop.f32.mrb[0].mxu0
      %v1848 = vpop.f32.mrb[0].mxu0
      %v1849 = vadd.f32 0.0, %v1848
      %v1850 = vpop.f32.mrb[0].mxu0
      %1851 = vmatprep.mubr.bf16.mxu0 0
      %1852 = vmatmul.mubr.bf16.gmra.mrb[0].mxu0 %v1733
      %v1853 = vpop.f32.mrb[0].mxu0
      %v1854 = vadd.f32 0.0, %v1853
      %v1855 = vpop.f32.mrb[0].mxu0
      %v1856 = vpop.f32.mrb[0].mxu0
      %v1857 = vadd.f32 0.0, %v1856
      %v1858 = vpop.f32.mrb[0].mxu0
      %1859 = vdwg.mxu0
      %v1860 = vadd.f32 %v1695, %v1822
      %v1861 = vadd.f32 %v1696, %v1825
      %v1862 = vadd.f32 %v1697, %v1830
      %v1863 = vadd.f32 %v1698, %v1833
      %v1864 = vadd.f32 %v1699, %v1838
      %v1865 = vadd.f32 %v1700, %v1841
      %v1866 = vadd.f32 %v1701, %v1846
      %v1867 = vadd.f32 %v1702, %v1849
      %v1868 = vadd.f32 %v1703, %v1854
      %v1869 = vadd.f32 %v1704, %v1857
      %vm1870 = vcmp.ge.f32.partialorder %v1860, 0.0
      %vm1871 = vcmp.ge.f32.partialorder %v1861, 0.0
      %vm1872 = vcmp.ge.f32.partialorder %v1862, 0.0
      %vm1873 = vcmp.ge.f32.partialorder %v1863, 0.0
      %vm1874 = vcmp.ge.f32.partialorder %v1864, 0.0
      %vm1875 = vcmp.ge.f32.partialorder %v1865, 0.0
      %vm1876 = vcmp.ge.f32.partialorder %v1866, 0.0
      %vm1877 = vcmp.ge.f32.partialorder %v1867, 0.0
      %vm1878 = vcmp.ge.f32.partialorder %v1868, 0.0
      %vm1879 = vcmp.ge.f32.partialorder %v1869, 0.0
      %v1880 = vmul.f32 %v1860, 0.2
      %v1881 = vmul.f32 %v1861, 0.2
      %v1882 = vmul.f32 %v1862, 0.2
      %v1883 = vmul.f32 %v1863, 0.2
      %v1884 = vmul.f32 %v1864, 0.2
      %v1885 = vmul.f32 %v1865, 0.2
      %v1886 = vmul.f32 %v1866, 0.2
      %v1887 = vmul.f32 %v1867, 0.2
      %v1888 = vmul.f32 %v1868, 0.2
      %v1889 = vmul.f32 %v1869, 0.2
      %v1890 = vsel %vm1870, %v1860, %v1880
      %v1891 = vsel %vm1871, %v1861, %v1881
      %v1892 = vsel %vm1872, %v1862, %v1882
      %v1893 = vsel %vm1873, %v1863, %v1883
      %v1894 = vsel %vm1874, %v1864, %v1884
      %v1895 = vsel %vm1875, %v1865, %v1885
      %v1896 = vsel %vm1876, %v1866, %v1886
      %v1897 = vsel %vm1877, %v1867, %v1887
      %v1898 = vsel %vm1878, %v1868, %v1888
      %v1899 = vsel %vm1879, %v1869, %v1889
      %v1900 = vld [vmem:[%s267] sm:$0xf]
      %v1901 = vld [vmem:[%s267 + $0x4] sm:$0xf]
      %v1902 = vld [vmem:[%s267 + $0x8] sm:$0xf]
      %v1903 = vld [vmem:[%s267 + $0xc] sm:$0xf]
      %v1904 = vld [vmem:[%s267 + $0x10] sm:$0xf]
      %v1905 = vld [vmem:[%s267 + $0x14] sm:$0xf]
      %v1906 = vld [vmem:[%s267 + $0x18] sm:$0xf]
      %v1907 = vld [vmem:[%s267 + $0x1c] sm:$0xf]
      %v1908 = vld [vmem:[%s267 + $0x20] sm:$0xf]
      %v1909 = vld [vmem:[%s267 + $0x24] sm:$0xf]
      %v1910 = vld [vmem:[%s4] sm:$0x3]
      %v1911 = vld [vmem:[%s5] sm:$0x1]
      %v1913 = vlaneseq
      %v1914 = vshrl.u32 %v1913, 7
      %v1915 = vsub.s32 0, %v1914
      %v1916 = vrot.slane %v1911, %v1915
      %v1928 = vunpack.c.l.b16 %v1900
      %v1929 = vunpack.c.l.b16 %v1901
      %v1930 = vunpack.c.l.b16 %v1902
      %v1931 = vunpack.c.l.b16 %v1903
      %v1932 = vunpack.c.l.b16 %v1904
      %v1933 = vunpack.c.l.b16 %v1905
      %v1934 = vunpack.c.l.b16 %v1906
      %v1935 = vunpack.c.l.b16 %v1907
      %v1936 = vunpack.c.l.b16 %v1908
      %v1937 = vunpack.c.l.b16 %v1909
      %v1938 = vpack.c.b16 %v1929, %v1928
      %v1939 = vpack.c.b16 %v1931, %v1930
      %v1940 = vpack.c.b16 %v1933, %v1932
      %v1941 = vpack.c.b16 %v1935, %v1934
      %v1942 = vpack.c.b16 %v1937, %v1936
      %vm1943 = vcmask 31744
      %v1945 = vsel %vm1943, %v1938, 0
      %v1948 = vsel %vm1943, %v1939, 0
      %v1951 = vsel %vm1943, %v1940, 0
      %v1954 = vsel %vm1943, %v1941, 0
      %v1957 = vsel %vm1943, %v1942, 0
      %vm1959 = vcmask 1041408
      %v1961 = vsel %vm1959, %v1910, 0
      %1963 = vmatprep.subr.bf16.mxu0 0
      %1964 = vmatpush1.bf16.msra.mxu0 %v1961
      %1965 = vmatprep.subr.bf16.mxu0 0
      %1966 = vmatpush1.bf16.msra.mxu0 0
      %1967 = vmatprep.subr.bf16.mxu0 0
      %1968 = vmatpush1.bf16.msra.mxu0 0
      %1969 = vmatprep.subr.bf16.mxu0 0
      %1970 = vmatpush1.bf16.msra.mxu0 0
      %1971 = vmatprep.subr.bf16.mxu0 0
      %1972 = vmatpush1.bf16.msra.mxu0 0
      %1973 = vmatprep.subr.bf16.mxu0 0
      %1974 = vmatpush1.bf16.msra.mxu0 0
      %1975 = vmatprep.subr.bf16.mxu0 0
      %1976 = vmatpush1.bf16.msra.mxu0 0
      %1977 = vmatprep.subr.bf16.mxu0 0
      %1978 = vmatpush1.bf16.msra.mxu0 0
      %1979 = vmatprep.subr.bf16.mxu0 0
      %1980 = vmatpush1.bf16.msra.mxu0 0
      %1981 = vmatprep.subr.bf16.mxu0 0
      %1982 = vmatpush1.bf16.msra.mxu0 0
      %1983 = vmatprep.subr.bf16.mxu0 0
      %1984 = vmatpush1.bf16.msra.mxu0 0
      %1985 = vmatprep.subr.bf16.mxu0 0
      %1986 = vmatpush1.bf16.msra.mxu0 0
      %1987 = vmatprep.subr.bf16.mxu0 0
      %1988 = vmatpush1.bf16.msra.mxu0 0
      %1989 = vmatprep.subr.bf16.mxu0 0
      %1990 = vmatpush1.bf16.msra.mxu0 0
      %1991 = vmatprep.subr.bf16.mxu0 0
      %1992 = vmatpush1.bf16.msra.mxu0 0
      %1993 = vmatprep.subr.bf16.mxu0 0
      %1994 = vmatpush1.bf16.msra.mxu0 0
      %1995 = vmatprep.mubr.bf16.mxu0 0
      %1996 = vmatmul.mubr.bf16.gmra.mrb[0].mxu0 %v1945
      %v1997 = vpop.f32.mrb[0].mxu0
      %v1998 = vadd.f32 %v1916, %v1997
      %v1999 = vpop.f32.mrb[0].mxu0
      %v2000 = vpop.f32.mrb[0].mxu0
      %v2001 = vadd.f32 %v1916, %v2000
      %v2002 = vpop.f32.mrb[0].mxu0
      %2003 = vmatprep.mubr.bf16.mxu0 0
      %2004 = vmatmul.mubr.bf16.gmra.mrb[0].mxu0 %v1948
      %v2005 = vpop.f32.mrb[0].mxu0
      %v2006 = vadd.f32 %v1916, %v2005
      %v2007 = vpop.f32.mrb[0].mxu0
      %v2008 = vpop.f32.mrb[0].mxu0
      %v2009 = vadd.f32 %v1916, %v2008
      %v2010 = vpop.f32.mrb[0].mxu0
      %2011 = vmatprep.mubr.bf16.mxu0 0
      %2012 = vmatmul.mubr.bf16.gmra.mrb[0].mxu0 %v1951
      %v2013 = vpop.f32.mrb[0].mxu0
      %v2014 = vadd.f32 %v1916, %v2013
      %v2015 = vpop.f32.mrb[0].mxu0
      %v2016 = vpop.f32.mrb[0].mxu0
      %v2017 = vadd.f32 %v1916, %v2016
      %v2018 = vpop.f32.mrb[0].mxu0
      %2019 = vmatprep.mubr.bf16.mxu0 0
      %2020 = vmatmul.mubr.bf16.gmra.mrb[0].mxu0 %v1954
      %v2021 = vpop.f32.mrb[0].mxu0
      %v2022 = vadd.f32 %v1916, %v2021
      %v2023 = vpop.f32.mrb[0].mxu0
      %v2024 = vpop.f32.mrb[0].mxu0
      %v2025 = vadd.f32 %v1916, %v2024
      %v2026 = vpop.f32.mrb[0].mxu0
      %2027 = vmatprep.mubr.bf16.mxu0 0
      %2028 = vmatmul.mubr.bf16.gmra.mrb[0].mxu0 %v1957
      %v2029 = vpop.f32.mrb[0].mxu0
      %v2030 = vadd.f32 %v1916, %v2029
      %v2031 = vpop.f32.mrb[0].mxu0
      %v2032 = vpop.f32.mrb[0].mxu0
      %v2033 = vadd.f32 %v1916, %v2032
      %v2034 = vpop.f32.mrb[0].mxu0
      %2035 = vdwg.mxu0
      %s2036 = sld [smem:[#allocation2]]
      %v2037 = vstv %s2036
      %v2038 = vmul.f32 %v2037, %v1890
      %v2039 = vmul.f32 %v2037, %v1891
      %v2040 = vmul.f32 %v2037, %v1892
      %v2041 = vmul.f32 %v2037, %v1893
      %v2042 = vmul.f32 %v2037, %v1894
      %v2043 = vmul.f32 %v2037, %v1895
      %v2044 = vmul.f32 %v2037, %v1896
      %v2045 = vmul.f32 %v2037, %v1897
      %v2046 = vmul.f32 %v2037, %v1898
      %v2047 = vmul.f32 %v2037, %v1899
      %v2048 = vadd.f32 %v1998, %v2038
      %v2049 = vadd.f32 %v2001, %v2039
      %v2050 = vadd.f32 %v2006, %v2040
      %v2051 = vadd.f32 %v2009, %v2041
      %v2052 = vadd.f32 %v2014, %v2042
      %v2053 = vadd.f32 %v2017, %v2043
      %v2054 = vadd.f32 %v2022, %v2044
      %v2055 = vadd.f32 %v2025, %v2045
      %v2056 = vadd.f32 %v2030, %v2046
      %v2057 = vadd.f32 %v2033, %v2047
      %2058 = vst [vmem:[%s272] sm:$0xff] %v2048
      %2059 = vst [vmem:[%s272 + $0x8] sm:$0xff] %v2049
      %2060 = vst [vmem:[%s272 + $0x10] sm:$0xff] %v2050
      %2061 = vst [vmem:[%s272 + $0x18] sm:$0xff] %v2051
      %2062 = vst [vmem:[%s272 + $0x20] sm:$0xff] %v2052
      %2063 = vst [vmem:[%s272 + $0x28] sm:$0xff] %v2053
      %2064 = vst [vmem:[%s272 + $0x30] sm:$0xff] %v2054
      %2065 = vst [vmem:[%s272 + $0x38] sm:$0xff] %v2055
      %2066 = vst [vmem:[%s272 + $0x40] sm:$0xff] %v2056
      %2067 = vst [vmem:[%s272 + $0x48] sm:$0xff] %v2057
      %p2068 = scmp.lt.s32.totalorder %s18, 1
      %s2069 = scalar_select %p2068, %s18, 1
      %s2070 = smul.addr %s2069, 10
      %s2071 = smul.addr %s2070, 8
      %s2072 = scalar_lea.vmem %s6, %s2071
      // Predicated region
      $region45: #{res_d_forward.3} parent=43 // pred_check
        %p2073 = pneg %p172
      $region46: #{res_d_forward.3} parent=43 // pred_check_branch
        %2075 = sbr.rel (%p2073) target = $region48
      $region47: #{res_d_forward.3} parent=43 // pred_region
        _
      $region48: #{res_d_forward.3} parent=43 // pred_fallthru
        _
    $region44: #{res_d_forward.3} parent=5 // pred_fallthru
      _
    %p2076 = scmp.le.s32.totalorder 2, %s13
    // Predicated region
    $region49: #{res_d_forward.3} parent=5 // pred_check
      %p2077 = pneg %p2076
    $region50: #{res_d_forward.3} parent=5 // pred_check_branch
      %2079 = sbr.rel (%p2077) target = $region52
    $region51: #{res_d_forward.3} parent=5 // pred_region
      %s2080 = ssub.s32 %s13, 2
      // Predicated region
      $region53: #{res_d_forward.3} parent=51 // pred_check
        %p2081 = pneg %p178
      $region54: #{res_d_forward.3} parent=51 // pred_check_branch
        %2083 = sbr.rel (%p2081) target = $region56
      $region55: #{res_d_forward.3} parent=51 // pred_region
        %p2084 = scmp.lt.s32.totalorder %s19, 1
        %s2085 = scalar_select %p2084, %s19, 1
        %s2086 = smul.addr %s2085, 10
        %s2087 = smul.addr %s2086, 8
        %s2088 = scalar_lea.vmem %s6, %s2087
      $region56: #{res_d_forward.3} parent=51 // pred_fallthru
        _
    $region52: #{res_d_forward.3} parent=5 // pred_fallthru
      _
  $region6: #{res_d_forward.3} parent=0 // loop_footer
    %s17 = sadd.s32 1, %s13
  $region7: #{res_d_forward.3} parent=0 // loop_footer_branch
    %12 = sbr.rel target = $region3
  $region8: #{res_d_forward.3} parent=0 // loop_exit
    _

</llo_original>
